<compile_context>
chip_gen: v7x
topology: tpu7x:2x2x1
jax: 0.10.0
libtpu: 0.0.40
codegen_flags: <defaults>
</compile_context>

<pallas_src>
import jax
import jax.numpy as jnp
from jax.experimental import pallas as pl
from jax.experimental.pallas import tpu as pltpu

# --- module constants (from the PyTorch source) ---
N_EMBED = 128
BLOCK_SIZE = 256
N_HEADS = 4
N_LAYERS = 6
FFN_MULT = 4
LN_EPS = 1e-5


def _layer_norm(x, g, b):
    """LayerNorm over the last axis (PyTorch semantics, biased variance)."""
    mu = jnp.mean(x, axis=-1, keepdims=True)
    var = jnp.mean((x - mu) ** 2, axis=-1, keepdims=True)
    return (x - mu) * jax.lax.rsqrt(var + LN_EPS) * g + b


# ----------------------------------------------------------------------------
# Fused transformer Block kernel: LN1 -> MHA -> +res -> LN2 -> FFN -> +res
# ----------------------------------------------------------------------------
def _block_kernel(x_ref, ln1_g_ref, ln1_b_ref, wqkv_ref, wproj_ref, bproj_ref,
                  ln2_g_ref, ln2_b_ref, w1_ref, b1_ref, w2_ref, b2_ref,
                  o_ref):
    x = x_ref[0]                                   # (T, C) f32
    T, C = x.shape
    head_size = C // N_HEADS

    # --- LayerNorm 1 ---
    xn = _layer_norm(x, ln1_g_ref[...], ln1_b_ref[...])

    # --- fused Q/K/V for all heads: one lane-dense (T,C)@(C,3C) matmul ---
    qkv = jnp.dot(xn, wqkv_ref[...], preferred_element_type=jnp.float32)
    q = qkv[:, :C] * (C ** -0.5)     # fold the n_embed**-0.5 scale into q
    k = qkv[:, C:2 * C]
    v = qkv[:, 2 * C:]

    # causal (lower-triangular) mask
    row = jax.lax.broadcasted_iota(jnp.int32, (T, T), 0)
    col = jax.lax.broadcasted_iota(jnp.int32, (T, T), 1)
    causal = col <= row

    # --- per-head attention; each head's contribution to the output
    #     projection is accumulated directly into a lane-dense (T, C) tile:
    #     concat(heads) @ Wproj == sum_h head_h @ Wproj[h*hs:(h+1)*hs, :] ---
    attn = None
    for h in range(N_HEADS):
        sl = slice(h * head_size, (h + 1) * head_size)
        # q_h @ k_h.T without materializing the transpose
        wei = jax.lax.dot_general(q[:, sl], k[:, sl],
                                  (((1,), (1,)), ((), ())),
                                  preferred_element_type=jnp.float32)
        wei = jnp.where(causal, wei, -jnp.inf)
        wei = jnp.exp(wei - jnp.max(wei, axis=-1, keepdims=True))
        wei = wei * pl.reciprocal(jnp.sum(wei, axis=-1, keepdims=True),
                                  approx=True)
        # attention dropout: identity (eval mode)
        head_out = jnp.dot(wei, v[:, sl], preferred_element_type=jnp.float32)
        contrib = jnp.dot(head_out, wproj_ref[sl, :],
                          preferred_element_type=jnp.float32)
        attn = contrib if attn is None else attn + contrib

    # --- output projection bias + residual (proj dropout: identity) ---
    x1 = x + attn + bproj_ref[...]

    # --- LayerNorm 2 + FeedForward + residual (ffn dropout: identity) ---
    x2 = _layer_norm(x1, ln2_g_ref[...], ln2_b_ref[...])
    h1 = jnp.dot(x2, w1_ref[...], preferred_element_type=jnp.float32) + b1_ref[...]
    h1 = jnp.maximum(h1, 0.0)
    ffn = jnp.dot(h1, w2_ref[...], preferred_element_type=jnp.float32) + b2_ref[...]

    o_ref[0] = (x1 + ffn).astype(o_ref.dtype)


def _transformer_block(x, blk):
    B, T, C = x.shape
    HID = FFN_MULT * C

    def full(shape):
        return pl.BlockSpec(shape, lambda b: (0,) * len(shape))

    return pl.pallas_call(
        _block_kernel,
        out_shape=jax.ShapeDtypeStruct((B, T, C), x.dtype),
        grid=(B,),
        in_specs=[
            pl.BlockSpec((1, T, C), lambda b: (b, 0, 0)),   # x
            full((1, C)), full((1, C)),                     # ln1 gamma/beta
            full((C, 3 * C)),                               # wqkv
            full((C, C)), full((1, C)),                     # wproj, bproj
            full((1, C)), full((1, C)),                     # ln2 gamma/beta
            full((C, HID)), full((1, HID)),                 # ffn w1, b1
            full((HID, C)), full((1, C)),                   # ffn w2, b2
        ],
        out_specs=pl.BlockSpec((1, T, C), lambda b: (b, 0, 0)),
        compiler_params=pltpu.CompilerParams(
            dimension_semantics=("parallel",)),
    )(x, blk["ln1_g"], blk["ln1_b"], blk["wqkv"], blk["wproj"], blk["bproj"],
      blk["ln2_g"], blk["ln2_b"], blk["w1"], blk["b1"], blk["w2"], blk["b2"])


# ----------------------------------------------------------------------------
# Final LayerNorm + lm_head kernel (vocab padded to a lane-dense multiple)
# ----------------------------------------------------------------------------
def _final_kernel(x_ref, g_ref, b_ref, wlm_ref, blm_ref, o_ref):
    x = x_ref[0]                                   # (T, C)
    xn = _layer_norm(x, g_ref[...], b_ref[...])
    logits = jnp.dot(xn, wlm_ref[...], preferred_element_type=jnp.float32)
    logits = logits + blm_ref[...]
    o_ref[0] = logits.astype(o_ref.dtype)


def _final_ln_lm_head(x, g, b, wlm, blm):
    B, T, C = x.shape
    Vp = wlm.shape[1]
    return pl.pallas_call(
        _final_kernel,
        out_shape=jax.ShapeDtypeStruct((B, T, Vp), jnp.float32),
        grid=(B,),
        in_specs=[
            pl.BlockSpec((1, T, C), lambda i: (i, 0, 0)),
            pl.BlockSpec((1, C), lambda i: (0, 0)),
            pl.BlockSpec((1, C), lambda i: (0, 0)),
            pl.BlockSpec((C, Vp), lambda i: (0, 0)),
            pl.BlockSpec((1, Vp), lambda i: (0, 0)),
        ],
        out_specs=pl.BlockSpec((1, T, Vp), lambda i: (i, 0, 0)),
        compiler_params=pltpu.CompilerParams(
            dimension_semantics=("parallel",)),
    )(x, g, b, wlm, blm)


# ----------------------------------------------------------------------------
# Full model forward (logits); loss / generate sampling left to the host.
# ----------------------------------------------------------------------------
@jax.jit
def bigram_lm_forward(idx_tokens, params):
    B, T = idx_tokens.shape
    # token + positional embeddings (gather stays in XLA)
    x = jnp.take(params["tok_emb"], idx_tokens, axis=0) + params["pos_emb"][:T][None]

    # pad T up to a sublane multiple for BlockSpec robustness (sliced off below)
    Tp = ((T + 7) // 8) * 8
    if Tp != T:
        x = jnp.pad(x, ((0, 0), (0, Tp - T), (0, 0)))

    for blk in params["blocks"]:
        x = _transformer_block(x, blk)

    V = params["wlm"].shape[1]
    Vp = ((V + 127) // 128) * 128
    wlm = jnp.pad(params["wlm"], ((0, 0), (0, Vp - V)))
    blm = jnp.pad(params["blm"], ((0, 0), (0, Vp - V)))
    logits = _final_ln_lm_head(x, params["lnf_g"], params["lnf_b"], wlm, blm)
    return logits[:, :T, :V]


# ----------------------------------------------------------------------------
# Pure-JAX reference mirroring the PyTorch module (eval mode)
# ----------------------------------------------------------------------------
def _reference_forward(idx_tokens, params):
    B, T = idx_tokens.shape
    C = N_EMBED
    hs = C // N_HEADS
    x = params["tok_emb"][idx_tokens] + params["pos_emb"][:T][None]
    mask = jnp.tril(jnp.ones((T, T), dtype=bool))
    for blk in params["blocks"]:
        xn = _layer_norm(x, blk["ln1_g"], blk["ln1_b"])
        qkv = xn @ blk["wqkv"]
        q, k, v = qkv[..., :C], qkv[..., C:2 * C], qkv[..., 2 * C:]
        outs = []
        for h in range(N_HEADS):
            sl = slice(h * hs, (h + 1) * hs)
            wei = (q[..., sl] @ jnp.swapaxes(k[..., sl], -1, -2)) * (C ** -0.5)
            wei = jnp.where(mask, wei, -jnp.inf)
            wei = jax.nn.softmax(wei, axis=-1)
            outs.append(wei @ v[..., sl])
        x = x + jnp.concatenate(outs, axis=-1) @ blk["wproj"] + blk["bproj"]
        x2 = _layer_norm(x, blk["ln2_g"], blk["ln2_b"])
        h1 = jax.nn.relu(x2 @ blk["w1"] + blk["b1"])
        x = x + h1 @ blk["w2"] + blk["b2"]
    xf = _layer_norm(x, params["lnf_g"], params["lnf_b"])
    return xf @ params["wlm"] + params["blm"]


def init_params(key, vocab_size):
    C = N_EMBED
    HID = FFN_MULT * C
    keys = iter(jax.random.split(key, 128))

    def nrm(shape, scale):
        return jax.random.normal(next(keys), shape, jnp.float32) * scale

    def ln_pair():
        return 1.0 + 0.1 * nrm((1, C), 1.0), 0.05 * nrm((1, C), 1.0)

    blocks = []
    for _ in range(N_LAYERS):
        ln1_g, ln1_b = ln_pair()
        ln2_g, ln2_b = ln_pair()
        blocks.append(dict(
            ln1_g=ln1_g, ln1_b=ln1_b,
            wqkv=nrm((C, 3 * C), C ** -0.5),
            wproj=nrm((C, C), C ** -0.5),
            bproj=nrm((1, C), 0.01),
            ln2_g=ln2_g, ln2_b=ln2_b,
            w1=nrm((C, HID), C ** -0.5),
            b1=nrm((1, HID), 0.01),
            w2=nrm((HID, C), HID ** -0.5),
            b2=nrm((1, C), 0.01),
        ))
    lnf_g, lnf_b = ln_pair()
    return dict(
        tok_emb=nrm((vocab_size, C), 0.02),
        pos_emb=nrm((BLOCK_SIZE, C), 0.02),
        blocks=blocks,
        lnf_g=lnf_g, lnf_b=lnf_b,
        wlm=nrm((C, vocab_size), C ** -0.5),
        blm=nrm((1, vocab_size), 0.01),
    )


if __name__ == "__main__":
    key = jax.random.PRNGKey(0)
    k_params, k_idx = jax.random.split(key)

    vocab_size = 65          # e.g. a tiny-shakespeare character set
    B, T = 2, 16             # small test shapes (T <= block_size = 256)

    params = init_params(k_params, vocab_size)
    idx_tokens = jax.random.randint(k_idx, (B, T), 0, vocab_size,
                                    dtype=jnp.int32)

    logits = bigram_lm_forward(idx_tokens, params)
    logits = jax.block_until_ready(logits)
    assert logits.shape == (B, T, vocab_size)

    # full-precision XLA reference for comparison
    with jax.default_matmul_precision("float32"):
        ref = jax.block_until_ready(_reference_forward(idx_tokens, params))

    # tolerance covers EUP approx-reciprocal in softmax + MXU reassociation
    assert jnp.allclose(logits, ref, atol=1e-2, rtol=1e-2), \
        "mismatch vs pure-JAX reference"

    print("KERNEL_OK")
</pallas_src>

<mosaic_0001>
module attributes {stable_mosaic.version = 11 : i64} {
  func.func @_block_kernel(%arg0: i32, %arg1: memref<1x16x128xf32, #tpu.memory_space<vmem>>, %arg2: memref<1x128xf32, #tpu.memory_space<vmem>>, %arg3: memref<1x128xf32, #tpu.memory_space<vmem>>, %arg4: memref<128x384xf32, #tpu.memory_space<vmem>>, %arg5: memref<128x128xf32, #tpu.memory_space<vmem>>, %arg6: memref<1x128xf32, #tpu.memory_space<vmem>>, %arg7: memref<1x128xf32, #tpu.memory_space<vmem>>, %arg8: memref<1x128xf32, #tpu.memory_space<vmem>>, %arg9: memref<128x512xf32, #tpu.memory_space<vmem>>, %arg10: memref<1x512xf32, #tpu.memory_space<vmem>>, %arg11: memref<512x128xf32, #tpu.memory_space<vmem>>, %arg12: memref<1x128xf32, #tpu.memory_space<vmem>>, %arg13: memref<1x16x128xf32, #tpu.memory_space<vmem>>) attributes {dimension_semantics = [#tpu.dimension_semantics<parallel>], iteration_bounds = array<i64: 2>, scalar_prefetch = 0 : i64, scratch_operands = 0 : i64, tpu.core_type = #tpu.core_type<tc>, window_params = [{transform_indices = @transform_0, window_bounds = array<i64: 1, 16, 128>}, {pipeline_mode = #tpu.pipeline_mode<synchronous>, transform_indices = @transform_1, window_bounds = array<i64: 1, 128>}, {pipeline_mode = #tpu.pipeline_mode<synchronous>, transform_indices = @transform_2, window_bounds = array<i64: 1, 128>}, {pipeline_mode = #tpu.pipeline_mode<synchronous>, transform_indices = @transform_3, window_bounds = array<i64: 128, 384>}, {pipeline_mode = #tpu.pipeline_mode<synchronous>, transform_indices = @transform_4, window_bounds = array<i64: 128, 128>}, {pipeline_mode = #tpu.pipeline_mode<synchronous>, transform_indices = @transform_5, window_bounds = array<i64: 1, 128>}, {pipeline_mode = #tpu.pipeline_mode<synchronous>, transform_indices = @transform_6, window_bounds = array<i64: 1, 128>}, {pipeline_mode = #tpu.pipeline_mode<synchronous>, transform_indices = @transform_7, window_bounds = array<i64: 1, 128>}, {pipeline_mode = #tpu.pipeline_mode<synchronous>, transform_indices = @transform_8, window_bounds = array<i64: 128, 512>}, {pipeline_mode = #tpu.pipeline_mode<synchronous>, transform_indices = @transform_9, window_bounds = array<i64: 1, 512>}, {pipeline_mode = #tpu.pipeline_mode<synchronous>, transform_indices = @transform_10, window_bounds = array<i64: 512, 128>}, {pipeline_mode = #tpu.pipeline_mode<synchronous>, transform_indices = @transform_11, window_bounds = array<i64: 1, 128>}, {transform_indices = @transform_12, window_bounds = array<i64: 1, 16, 128>}]} {
    %c0 = arith.constant 0 : index
    %c0_0 = arith.constant 0 : index
    %c0_1 = arith.constant 0 : index
    %0 = vector.load %arg1[%c0, %c0_0, %c0_1] : memref<1x16x128xf32, #tpu.memory_space<vmem>>, vector<1x16x128xf32>
    %1 = vector.shape_cast %0 : vector<1x16x128xf32> to vector<16x128xf32>
    %c0_2 = arith.constant 0 : index
    %c0_3 = arith.constant 0 : index
    %2 = vector.load %arg2[%c0_2, %c0_3] : memref<1x128xf32, #tpu.memory_space<vmem>>, vector<1x128xf32>
    %c0_4 = arith.constant 0 : index
    %c0_5 = arith.constant 0 : index
    %3 = vector.load %arg3[%c0_4, %c0_5] : memref<1x128xf32, #tpu.memory_space<vmem>>, vector<1x128xf32>
    %cst = arith.constant dense<0.000000e+00> : vector<16xf32>
    %4 = vector.multi_reduction <add>, %1, %cst [1] : vector<16x128xf32> to vector<16xf32>
    %5 = vector.shape_cast %4 : vector<16xf32> to vector<16x1xf32>
    %cst_6 = arith.constant 1.280000e+02 : f32
    %6 = vector.broadcast %cst_6 : f32 to vector<16x1xf32>
    %7 = arith.divf %5, %6 : vector<16x1xf32>
    %8 = vector.broadcast %7 : vector<16x1xf32> to vector<16x128xf32>
    %9 = arith.subf %1, %8 : vector<16x128xf32>
    %10 = arith.mulf %9, %9 : vector<16x128xf32>
    %cst_7 = arith.constant dense<0.000000e+00> : vector<16xf32>
    %11 = vector.multi_reduction <add>, %10, %cst_7 [1] : vector<16x128xf32> to vector<16xf32>
    %12 = vector.shape_cast %11 : vector<16xf32> to vector<16x1xf32>
    %cst_8 = arith.constant 1.280000e+02 : f32
    %13 = vector.broadcast %cst_8 : f32 to vector<16x1xf32>
    %14 = arith.divf %12, %13 : vector<16x1xf32>
    %15 = vector.broadcast %7 : vector<16x1xf32> to vector<16x128xf32>
    %16 = arith.subf %1, %15 : vector<16x128xf32>
    %cst_9 = arith.constant 9.99999974E-6 : f32
    %17 = vector.broadcast %cst_9 : f32 to vector<16x1xf32>
    %18 = arith.addf %14, %17 : vector<16x1xf32>
    %19 = math.rsqrt %18 : vector<16x1xf32>
    %20 = vector.broadcast %19 : vector<16x1xf32> to vector<16x128xf32>
    %21 = arith.mulf %16, %20 : vector<16x128xf32>
    %22 = vector.broadcast %2 : vector<1x128xf32> to vector<16x128xf32>
    %23 = arith.mulf %21, %22 : vector<16x128xf32>
    %24 = vector.broadcast %3 : vector<1x128xf32> to vector<16x128xf32>
    %25 = arith.addf %23, %24 : vector<16x128xf32>
    %c0_10 = arith.constant 0 : index
    %c0_11 = arith.constant 0 : index
    %26 = vector.load %arg4[%c0_10, %c0_11] : memref<128x384xf32, #tpu.memory_space<vmem>>, vector<128x384xf32>
    %cst_12 = arith.constant dense<0.000000e+00> : vector<16x384xf32>
    %27 = tpu.matmul %25, %26, %cst_12 {dimension_numbers = #tpu.dot_dimension_numbers<[1], [0], [0], [1], [0, 0, 1, 1], [], []>} : vector<16x128xf32>, vector<128x384xf32>, vector<16x384xf32> -> vector<16x384xf32>
    %28 = vector.extract_strided_slice %27 {offsets = [0, 0], sizes = [16, 128], strides = [1, 1]} : vector<16x384xf32> to vector<16x128xf32>
    %cst_13 = arith.constant 0.0883883461 : f32
    %29 = vector.broadcast %cst_13 : f32 to vector<16x128xf32>
    %30 = arith.mulf %28, %29 : vector<16x128xf32>
    %31 = vector.extract_strided_slice %27 {offsets = [0, 128], sizes = [16, 128], strides = [1, 1]} : vector<16x384xf32> to vector<16x128xf32>
    %32 = vector.extract_strided_slice %27 {offsets = [0, 256], sizes = [16, 128], strides = [1, 1]} : vector<16x384xf32> to vector<16x128xf32>
    %33 = tpu.iota {dimensions = array<i32: 0>} : vector<16x16xi32>
    %34 = tpu.iota {dimensions = array<i32: 1>} : vector<16x16xi32>
    %35 = arith.cmpi sle, %34, %33 : vector<16x16xi32>
    %36 = vector.extract_strided_slice %30 {offsets = [0, 0], sizes = [16, 32], strides = [1, 1]} : vector<16x128xf32> to vector<16x32xf32>
    %37 = vector.extract_strided_slice %31 {offsets = [0, 0], sizes = [16, 32], strides = [1, 1]} : vector<16x128xf32> to vector<16x32xf32>
    %cst_14 = arith.constant dense<0.000000e+00> : vector<16x16xf32>
    %38 = tpu.matmul %36, %37, %cst_14 {dimension_numbers = #tpu.dot_dimension_numbers<[1], [1], [0], [0], [0, 0, 1, 0], [], []>} : vector<16x32xf32>, vector<16x32xf32>, vector<16x16xf32> -> vector<16x16xf32>
    %cst_15 = arith.constant 0xFF800000 : f32
    %39 = vector.broadcast %cst_15 : f32 to vector<16x16xf32>
    %40 = arith.select %35, %38, %39 : vector<16x16xi1>, vector<16x16xf32>
    %cst_16 = arith.constant dense<0xFF800000> : vector<16xf32>
    %41 = vector.multi_reduction <maximumf>, %40, %cst_16 [1] : vector<16x16xf32> to vector<16xf32>
    %42 = vector.shape_cast %41 : vector<16xf32> to vector<16x1xf32>
    %43 = vector.broadcast %42 : vector<16x1xf32> to vector<16x16xf32>
    %44 = arith.subf %40, %43 : vector<16x16xf32>
    %45 = math.exp %44 : vector<16x16xf32>
    %cst_17 = arith.constant dense<0.000000e+00> : vector<16xf32>
    %46 = vector.multi_reduction <add>, %45, %cst_17 [1] : vector<16x16xf32> to vector<16xf32>
    %47 = vector.shape_cast %46 : vector<16xf32> to vector<16x1xf32>
    %48 = tpu.reciprocal %47 {approx = true} : vector<16x1xf32> -> vector<16x1xf32>
    %49 = vector.broadcast %48 : vector<16x1xf32> to vector<16x16xf32>
    %50 = arith.mulf %45, %49 : vector<16x16xf32>
    %51 = vector.extract_strided_slice %32 {offsets = [0, 0], sizes = [16, 32], strides = [1, 1]} : vector<16x128xf32> to vector<16x32xf32>
    %cst_18 = arith.constant dense<0.000000e+00> : vector<16x32xf32>
    %52 = tpu.matmul %50, %51, %cst_18 {dimension_numbers = #tpu.dot_dimension_numbers<[1], [0], [0], [1], [0, 0, 1, 1], [], []>} : vector<16x16xf32>, vector<16x32xf32>, vector<16x32xf32> -> vector<16x32xf32>
    %c0_19 = arith.constant 0 : index
    %c0_20 = arith.constant 0 : index
    %53 = vector.load %arg5[%c0_19, %c0_20] : memref<128x128xf32, #tpu.memory_space<vmem>>, vector<32x128xf32>
    %cst_21 = arith.constant dense<0.000000e+00> : vector<16x128xf32>
    %54 = tpu.matmul %52, %53, %cst_21 {dimension_numbers = #tpu.dot_dimension_numbers<[1], [0], [0], [1], [0, 0, 1, 1], [], []>} : vector<16x32xf32>, vector<32x128xf32>, vector<16x128xf32> -> vector<16x128xf32>
    %55 = vector.extract_strided_slice %30 {offsets = [0, 32], sizes = [16, 32], strides = [1, 1]} : vector<16x128xf32> to vector<16x32xf32>
    %56 = vector.extract_strided_slice %31 {offsets = [0, 32], sizes = [16, 32], strides = [1, 1]} : vector<16x128xf32> to vector<16x32xf32>
    %cst_22 = arith.constant dense<0.000000e+00> : vector<16x16xf32>
    %57 = tpu.matmul %55, %56, %cst_22 {dimension_numbers = #tpu.dot_dimension_numbers<[1], [1], [0], [0], [0, 0, 1, 0], [], []>} : vector<16x32xf32>, vector<16x32xf32>, vector<16x16xf32> -> vector<16x16xf32>
    %cst_23 = arith.constant 0xFF800000 : f32
    %58 = vector.broadcast %cst_23 : f32 to vector<16x16xf32>
    %59 = arith.select %35, %57, %58 : vector<16x16xi1>, vector<16x16xf32>
    %cst_24 = arith.constant dense<0xFF800000> : vector<16xf32>
    %60 = vector.multi_reduction <maximumf>, %59, %cst_24 [1] : vector<16x16xf32> to vector<16xf32>
    %61 = vector.shape_cast %60 : vector<16xf32> to vector<16x1xf32>
    %62 = vector.broadcast %61 : vector<16x1xf32> to vector<16x16xf32>
    %63 = arith.subf %59, %62 : vector<16x16xf32>
    %64 = math.exp %63 : vector<16x16xf32>
    %cst_25 = arith.constant dense<0.000000e+00> : vector<16xf32>
    %65 = vector.multi_reduction <add>, %64, %cst_25 [1] : vector<16x16xf32> to vector<16xf32>
    %66 = vector.shape_cast %65 : vector<16xf32> to vector<16x1xf32>
    %67 = tpu.reciprocal %66 {approx = true} : vector<16x1xf32> -> vector<16x1xf32>
    %68 = vector.broadcast %67 : vector<16x1xf32> to vector<16x16xf32>
    %69 = arith.mulf %64, %68 : vector<16x16xf32>
    %70 = vector.extract_strided_slice %32 {offsets = [0, 32], sizes = [16, 32], strides = [1, 1]} : vector<16x128xf32> to vector<16x32xf32>
    %cst_26 = arith.constant dense<0.000000e+00> : vector<16x32xf32>
    %71 = tpu.matmul %69, %70, %cst_26 {dimension_numbers = #tpu.dot_dimension_numbers<[1], [0], [0], [1], [0, 0, 1, 1], [], []>} : vector<16x16xf32>, vector<16x32xf32>, vector<16x32xf32> -> vector<16x32xf32>
    %c32 = arith.constant 32 : index
    %c0_27 = arith.constant 0 : index
    %72 = vector.load %arg5[%c32, %c0_27] : memref<128x128xf32, #tpu.memory_space<vmem>>, vector<32x128xf32>
    %cst_28 = arith.constant dense<0.000000e+00> : vector<16x128xf32>
    %73 = tpu.matmul %71, %72, %cst_28 {dimension_numbers = #tpu.dot_dimension_numbers<[1], [0], [0], [1], [0, 0, 1, 1], [], []>} : vector<16x32xf32>, vector<32x128xf32>, vector<16x128xf32> -> vector<16x128xf32>
    %74 = arith.addf %54, %73 : vector<16x128xf32>
    %75 = vector.extract_strided_slice %30 {offsets = [0, 64], sizes = [16, 32], strides = [1, 1]} : vector<16x128xf32> to vector<16x32xf32>
    %76 = vector.extract_strided_slice %31 {offsets = [0, 64], sizes = [16, 32], strides = [1, 1]} : vector<16x128xf32> to vector<16x32xf32>
    %cst_29 = arith.constant dense<0.000000e+00> : vector<16x16xf32>
    %77 = tpu.matmul %75, %76, %cst_29 {dimension_numbers = #tpu.dot_dimension_numbers<[1], [1], [0], [0], [0, 0, 1, 0], [], []>} : vector<16x32xf32>, vector<16x32xf32>, vector<16x16xf32> -> vector<16x16xf32>
    %cst_30 = arith.constant 0xFF800000 : f32
    %78 = vector.broadcast %cst_30 : f32 to vector<16x16xf32>
    %79 = arith.select %35, %77, %78 : vector<16x16xi1>, vector<16x16xf32>
    %cst_31 = arith.constant dense<0xFF800000> : vector<16xf32>
    %80 = vector.multi_reduction <maximumf>, %79, %cst_31 [1] : vector<16x16xf32> to vector<16xf32>
    %81 = vector.shape_cast %80 : vector<16xf32> to vector<16x1xf32>
    %82 = vector.broadcast %81 : vector<16x1xf32> to vector<16x16xf32>
    %83 = arith.subf %79, %82 : vector<16x16xf32>
    %84 = math.exp %83 : vector<16x16xf32>
    %cst_32 = arith.constant dense<0.000000e+00> : vector<16xf32>
    %85 = vector.multi_reduction <add>, %84, %cst_32 [1] : vector<16x16xf32> to vector<16xf32>
    %86 = vector.shape_cast %85 : vector<16xf32> to vector<16x1xf32>
    %87 = tpu.reciprocal %86 {approx = true} : vector<16x1xf32> -> vector<16x1xf32>
    %88 = vector.broadcast %87 : vector<16x1xf32> to vector<16x16xf32>
    %89 = arith.mulf %84, %88 : vector<16x16xf32>
    %90 = vector.extract_strided_slice %32 {offsets = [0, 64], sizes = [16, 32], strides = [1, 1]} : vector<16x128xf32> to vector<16x32xf32>
    %cst_33 = arith.constant dense<0.000000e+00> : vector<16x32xf32>
    %91 = tpu.matmul %89, %90, %cst_33 {dimension_numbers = #tpu.dot_dimension_numbers<[1], [0], [0], [1], [0, 0, 1, 1], [], []>} : vector<16x16xf32>, vector<16x32xf32>, vector<16x32xf32> -> vector<16x32xf32>
    %c64 = arith.constant 64 : index
    %c0_34 = arith.constant 0 : index
    %92 = vector.load %arg5[%c64, %c0_34] : memref<128x128xf32, #tpu.memory_space<vmem>>, vector<32x128xf32>
    %cst_35 = arith.constant dense<0.000000e+00> : vector<16x128xf32>
    %93 = tpu.matmul %91, %92, %cst_35 {dimension_numbers = #tpu.dot_dimension_numbers<[1], [0], [0], [1], [0, 0, 1, 1], [], []>} : vector<16x32xf32>, vector<32x128xf32>, vector<16x128xf32> -> vector<16x128xf32>
    %94 = arith.addf %74, %93 : vector<16x128xf32>
    %95 = vector.extract_strided_slice %30 {offsets = [0, 96], sizes = [16, 32], strides = [1, 1]} : vector<16x128xf32> to vector<16x32xf32>
    %96 = vector.extract_strided_slice %31 {offsets = [0, 96], sizes = [16, 32], strides = [1, 1]} : vector<16x128xf32> to vector<16x32xf32>
    %cst_36 = arith.constant dense<0.000000e+00> : vector<16x16xf32>
    %97 = tpu.matmul %95, %96, %cst_36 {dimension_numbers = #tpu.dot_dimension_numbers<[1], [1], [0], [0], [0, 0, 1, 0], [], []>} : vector<16x32xf32>, vector<16x32xf32>, vector<16x16xf32> -> vector<16x16xf32>
    %cst_37 = arith.constant 0xFF800000 : f32
    %98 = vector.broadcast %cst_37 : f32 to vector<16x16xf32>
    %99 = arith.select %35, %97, %98 : vector<16x16xi1>, vector<16x16xf32>
    %cst_38 = arith.constant dense<0xFF800000> : vector<16xf32>
    %100 = vector.multi_reduction <maximumf>, %99, %cst_38 [1] : vector<16x16xf32> to vector<16xf32>
    %101 = vector.shape_cast %100 : vector<16xf32> to vector<16x1xf32>
    %102 = vector.broadcast %101 : vector<16x1xf32> to vector<16x16xf32>
    %103 = arith.subf %99, %102 : vector<16x16xf32>
    %104 = math.exp %103 : vector<16x16xf32>
    %cst_39 = arith.constant dense<0.000000e+00> : vector<16xf32>
    %105 = vector.multi_reduction <add>, %104, %cst_39 [1] : vector<16x16xf32> to vector<16xf32>
    %106 = vector.shape_cast %105 : vector<16xf32> to vector<16x1xf32>
    %107 = tpu.reciprocal %106 {approx = true} : vector<16x1xf32> -> vector<16x1xf32>
    %108 = vector.broadcast %107 : vector<16x1xf32> to vector<16x16xf32>
    %109 = arith.mulf %104, %108 : vector<16x16xf32>
    %110 = vector.extract_strided_slice %32 {offsets = [0, 96], sizes = [16, 32], strides = [1, 1]} : vector<16x128xf32> to vector<16x32xf32>
    %cst_40 = arith.constant dense<0.000000e+00> : vector<16x32xf32>
    %111 = tpu.matmul %109, %110, %cst_40 {dimension_numbers = #tpu.dot_dimension_numbers<[1], [0], [0], [1], [0, 0, 1, 1], [], []>} : vector<16x16xf32>, vector<16x32xf32>, vector<16x32xf32> -> vector<16x32xf32>
    %c96 = arith.constant 96 : index
    %c0_41 = arith.constant 0 : index
    %112 = vector.load %arg5[%c96, %c0_41] : memref<128x128xf32, #tpu.memory_space<vmem>>, vector<32x128xf32>
    %cst_42 = arith.constant dense<0.000000e+00> : vector<16x128xf32>
    %113 = tpu.matmul %111, %112, %cst_42 {dimension_numbers = #tpu.dot_dimension_numbers<[1], [0], [0], [1], [0, 0, 1, 1], [], []>} : vector<16x32xf32>, vector<32x128xf32>, vector<16x128xf32> -> vector<16x128xf32>
    %114 = arith.addf %94, %113 : vector<16x128xf32>
    %115 = arith.addf %1, %114 : vector<16x128xf32>
    %c0_43 = arith.constant 0 : index
    %c0_44 = arith.constant 0 : index
    %116 = vector.load %arg6[%c0_43, %c0_44] : memref<1x128xf32, #tpu.memory_space<vmem>>, vector<1x128xf32>
    %117 = vector.broadcast %116 : vector<1x128xf32> to vector<16x128xf32>
    %118 = arith.addf %115, %117 : vector<16x128xf32>
    %c0_45 = arith.constant 0 : index
    %c0_46 = arith.constant 0 : index
    %119 = vector.load %arg7[%c0_45, %c0_46] : memref<1x128xf32, #tpu.memory_space<vmem>>, vector<1x128xf32>
    %c0_47 = arith.constant 0 : index
    %c0_48 = arith.constant 0 : index
    %120 = vector.load %arg8[%c0_47, %c0_48] : memref<1x128xf32, #tpu.memory_space<vmem>>, vector<1x128xf32>
    %cst_49 = arith.constant dense<0.000000e+00> : vector<16xf32>
    %121 = vector.multi_reduction <add>, %118, %cst_49 [1] : vector<16x128xf32> to vector<16xf32>
    %122 = vector.shape_cast %121 : vector<16xf32> to vector<16x1xf32>
    %cst_50 = arith.constant 1.280000e+02 : f32
    %123 = vector.broadcast %cst_50 : f32 to vector<16x1xf32>
    %124 = arith.divf %122, %123 : vector<16x1xf32>
    %125 = vector.broadcast %124 : vector<16x1xf32> to vector<16x128xf32>
    %126 = arith.subf %118, %125 : vector<16x128xf32>
    %127 = arith.mulf %126, %126 : vector<16x128xf32>
    %cst_51 = arith.constant dense<0.000000e+00> : vector<16xf32>
    %128 = vector.multi_reduction <add>, %127, %cst_51 [1] : vector<16x128xf32> to vector<16xf32>
    %129 = vector.shape_cast %128 : vector<16xf32> to vector<16x1xf32>
    %cst_52 = arith.constant 1.280000e+02 : f32
    %130 = vector.broadcast %cst_52 : f32 to vector<16x1xf32>
    %131 = arith.divf %129, %130 : vector<16x1xf32>
    %132 = vector.broadcast %124 : vector<16x1xf32> to vector<16x128xf32>
    %133 = arith.subf %118, %132 : vector<16x128xf32>
    %cst_53 = arith.constant 9.99999974E-6 : f32
    %134 = vector.broadcast %cst_53 : f32 to vector<16x1xf32>
    %135 = arith.addf %131, %134 : vector<16x1xf32>
    %136 = math.rsqrt %135 : vector<16x1xf32>
    %137 = vector.broadcast %136 : vector<16x1xf32> to vector<16x128xf32>
    %138 = arith.mulf %133, %137 : vector<16x128xf32>
    %139 = vector.broadcast %119 : vector<1x128xf32> to vector<16x128xf32>
    %140 = arith.mulf %138, %139 : vector<16x128xf32>
    %141 = vector.broadcast %120 : vector<1x128xf32> to vector<16x128xf32>
    %142 = arith.addf %140, %141 : vector<16x128xf32>
    %c0_54 = arith.constant 0 : index
    %c0_55 = arith.constant 0 : index
    %143 = vector.load %arg9[%c0_54, %c0_55] : memref<128x512xf32, #tpu.memory_space<vmem>>, vector<128x512xf32>
    %cst_56 = arith.constant dense<0.000000e+00> : vector<16x512xf32>
    %144 = tpu.matmul %142, %143, %cst_56 {dimension_numbers = #tpu.dot_dimension_numbers<[1], [0], [0], [1], [0, 0, 1, 1], [], []>} : vector<16x128xf32>, vector<128x512xf32>, vector<16x512xf32> -> vector<16x512xf32>
    %c0_57 = arith.constant 0 : index
    %c0_58 = arith.constant 0 : index
    %145 = vector.load %arg10[%c0_57, %c0_58] : memref<1x512xf32, #tpu.memory_space<vmem>>, vector<1x512xf32>
    %146 = vector.broadcast %145 : vector<1x512xf32> to vector<16x512xf32>
    %147 = arith.addf %144, %146 : vector<16x512xf32>
    %cst_59 = arith.constant 0.000000e+00 : f32
    %148 = vector.broadcast %cst_59 : f32 to vector<16x512xf32>
    %149 = arith.maximumf %147, %148 : vector<16x512xf32>
    %c0_60 = arith.constant 0 : index
    %c0_61 = arith.constant 0 : index
    %150 = vector.load %arg11[%c0_60, %c0_61] : memref<512x128xf32, #tpu.memory_space<vmem>>, vector<512x128xf32>
    %cst_62 = arith.constant dense<0.000000e+00> : vector<16x128xf32>
    %151 = tpu.matmul %149, %150, %cst_62 {dimension_numbers = #tpu.dot_dimension_numbers<[1], [0], [0], [1], [0, 0, 1, 1], [], []>} : vector<16x512xf32>, vector<512x128xf32>, vector<16x128xf32> -> vector<16x128xf32>
    %c0_63 = arith.constant 0 : index
    %c0_64 = arith.constant 0 : index
    %152 = vector.load %arg12[%c0_63, %c0_64] : memref<1x128xf32, #tpu.memory_space<vmem>>, vector<1x128xf32>
    %153 = vector.broadcast %152 : vector<1x128xf32> to vector<16x128xf32>
    %154 = arith.addf %151, %153 : vector<16x128xf32>
    %155 = arith.addf %118, %154 : vector<16x128xf32>
    %c0_65 = arith.constant 0 : index
    %c0_66 = arith.constant 0 : index
    %c0_67 = arith.constant 0 : index
    %156 = vector.load %arg13[%c0_65, %c0_66, %c0_67] : memref<1x16x128xf32, #tpu.memory_space<vmem>>, vector<1x16x128xf32>
    %157 = vector.shape_cast %156 : vector<1x16x128xf32> to vector<16x128xf32>
    %158 = vector.shape_cast %155 : vector<16x128xf32> to vector<1x16x128xf32>
    tpu.vector_store %arg13[%c0_65, %c0_66, %c0_67], %158 {strides = array<i32>} : memref<1x16x128xf32, #tpu.memory_space<vmem>>, vector<1x16x128xf32>,
    return
  }
  func.func @transform_0(%arg0: i32) -> (i32, i32, i32) {
    %c0_i32 = arith.constant 0 : i32
    %c0_i32_0 = arith.constant 0 : i32
    %c0_i32_1 = arith.constant 0 : i32
    return %arg0, %c0_i32, %c0_i32_0 : i32, i32, i32
  }
  func.func @transform_1(%arg0: i32) -> (i32, i32) {
    %c0_i32 = arith.constant 0 : i32
    %c0_i32_0 = arith.constant 0 : i32
    %c0_i32_1 = arith.constant 0 : i32
    return %c0_i32, %c0_i32_0 : i32, i32
  }
  func.func @transform_2(%arg0: i32) -> (i32, i32) {
    %c0_i32 = arith.constant 0 : i32
    %c0_i32_0 = arith.constant 0 : i32
    %c0_i32_1 = arith.constant 0 : i32
    return %c0_i32, %c0_i32_0 : i32, i32
  }
  func.func @transform_3(%arg0: i32) -> (i32, i32) {
    %c0_i32 = arith.constant 0 : i32
    %c0_i32_0 = arith.constant 0 : i32
    %c0_i32_1 = arith.constant 0 : i32
    return %c0_i32, %c0_i32_0 : i32, i32
  }
  func.func @transform_4(%arg0: i32) -> (i32, i32) {
    %c0_i32 = arith.constant 0 : i32
    %c0_i32_0 = arith.constant 0 : i32
    %c0_i32_1 = arith.constant 0 : i32
    return %c0_i32, %c0_i32_0 : i32, i32
  }
  func.func @transform_5(%arg0: i32) -> (i32, i32) {
    %c0_i32 = arith.constant 0 : i32
    %c0_i32_0 = arith.constant 0 : i32
    %c0_i32_1 = arith.constant 0 : i32
    return %c0_i32, %c0_i32_0 : i32, i32
  }
  func.func @transform_6(%arg0: i32) -> (i32, i32) {
    %c0_i32 = arith.constant 0 : i32
    %c0_i32_0 = arith.constant 0 : i32
    %c0_i32_1 = arith.constant 0 : i32
    return %c0_i32, %c0_i32_0 : i32, i32
  }
  func.func @transform_7(%arg0: i32) -> (i32, i32) {
    %c0_i32 = arith.constant 0 : i32
    %c0_i32_0 = arith.constant 0 : i32
    %c0_i32_1 = arith.constant 0 : i32
    return %c0_i32, %c0_i32_0 : i32, i32
  }
  func.func @transform_8(%arg0: i32) -> (i32, i32) {
    %c0_i32 = arith.constant 0 : i32
    %c0_i32_0 = arith.constant 0 : i32
    %c0_i32_1 = arith.constant 0 : i32
    return %c0_i32, %c0_i32_0 : i32, i32
  }
  func.func @transform_9(%arg0: i32) -> (i32, i32) {
    %c0_i32 = arith.constant 0 : i32
    %c0_i32_0 = arith.constant 0 : i32
    %c0_i32_1 = arith.constant 0 : i32
    return %c0_i32, %c0_i32_0 : i32, i32
  }
  func.func @transform_10(%arg0: i32) -> (i32, i32) {
    %c0_i32 = arith.constant 0 : i32
    %c0_i32_0 = arith.constant 0 : i32
    %c0_i32_1 = arith.constant 0 : i32
    return %c0_i32, %c0_i32_0 : i32, i32
  }
  func.func @transform_11(%arg0: i32) -> (i32, i32) {
    %c0_i32 = arith.constant 0 : i32
    %c0_i32_0 = arith.constant 0 : i32
    %c0_i32_1 = arith.constant 0 : i32
    return %c0_i32, %c0_i32_0 : i32, i32
  }
  func.func @transform_12(%arg0: i32) -> (i32, i32, i32) {
    %c0_i32 = arith.constant 0 : i32
    %c0_i32_0 = arith.constant 0 : i32
    %c0_i32_1 = arith.constant 0 : i32
    return %arg0, %c0_i32, %c0_i32_0 : i32, i32, i32
  }
}

module attributes {stable_mosaic.version = 11 : i64} {
  func.func @_final_kernel(%arg0: i32, %arg1: memref<1x16x128xf32, #tpu.memory_space<vmem>>, %arg2: memref<1x128xf32, #tpu.memory_space<vmem>>, %arg3: memref<1x128xf32, #tpu.memory_space<vmem>>, %arg4: memref<128x128xf32, #tpu.memory_space<vmem>>, %arg5: memref<1x128xf32, #tpu.memory_space<vmem>>, %arg6: memref<1x16x128xf32, #tpu.memory_space<vmem>>) attributes {dimension_semantics = [#tpu.dimension_semantics<parallel>], iteration_bounds = array<i64: 2>, scalar_prefetch = 0 : i64, scratch_operands = 0 : i64, tpu.core_type = #tpu.core_type<tc>, window_params = [{transform_indices = @transform_0, window_bounds = array<i64: 1, 16, 128>}, {pipeline_mode = #tpu.pipeline_mode<synchronous>, transform_indices = @transform_1, window_bounds = array<i64: 1, 128>}, {pipeline_mode = #tpu.pipeline_mode<synchronous>, transform_indices = @transform_2, window_bounds = array<i64: 1, 128>}, {pipeline_mode = #tpu.pipeline_mode<synchronous>, transform_indices = @transform_3, window_bounds = array<i64: 128, 128>}, {pipeline_mode = #tpu.pipeline_mode<synchronous>, transform_indices = @transform_4, window_bounds = array<i64: 1, 128>}, {transform_indices = @transform_5, window_bounds = array<i64: 1, 16, 128>}]} {
    %c0 = arith.constant 0 : index
    %c0_0 = arith.constant 0 : index
    %c0_1 = arith.constant 0 : index
    %0 = vector.load %arg1[%c0, %c0_0, %c0_1] : memref<1x16x128xf32, #tpu.memory_space<vmem>>, vector<1x16x128xf32>
    %1 = vector.shape_cast %0 : vector<1x16x128xf32> to vector<16x128xf32>
    %c0_2 = arith.constant 0 : index
    %c0_3 = arith.constant 0 : index
    %2 = vector.load %arg2[%c0_2, %c0_3] : memref<1x128xf32, #tpu.memory_space<vmem>>, vector<1x128xf32>
    %c0_4 = arith.constant 0 : index
    %c0_5 = arith.constant 0 : index
    %3 = vector.load %arg3[%c0_4, %c0_5] : memref<1x128xf32, #tpu.memory_space<vmem>>, vector<1x128xf32>
    %cst = arith.constant dense<0.000000e+00> : vector<16xf32>
    %4 = vector.multi_reduction <add>, %1, %cst [1] : vector<16x128xf32> to vector<16xf32>
    %5 = vector.shape_cast %4 : vector<16xf32> to vector<16x1xf32>
    %cst_6 = arith.constant 1.280000e+02 : f32
    %6 = vector.broadcast %cst_6 : f32 to vector<16x1xf32>
    %7 = arith.divf %5, %6 : vector<16x1xf32>
    %8 = vector.broadcast %7 : vector<16x1xf32> to vector<16x128xf32>
    %9 = arith.subf %1, %8 : vector<16x128xf32>
    %10 = arith.mulf %9, %9 : vector<16x128xf32>
    %cst_7 = arith.constant dense<0.000000e+00> : vector<16xf32>
    %11 = vector.multi_reduction <add>, %10, %cst_7 [1] : vector<16x128xf32> to vector<16xf32>
    %12 = vector.shape_cast %11 : vector<16xf32> to vector<16x1xf32>
    %cst_8 = arith.constant 1.280000e+02 : f32
    %13 = vector.broadcast %cst_8 : f32 to vector<16x1xf32>
    %14 = arith.divf %12, %13 : vector<16x1xf32>
    %15 = vector.broadcast %7 : vector<16x1xf32> to vector<16x128xf32>
    %16 = arith.subf %1, %15 : vector<16x128xf32>
    %cst_9 = arith.constant 9.99999974E-6 : f32
    %17 = vector.broadcast %cst_9 : f32 to vector<16x1xf32>
    %18 = arith.addf %14, %17 : vector<16x1xf32>
    %19 = math.rsqrt %18 : vector<16x1xf32>
    %20 = vector.broadcast %19 : vector<16x1xf32> to vector<16x128xf32>
    %21 = arith.mulf %16, %20 : vector<16x128xf32>
    %22 = vector.broadcast %2 : vector<1x128xf32> to vector<16x128xf32>
    %23 = arith.mulf %21, %22 : vector<16x128xf32>
    %24 = vector.broadcast %3 : vector<1x128xf32> to vector<16x128xf32>
    %25 = arith.addf %23, %24 : vector<16x128xf32>
    %c0_10 = arith.constant 0 : index
    %c0_11 = arith.constant 0 : index
    %26 = vector.load %arg4[%c0_10, %c0_11] : memref<128x128xf32, #tpu.memory_space<vmem>>, vector<128x128xf32>
    %cst_12 = arith.constant dense<0.000000e+00> : vector<16x128xf32>
    %27 = tpu.matmul %25, %26, %cst_12 {dimension_numbers = #tpu.dot_dimension_numbers<[1], [0], [0], [1], [0, 0, 1, 1], [], []>} : vector<16x128xf32>, vector<128x128xf32>, vector<16x128xf32> -> vector<16x128xf32>
    %c0_13 = arith.constant 0 : index
    %c0_14 = arith.constant 0 : index
    %28 = vector.load %arg5[%c0_13, %c0_14] : memref<1x128xf32, #tpu.memory_space<vmem>>, vector<1x128xf32>
    %29 = vector.broadcast %28 : vector<1x128xf32> to vector<16x128xf32>
    %30 = arith.addf %27, %29 : vector<16x128xf32>
    %c0_15 = arith.constant 0 : index
    %c0_16 = arith.constant 0 : index
    %c0_17 = arith.constant 0 : index
    %31 = vector.load %arg6[%c0_15, %c0_16, %c0_17] : memref<1x16x128xf32, #tpu.memory_space<vmem>>, vector<1x16x128xf32>
    %32 = vector.shape_cast %31 : vector<1x16x128xf32> to vector<16x128xf32>
    %33 = vector.shape_cast %30 : vector<16x128xf32> to vector<1x16x128xf32>
    tpu.vector_store %arg6[%c0_15, %c0_16, %c0_17], %33 {strides = array<i32>} : memref<1x16x128xf32, #tpu.memory_space<vmem>>, vector<1x16x128xf32>,
    return
  }
  func.func @transform_0(%arg0: i32) -> (i32, i32, i32) {
    %c0_i32 = arith.constant 0 : i32
    %c0_i32_0 = arith.constant 0 : i32
    %c0_i32_1 = arith.constant 0 : i32
    return %arg0, %c0_i32, %c0_i32_0 : i32, i32, i32
  }
  func.func @transform_1(%arg0: i32) -> (i32, i32) {
    %c0_i32 = arith.constant 0 : i32
    %c0_i32_0 = arith.constant 0 : i32
    %c0_i32_1 = arith.constant 0 : i32
    return %c0_i32, %c0_i32_0 : i32, i32
  }
  func.func @transform_2(%arg0: i32) -> (i32, i32) {
    %c0_i32 = arith.constant 0 : i32
    %c0_i32_0 = arith.constant 0 : i32
    %c0_i32_1 = arith.constant 0 : i32
    return %c0_i32, %c0_i32_0 : i32, i32
  }
  func.func @transform_3(%arg0: i32) -> (i32, i32) {
    %c0_i32 = arith.constant 0 : i32
    %c0_i32_0 = arith.constant 0 : i32
    %c0_i32_1 = arith.constant 0 : i32
    return %c0_i32, %c0_i32_0 : i32, i32
  }
  func.func @transform_4(%arg0: i32) -> (i32, i32) {
    %c0_i32 = arith.constant 0 : i32
    %c0_i32_0 = arith.constant 0 : i32
    %c0_i32_1 = arith.constant 0 : i32
    return %c0_i32, %c0_i32_0 : i32, i32
  }
  func.func @transform_5(%arg0: i32) -> (i32, i32, i32) {
    %c0_i32 = arith.constant 0 : i32
    %c0_i32_0 = arith.constant 0 : i32
    %c0_i32_1 = arith.constant 0 : i32
    return %arg0, %c0_i32, %c0_i32_0 : i32, i32, i32
  }
}

module attributes {stable_mosaic.version = 11 : i64} {
  func.func @_block_kernel(%arg0: i32, %arg1: memref<1x16x128xf32, #tpu.memory_space<vmem>>, %arg2: memref<1x128xf32, #tpu.memory_space<vmem>>, %arg3: memref<1x128xf32, #tpu.memory_space<vmem>>, %arg4: memref<128x384xf32, #tpu.memory_space<vmem>>, %arg5: memref<128x128xf32, #tpu.memory_space<vmem>>, %arg6: memref<1x128xf32, #tpu.memory_space<vmem>>, %arg7: memref<1x128xf32, #tpu.memory_space<vmem>>, %arg8: memref<1x128xf32, #tpu.memory_space<vmem>>, %arg9: memref<128x512xf32, #tpu.memory_space<vmem>>, %arg10: memref<1x512xf32, #tpu.memory_space<vmem>>, %arg11: memref<512x128xf32, #tpu.memory_space<vmem>>, %arg12: memref<1x128xf32, #tpu.memory_space<vmem>>, %arg13: memref<1x16x128xf32, #tpu.memory_space<vmem>>) attributes {dimension_semantics = [#tpu.dimension_semantics<parallel>], iteration_bounds = array<i64: 2>, scalar_prefetch = 0 : i64, scratch_operands = 0 : i64, tpu.core_type = #tpu.core_type<tc>, window_params = [{transform_indices = @transform_0, window_bounds = array<i64: 1, 16, 128>}, {pipeline_mode = #tpu.pipeline_mode<synchronous>, transform_indices = @transform_1, window_bounds = array<i64: 1, 128>}, {pipeline_mode = #tpu.pipeline_mode<synchronous>, transform_indices = @transform_2, window_bounds = array<i64: 1, 128>}, {pipeline_mode = #tpu.pipeline_mode<synchronous>, transform_indices = @transform_3, window_bounds = array<i64: 128, 384>}, {pipeline_mode = #tpu.pipeline_mode<synchronous>, transform_indices = @transform_4, window_bounds = array<i64: 128, 128>}, {pipeline_mode = #tpu.pipeline_mode<synchronous>, transform_indices = @transform_5, window_bounds = array<i64: 1, 128>}, {pipeline_mode = #tpu.pipeline_mode<synchronous>, transform_indices = @transform_6, window_bounds = array<i64: 1, 128>}, {pipeline_mode = #tpu.pipeline_mode<synchronous>, transform_indices = @transform_7, window_bounds = array<i64: 1, 128>}, {pipeline_mode = #tpu.pipeline_mode<synchronous>, transform_indices = @transform_8, window_bounds = array<i64: 128, 512>}, {pipeline_mode = #tpu.pipeline_mode<synchronous>, transform_indices = @transform_9, window_bounds = array<i64: 1, 512>}, {pipeline_mode = #tpu.pipeline_mode<synchronous>, transform_indices = @transform_10, window_bounds = array<i64: 512, 128>}, {pipeline_mode = #tpu.pipeline_mode<synchronous>, transform_indices = @transform_11, window_bounds = array<i64: 1, 128>}, {transform_indices = @transform_12, window_bounds = array<i64: 1, 16, 128>}]} {
    %c0 = arith.constant 0 : index
    %c0_0 = arith.constant 0 : index
    %c0_1 = arith.constant 0 : index
    %0 = vector.load %arg1[%c0, %c0_0, %c0_1] : memref<1x16x128xf32, #tpu.memory_space<vmem>>, vector<1x16x128xf32>
    %1 = vector.shape_cast %0 : vector<1x16x128xf32> to vector<16x128xf32>
    %c0_2 = arith.constant 0 : index
    %c0_3 = arith.constant 0 : index
    %2 = vector.load %arg2[%c0_2, %c0_3] : memref<1x128xf32, #tpu.memory_space<vmem>>, vector<1x128xf32>
    %c0_4 = arith.constant 0 : index
    %c0_5 = arith.constant 0 : index
    %3 = vector.load %arg3[%c0_4, %c0_5] : memref<1x128xf32, #tpu.memory_space<vmem>>, vector<1x128xf32>
    %cst = arith.constant dense<0.000000e+00> : vector<16xf32>
    %4 = vector.multi_reduction <add>, %1, %cst [1] : vector<16x128xf32> to vector<16xf32>
    %5 = vector.shape_cast %4 : vector<16xf32> to vector<16x1xf32>
    %cst_6 = arith.constant 1.280000e+02 : f32
    %6 = vector.broadcast %cst_6 : f32 to vector<16x1xf32>
    %7 = arith.divf %5, %6 : vector<16x1xf32>
    %8 = vector.broadcast %7 : vector<16x1xf32> to vector<16x128xf32>
    %9 = arith.subf %1, %8 : vector<16x128xf32>
    %10 = arith.mulf %9, %9 : vector<16x128xf32>
    %cst_7 = arith.constant dense<0.000000e+00> : vector<16xf32>
    %11 = vector.multi_reduction <add>, %10, %cst_7 [1] : vector<16x128xf32> to vector<16xf32>
    %12 = vector.shape_cast %11 : vector<16xf32> to vector<16x1xf32>
    %cst_8 = arith.constant 1.280000e+02 : f32
    %13 = vector.broadcast %cst_8 : f32 to vector<16x1xf32>
    %14 = arith.divf %12, %13 : vector<16x1xf32>
    %15 = vector.broadcast %7 : vector<16x1xf32> to vector<16x128xf32>
    %16 = arith.subf %1, %15 : vector<16x128xf32>
    %cst_9 = arith.constant 9.99999974E-6 : f32
    %17 = vector.broadcast %cst_9 : f32 to vector<16x1xf32>
    %18 = arith.addf %14, %17 : vector<16x1xf32>
    %19 = math.rsqrt %18 : vector<16x1xf32>
    %20 = vector.broadcast %19 : vector<16x1xf32> to vector<16x128xf32>
    %21 = arith.mulf %16, %20 : vector<16x128xf32>
    %22 = vector.broadcast %2 : vector<1x128xf32> to vector<16x128xf32>
    %23 = arith.mulf %21, %22 : vector<16x128xf32>
    %24 = vector.broadcast %3 : vector<1x128xf32> to vector<16x128xf32>
    %25 = arith.addf %23, %24 : vector<16x128xf32>
    %c0_10 = arith.constant 0 : index
    %c0_11 = arith.constant 0 : index
    %26 = vector.load %arg4[%c0_10, %c0_11] : memref<128x384xf32, #tpu.memory_space<vmem>>, vector<128x384xf32>
    %cst_12 = arith.constant dense<0.000000e+00> : vector<16x384xf32>
    %27 = tpu.matmul %25, %26, %cst_12 {dimension_numbers = #tpu.dot_dimension_numbers<[1], [0], [0], [1], [0, 0, 1, 1], [], []>} : vector<16x128xf32>, vector<128x384xf32>, vector<16x384xf32> -> vector<16x384xf32>
    %28 = vector.extract_strided_slice %27 {offsets = [0, 0], sizes = [16, 128], strides = [1, 1]} : vector<16x384xf32> to vector<16x128xf32>
    %cst_13 = arith.constant 0.0883883461 : f32
    %29 = vector.broadcast %cst_13 : f32 to vector<16x128xf32>
    %30 = arith.mulf %28, %29 : vector<16x128xf32>
    %31 = vector.extract_strided_slice %27 {offsets = [0, 128], sizes = [16, 128], strides = [1, 1]} : vector<16x384xf32> to vector<16x128xf32>
    %32 = vector.extract_strided_slice %27 {offsets = [0, 256], sizes = [16, 128], strides = [1, 1]} : vector<16x384xf32> to vector<16x128xf32>
    %33 = tpu.iota {dimensions = array<i32: 0>} : vector<16x16xi32>
    %34 = tpu.iota {dimensions = array<i32: 1>} : vector<16x16xi32>
    %35 = arith.cmpi sle, %34, %33 : vector<16x16xi32>
    %36 = vector.extract_strided_slice %30 {offsets = [0, 0], sizes = [16, 32], strides = [1, 1]} : vector<16x128xf32> to vector<16x32xf32>
    %37 = vector.extract_strided_slice %31 {offsets = [0, 0], sizes = [16, 32], strides = [1, 1]} : vector<16x128xf32> to vector<16x32xf32>
    %cst_14 = arith.constant dense<0.000000e+00> : vector<16x16xf32>
    %38 = tpu.matmul %36, %37, %cst_14 {dimension_numbers = #tpu.dot_dimension_numbers<[1], [1], [0], [0], [0, 0, 1, 0], [], []>} : vector<16x32xf32>, vector<16x32xf32>, vector<16x16xf32> -> vector<16x16xf32>
    %cst_15 = arith.constant 0xFF800000 : f32
    %39 = vector.broadcast %cst_15 : f32 to vector<16x16xf32>
    %40 = arith.select %35, %38, %39 : vector<16x16xi1>, vector<16x16xf32>
    %cst_16 = arith.constant dense<0xFF800000> : vector<16xf32>
    %41 = vector.multi_reduction <maximumf>, %40, %cst_16 [1] : vector<16x16xf32> to vector<16xf32>
    %42 = vector.shape_cast %41 : vector<16xf32> to vector<16x1xf32>
    %43 = vector.broadcast %42 : vector<16x1xf32> to vector<16x16xf32>
    %44 = arith.subf %40, %43 : vector<16x16xf32>
    %45 = math.exp %44 : vector<16x16xf32>
    %cst_17 = arith.constant dense<0.000000e+00> : vector<16xf32>
    %46 = vector.multi_reduction <add>, %45, %cst_17 [1] : vector<16x16xf32> to vector<16xf32>
    %47 = vector.shape_cast %46 : vector<16xf32> to vector<16x1xf32>
    %48 = tpu.reciprocal %47 {approx = true} : vector<16x1xf32> -> vector<16x1xf32>
    %49 = vector.broadcast %48 : vector<16x1xf32> to vector<16x16xf32>
    %50 = arith.mulf %45, %49 : vector<16x16xf32>
    %51 = vector.extract_strided_slice %32 {offsets = [0, 0], sizes = [16, 32], strides = [1, 1]} : vector<16x128xf32> to vector<16x32xf32>
    %cst_18 = arith.constant dense<0.000000e+00> : vector<16x32xf32>
    %52 = tpu.matmul %50, %51, %cst_18 {dimension_numbers = #tpu.dot_dimension_numbers<[1], [0], [0], [1], [0, 0, 1, 1], [], []>} : vector<16x16xf32>, vector<16x32xf32>, vector<16x32xf32> -> vector<16x32xf32>
    %c0_19 = arith.constant 0 : index
    %c0_20 = arith.constant 0 : index
    %53 = vector.load %arg5[%c0_19, %c0_20] : memref<128x128xf32, #tpu.memory_space<vmem>>, vector<32x128xf32>
    %cst_21 = arith.constant dense<0.000000e+00> : vector<16x128xf32>
    %54 = tpu.matmul %52, %53, %cst_21 {dimension_numbers = #tpu.dot_dimension_numbers<[1], [0], [0], [1], [0, 0, 1, 1], [], []>} : vector<16x32xf32>, vector<32x128xf32>, vector<16x128xf32> -> vector<16x128xf32>
    %55 = vector.extract_strided_slice %30 {offsets = [0, 32], sizes = [16, 32], strides = [1, 1]} : vector<16x128xf32> to vector<16x32xf32>
    %56 = vector.extract_strided_slice %31 {offsets = [0, 32], sizes = [16, 32], strides = [1, 1]} : vector<16x128xf32> to vector<16x32xf32>
    %cst_22 = arith.constant dense<0.000000e+00> : vector<16x16xf32>
    %57 = tpu.matmul %55, %56, %cst_22 {dimension_numbers = #tpu.dot_dimension_numbers<[1], [1], [0], [0], [0, 0, 1, 0], [], []>} : vector<16x32xf32>, vector<16x32xf32>, vector<16x16xf32> -> vector<16x16xf32>
    %cst_23 = arith.constant 0xFF800000 : f32
    %58 = vector.broadcast %cst_23 : f32 to vector<16x16xf32>
    %59 = arith.select %35, %57, %58 : vector<16x16xi1>, vector<16x16xf32>
    %cst_24 = arith.constant dense<0xFF800000> : vector<16xf32>
    %60 = vector.multi_reduction <maximumf>, %59, %cst_24 [1] : vector<16x16xf32> to vector<16xf32>
    %61 = vector.shape_cast %60 : vector<16xf32> to vector<16x1xf32>
    %62 = vector.broadcast %61 : vector<16x1xf32> to vector<16x16xf32>
    %63 = arith.subf %59, %62 : vector<16x16xf32>
    %64 = math.exp %63 : vector<16x16xf32>
    %cst_25 = arith.constant dense<0.000000e+00> : vector<16xf32>
    %65 = vector.multi_reduction <add>, %64, %cst_25 [1] : vector<16x16xf32> to vector<16xf32>
    %66 = vector.shape_cast %65 : vector<16xf32> to vector<16x1xf32>
    %67 = tpu.reciprocal %66 {approx = true} : vector<16x1xf32> -> vector<16x1xf32>
    %68 = vector.broadcast %67 : vector<16x1xf32> to vector<16x16xf32>
    %69 = arith.mulf %64, %68 : vector<16x16xf32>
    %70 = vector.extract_strided_slice %32 {offsets = [0, 32], sizes = [16, 32], strides = [1, 1]} : vector<16x128xf32> to vector<16x32xf32>
    %cst_26 = arith.constant dense<0.000000e+00> : vector<16x32xf32>
    %71 = tpu.matmul %69, %70, %cst_26 {dimension_numbers = #tpu.dot_dimension_numbers<[1], [0], [0], [1], [0, 0, 1, 1], [], []>} : vector<16x16xf32>, vector<16x32xf32>, vector<16x32xf32> -> vector<16x32xf32>
    %c32 = arith.constant 32 : index
    %c0_27 = arith.constant 0 : index
    %72 = vector.load %arg5[%c32, %c0_27] : memref<128x128xf32, #tpu.memory_space<vmem>>, vector<32x128xf32>
    %cst_28 = arith.constant dense<0.000000e+00> : vector<16x128xf32>
    %73 = tpu.matmul %71, %72, %cst_28 {dimension_numbers = #tpu.dot_dimension_numbers<[1], [0], [0], [1], [0, 0, 1, 1], [], []>} : vector<16x32xf32>, vector<32x128xf32>, vector<16x128xf32> -> vector<16x128xf32>
    %74 = arith.addf %54, %73 : vector<16x128xf32>
    %75 = vector.extract_strided_slice %30 {offsets = [0, 64], sizes = [16, 32], strides = [1, 1]} : vector<16x128xf32> to vector<16x32xf32>
    %76 = vector.extract_strided_slice %31 {offsets = [0, 64], sizes = [16, 32], strides = [1, 1]} : vector<16x128xf32> to vector<16x32xf32>
    %cst_29 = arith.constant dense<0.000000e+00> : vector<16x16xf32>
    %77 = tpu.matmul %75, %76, %cst_29 {dimension_numbers = #tpu.dot_dimension_numbers<[1], [1], [0], [0], [0, 0, 1, 0], [], []>} : vector<16x32xf32>, vector<16x32xf32>, vector<16x16xf32> -> vector<16x16xf32>
    %cst_30 = arith.constant 0xFF800000 : f32
    %78 = vector.broadcast %cst_30 : f32 to vector<16x16xf32>
    %79 = arith.select %35, %77, %78 : vector<16x16xi1>, vector<16x16xf32>
    %cst_31 = arith.constant dense<0xFF800000> : vector<16xf32>
    %80 = vector.multi_reduction <maximumf>, %79, %cst_31 [1] : vector<16x16xf32> to vector<16xf32>
    %81 = vector.shape_cast %80 : vector<16xf32> to vector<16x1xf32>
    %82 = vector.broadcast %81 : vector<16x1xf32> to vector<16x16xf32>
    %83 = arith.subf %79, %82 : vector<16x16xf32>
    %84 = math.exp %83 : vector<16x16xf32>
    %cst_32 = arith.constant dense<0.000000e+00> : vector<16xf32>
    %85 = vector.multi_reduction <add>, %84, %cst_32 [1] : vector<16x16xf32> to vector<16xf32>
    %86 = vector.shape_cast %85 : vector<16xf32> to vector<16x1xf32>
    %87 = tpu.reciprocal %86 {approx = true} : vector<16x1xf32> -> vector<16x1xf32>
    %88 = vector.broadcast %87 : vector<16x1xf32> to vector<16x16xf32>
    %89 = arith.mulf %84, %88 : vector<16x16xf32>
    %90 = vector.extract_strided_slice %32 {offsets = [0, 64], sizes = [16, 32], strides = [1, 1]} : vector<16x128xf32> to vector<16x32xf32>
    %cst_33 = arith.constant dense<0.000000e+00> : vector<16x32xf32>
    %91 = tpu.matmul %89, %90, %cst_33 {dimension_numbers = #tpu.dot_dimension_numbers<[1], [0], [0], [1], [0, 0, 1, 1], [], []>} : vector<16x16xf32>, vector<16x32xf32>, vector<16x32xf32> -> vector<16x32xf32>
    %c64 = arith.constant 64 : index
    %c0_34 = arith.constant 0 : index
    %92 = vector.load %arg5[%c64, %c0_34] : memref<128x128xf32, #tpu.memory_space<vmem>>, vector<32x128xf32>
    %cst_35 = arith.constant dense<0.000000e+00> : vector<16x128xf32>
    %93 = tpu.matmul %91, %92, %cst_35 {dimension_numbers = #tpu.dot_dimension_numbers<[1], [0], [0], [1], [0, 0, 1, 1], [], []>} : vector<16x32xf32>, vector<32x128xf32>, vector<16x128xf32> -> vector<16x128xf32>
    %94 = arith.addf %74, %93 : vector<16x128xf32>
    %95 = vector.extract_strided_slice %30 {offsets = [0, 96], sizes = [16, 32], strides = [1, 1]} : vector<16x128xf32> to vector<16x32xf32>
    %96 = vector.extract_strided_slice %31 {offsets = [0, 96], sizes = [16, 32], strides = [1, 1]} : vector<16x128xf32> to vector<16x32xf32>
    %cst_36 = arith.constant dense<0.000000e+00> : vector<16x16xf32>
    %97 = tpu.matmul %95, %96, %cst_36 {dimension_numbers = #tpu.dot_dimension_numbers<[1], [1], [0], [0], [0, 0, 1, 0], [], []>} : vector<16x32xf32>, vector<16x32xf32>, vector<16x16xf32> -> vector<16x16xf32>
    %cst_37 = arith.constant 0xFF800000 : f32
    %98 = vector.broadcast %cst_37 : f32 to vector<16x16xf32>
    %99 = arith.select %35, %97, %98 : vector<16x16xi1>, vector<16x16xf32>
    %cst_38 = arith.constant dense<0xFF800000> : vector<16xf32>
    %100 = vector.multi_reduction <maximumf>, %99, %cst_38 [1] : vector<16x16xf32> to vector<16xf32>
    %101 = vector.shape_cast %100 : vector<16xf32> to vector<16x1xf32>
    %102 = vector.broadcast %101 : vector<16x1xf32> to vector<16x16xf32>
    %103 = arith.subf %99, %102 : vector<16x16xf32>
    %104 = math.exp %103 : vector<16x16xf32>
    %cst_39 = arith.constant dense<0.000000e+00> : vector<16xf32>
    %105 = vector.multi_reduction <add>, %104, %cst_39 [1] : vector<16x16xf32> to vector<16xf32>
    %106 = vector.shape_cast %105 : vector<16xf32> to vector<16x1xf32>
    %107 = tpu.reciprocal %106 {approx = true} : vector<16x1xf32> -> vector<16x1xf32>
    %108 = vector.broadcast %107 : vector<16x1xf32> to vector<16x16xf32>
    %109 = arith.mulf %104, %108 : vector<16x16xf32>
    %110 = vector.extract_strided_slice %32 {offsets = [0, 96], sizes = [16, 32], strides = [1, 1]} : vector<16x128xf32> to vector<16x32xf32>
    %cst_40 = arith.constant dense<0.000000e+00> : vector<16x32xf32>
    %111 = tpu.matmul %109, %110, %cst_40 {dimension_numbers = #tpu.dot_dimension_numbers<[1], [0], [0], [1], [0, 0, 1, 1], [], []>} : vector<16x16xf32>, vector<16x32xf32>, vector<16x32xf32> -> vector<16x32xf32>
    %c96 = arith.constant 96 : index
    %c0_41 = arith.constant 0 : index
    %112 = vector.load %arg5[%c96, %c0_41] : memref<128x128xf32, #tpu.memory_space<vmem>>, vector<32x128xf32>
    %cst_42 = arith.constant dense<0.000000e+00> : vector<16x128xf32>
    %113 = tpu.matmul %111, %112, %cst_42 {dimension_numbers = #tpu.dot_dimension_numbers<[1], [0], [0], [1], [0, 0, 1, 1], [], []>} : vector<16x32xf32>, vector<32x128xf32>, vector<16x128xf32> -> vector<16x128xf32>
    %114 = arith.addf %94, %113 : vector<16x128xf32>
    %115 = arith.addf %1, %114 : vector<16x128xf32>
    %c0_43 = arith.constant 0 : index
    %c0_44 = arith.constant 0 : index
    %116 = vector.load %arg6[%c0_43, %c0_44] : memref<1x128xf32, #tpu.memory_space<vmem>>, vector<1x128xf32>
    %117 = vector.broadcast %116 : vector<1x128xf32> to vector<16x128xf32>
    %118 = arith.addf %115, %117 : vector<16x128xf32>
    %c0_45 = arith.constant 0 : index
    %c0_46 = arith.constant 0 : index
    %119 = vector.load %arg7[%c0_45, %c0_46] : memref<1x128xf32, #tpu.memory_space<vmem>>, vector<1x128xf32>
    %c0_47 = arith.constant 0 : index
    %c0_48 = arith.constant 0 : index
    %120 = vector.load %arg8[%c0_47, %c0_48] : memref<1x128xf32, #tpu.memory_space<vmem>>, vector<1x128xf32>
    %cst_49 = arith.constant dense<0.000000e+00> : vector<16xf32>
    %121 = vector.multi_reduction <add>, %118, %cst_49 [1] : vector<16x128xf32> to vector<16xf32>
    %122 = vector.shape_cast %121 : vector<16xf32> to vector<16x1xf32>
    %cst_50 = arith.constant 1.280000e+02 : f32
    %123 = vector.broadcast %cst_50 : f32 to vector<16x1xf32>
    %124 = arith.divf %122, %123 : vector<16x1xf32>
    %125 = vector.broadcast %124 : vector<16x1xf32> to vector<16x128xf32>
    %126 = arith.subf %118, %125 : vector<16x128xf32>
    %127 = arith.mulf %126, %126 : vector<16x128xf32>
    %cst_51 = arith.constant dense<0.000000e+00> : vector<16xf32>
    %128 = vector.multi_reduction <add>, %127, %cst_51 [1] : vector<16x128xf32> to vector<16xf32>
    %129 = vector.shape_cast %128 : vector<16xf32> to vector<16x1xf32>
    %cst_52 = arith.constant 1.280000e+02 : f32
    %130 = vector.broadcast %cst_52 : f32 to vector<16x1xf32>
    %131 = arith.divf %129, %130 : vector<16x1xf32>
    %132 = vector.broadcast %124 : vector<16x1xf32> to vector<16x128xf32>
    %133 = arith.subf %118, %132 : vector<16x128xf32>
    %cst_53 = arith.constant 9.99999974E-6 : f32
    %134 = vector.broadcast %cst_53 : f32 to vector<16x1xf32>
    %135 = arith.addf %131, %134 : vector<16x1xf32>
    %136 = math.rsqrt %135 : vector<16x1xf32>
    %137 = vector.broadcast %136 : vector<16x1xf32> to vector<16x128xf32>
    %138 = arith.mulf %133, %137 : vector<16x128xf32>
    %139 = vector.broadcast %119 : vector<1x128xf32> to vector<16x128xf32>
    %140 = arith.mulf %138, %139 : vector<16x128xf32>
    %141 = vector.broadcast %120 : vector<1x128xf32> to vector<16x128xf32>
    %142 = arith.addf %140, %141 : vector<16x128xf32>
    %c0_54 = arith.constant 0 : index
    %c0_55 = arith.constant 0 : index
    %143 = vector.load %arg9[%c0_54, %c0_55] : memref<128x512xf32, #tpu.memory_space<vmem>>, vector<128x512xf32>
    %cst_56 = arith.constant dense<0.000000e+00> : vector<16x512xf32>
    %144 = tpu.matmul %142, %143, %cst_56 {dimension_numbers = #tpu.dot_dimension_numbers<[1], [0], [0], [1], [0, 0, 1, 1], [], []>} : vector<16x128xf32>, vector<128x512xf32>, vector<16x512xf32> -> vector<16x512xf32>
    %c0_57 = arith.constant 0 : index
    %c0_58 = arith.constant 0 : index
    %145 = vector.load %arg10[%c0_57, %c0_58] : memref<1x512xf32, #tpu.memory_space<vmem>>, vector<1x512xf32>
    %146 = vector.broadcast %145 : vector<1x512xf32> to vector<16x512xf32>
    %147 = arith.addf %144, %146 : vector<16x512xf32>
    %cst_59 = arith.constant 0.000000e+00 : f32
    %148 = vector.broadcast %cst_59 : f32 to vector<16x512xf32>
    %149 = arith.maximumf %147, %148 : vector<16x512xf32>
    %c0_60 = arith.constant 0 : index
    %c0_61 = arith.constant 0 : index
    %150 = vector.load %arg11[%c0_60, %c0_61] : memref<512x128xf32, #tpu.memory_space<vmem>>, vector<512x128xf32>
    %cst_62 = arith.constant dense<0.000000e+00> : vector<16x128xf32>
    %151 = tpu.matmul %149, %150, %cst_62 {dimension_numbers = #tpu.dot_dimension_numbers<[1], [0], [0], [1], [0, 0, 1, 1], [], []>} : vector<16x512xf32>, vector<512x128xf32>, vector<16x128xf32> -> vector<16x128xf32>
    %c0_63 = arith.constant 0 : index
    %c0_64 = arith.constant 0 : index
    %152 = vector.load %arg12[%c0_63, %c0_64] : memref<1x128xf32, #tpu.memory_space<vmem>>, vector<1x128xf32>
    %153 = vector.broadcast %152 : vector<1x128xf32> to vector<16x128xf32>
    %154 = arith.addf %151, %153 : vector<16x128xf32>
    %155 = arith.addf %118, %154 : vector<16x128xf32>
    %c0_65 = arith.constant 0 : index
    %c0_66 = arith.constant 0 : index
    %c0_67 = arith.constant 0 : index
    %156 = vector.load %arg13[%c0_65, %c0_66, %c0_67] : memref<1x16x128xf32, #tpu.memory_space<vmem>>, vector<1x16x128xf32>
    %157 = vector.shape_cast %156 : vector<1x16x128xf32> to vector<16x128xf32>
    %158 = vector.shape_cast %155 : vector<16x128xf32> to vector<1x16x128xf32>
    tpu.vector_store %arg13[%c0_65, %c0_66, %c0_67], %158 {strides = array<i32>} : memref<1x16x128xf32, #tpu.memory_space<vmem>>, vector<1x16x128xf32>,
    return
  }
  func.func @transform_0(%arg0: i32) -> (i32, i32, i32) {
    %c0_i32 = arith.constant 0 : i32
    %c0_i32_0 = arith.constant 0 : i32
    %c0_i32_1 = arith.constant 0 : i32
    return %arg0, %c0_i32, %c0_i32_0 : i32, i32, i32
  }
  func.func @transform_1(%arg0: i32) -> (i32, i32) {
    %c0_i32 = arith.constant 0 : i32
    %c0_i32_0 = arith.constant 0 : i32
    %c0_i32_1 = arith.constant 0 : i32
    return %c0_i32, %c0_i32_0 : i32, i32
  }
  func.func @transform_2(%arg0: i32) -> (i32, i32) {
    %c0_i32 = arith.constant 0 : i32
    %c0_i32_0 = arith.constant 0 : i32
    %c0_i32_1 = arith.constant 0 : i32
    return %c0_i32, %c0_i32_0 : i32, i32
  }
  func.func @transform_3(%arg0: i32) -> (i32, i32) {
    %c0_i32 = arith.constant 0 : i32
    %c0_i32_0 = arith.constant 0 : i32
    %c0_i32_1 = arith.constant 0 : i32
    return %c0_i32, %c0_i32_0 : i32, i32
  }
  func.func @transform_4(%arg0: i32) -> (i32, i32) {
    %c0_i32 = arith.constant 0 : i32
    %c0_i32_0 = arith.constant 0 : i32
    %c0_i32_1 = arith.constant 0 : i32
    return %c0_i32, %c0_i32_0 : i32, i32
  }
  func.func @transform_5(%arg0: i32) -> (i32, i32) {
    %c0_i32 = arith.constant 0 : i32
    %c0_i32_0 = arith.constant 0 : i32
    %c0_i32_1 = arith.constant 0 : i32
    return %c0_i32, %c0_i32_0 : i32, i32
  }
  func.func @transform_6(%arg0: i32) -> (i32, i32) {
    %c0_i32 = arith.constant 0 : i32
    %c0_i32_0 = arith.constant 0 : i32
    %c0_i32_1 = arith.constant 0 : i32
    return %c0_i32, %c0_i32_0 : i32, i32
  }
  func.func @transform_7(%arg0: i32) -> (i32, i32) {
    %c0_i32 = arith.constant 0 : i32
    %c0_i32_0 = arith.constant 0 : i32
    %c0_i32_1 = arith.constant 0 : i32
    return %c0_i32, %c0_i32_0 : i32, i32
  }
  func.func @transform_8(%arg0: i32) -> (i32, i32) {
    %c0_i32 = arith.constant 0 : i32
    %c0_i32_0 = arith.constant 0 : i32
    %c0_i32_1 = arith.constant 0 : i32
    return %c0_i32, %c0_i32_0 : i32, i32
  }
  func.func @transform_9(%arg0: i32) -> (i32, i32) {
    %c0_i32 = arith.constant 0 : i32
    %c0_i32_0 = arith.constant 0 : i32
    %c0_i32_1 = arith.constant 0 : i32
    return %c0_i32, %c0_i32_0 : i32, i32
  }
  func.func @transform_10(%arg0: i32) -> (i32, i32) {
    %c0_i32 = arith.constant 0 : i32
    %c0_i32_0 = arith.constant 0 : i32
    %c0_i32_1 = arith.constant 0 : i32
    return %c0_i32, %c0_i32_0 : i32, i32
  }
  func.func @transform_11(%arg0: i32) -> (i32, i32) {
    %c0_i32 = arith.constant 0 : i32
    %c0_i32_0 = arith.constant 0 : i32
    %c0_i32_1 = arith.constant 0 : i32
    return %c0_i32, %c0_i32_0 : i32, i32
  }
  func.func @transform_12(%arg0: i32) -> (i32, i32, i32) {
    %c0_i32 = arith.constant 0 : i32
    %c0_i32_0 = arith.constant 0 : i32
    %c0_i32_1 = arith.constant 0 : i32
    return %arg0, %c0_i32, %c0_i32_0 : i32, i32, i32
  }
}

</mosaic_0001>

<llo_original>
// kernel: bigram_lm_forward.13
$region0: #{bigram_lm_forward.13}
  #allocation0 [shape = 'u32[]', space=smem, size = 0x4, offset = 0x4, fixed_abs, tag = 'smem constant byte address 0x4 - core index']
  #allocation1 [shape = 'u32[144,128]{1,0:T(1,128)}', space=vmem, size = 0x12000, scoped, tag = 'internal scratch']
  %s0 = inlined_call_operand.vmem [shape: f32[2,16,128], index: 0, kind: input, shape index: {}]
  %s1 = inlined_call_operand.vmem [shape: f32[1,128], index: 1, kind: input, shape index: {}]
  %s2 = inlined_call_operand.vmem [shape: f32[1,128], index: 2, kind: input, shape index: {}]
  %s3 = inlined_call_operand.vmem [shape: f32[128,128], index: 3, kind: input, shape index: {}]
  %s4 = inlined_call_operand.vmem [shape: f32[1,128], index: 4, kind: input, shape index: {}]
  %s5 = inlined_call_operand.hbm [shape: f32[2,16,128], index: 5, kind: output, shape index: {}]
  %s6 = sld [smem:[#allocation0]]
  $region53: #{bigram_lm_forward.13} parent=0
    _
  %s8 = ssub.s32 1, %s6
  %s9 = scalar_select 0, %s8, %s6
  $region1: #{bigram_lm_forward.13} parent=0
    #allocation2 [shape = 'u8[16384]{0}', space=vmem, size = 0x4000, scoped, tag = 'output window, operand 0']
    #allocation3 [shape = 's32[2]{0}', space=sflag, size = 0x8, scoped, tag = 'scoped memory for bigram_lm_forward.13']
    %10 = vsyncpa [#allocation3], 0
    %s11 = scalar_lea.sflag [#allocation3], 1
    %12 = vsyncpa %s11, 0
    loop: start=0, step=1, limit=4
    $region2: #{bigram_lm_forward.13} parent=1 // loop_pre_header
      _
    $region3: #{bigram_lm_forward.13} parent=1 // loop_header
      %s14 = sphi 0, %s18
      %p15 = scmp.ge.s32.totalorder %s14, 4
      %s24 = sphi 0, %s26
      %s27 = sphi 0, %s24
      %s28 = sphi 0, %s27
      %s44 = sphi 0, %s28
      %s48 = sphi 0, %s48
      %s50 = sphi 0, %s48
      %s51 = sphi 0, %s50
      %s65 = sphi 0, %s51
      %s69 = sphi 0, %s69
      %s71 = sphi 0, %s69
      %s72 = sphi 0, %s71
      %s86 = sphi 0, %s72
      %s90 = sphi 0, %s90
      %s92 = sphi 0, %s90
      %s93 = sphi 0, %s92
      %s107 = sphi 0, %s93
      %s111 = sphi 0, %s111
      %s113 = sphi 0, %s111
      %s114 = sphi 0, %s113
      %s128 = sphi 0, %s114
      %s134 = sphi 0, %s136
      %s137 = sphi 0, %s134
      %s138 = sphi 0, %s137
      %s154 = sphi 0, %s138
    $region4: #{bigram_lm_forward.13} parent=1 // loop_header_branch
      %17 = sbr.rel (%p15) target = $region8
    $region5: #{bigram_lm_forward.13} parent=1 // loop_body
      %s19 = ssub.s32 %s14, 1
      %s20 = ssub.s32 %s14, 2
      %s21 = sadd.s32 %s14, 1
      %s22 = ssub.s32 %s14, %s21
      %p23 = scmp.eq.s32.totalorder %s22, 0
      %s25 = sadd.s32 %s24, 1
      %s26 = scalar_select %p23, %s24, %s25
      %p29 = pneg %p23
      %p30 = scmp.eq.s32.totalorder %s14, 1
      %p31 = por %p29, %p30
      %p32 = scmp.ne.s32.totalorder %s24, %s27
      %p33 = scmp.eq.s32.totalorder %s14, 0
      %p34 = por %p32, %p33
      %p35 = scmp.ne.s32.totalorder %s24, %s27
      %p36 = scmp.eq.s32.totalorder %s19, 1
      %p37 = por %p35, %p36
      %p38 = scmp.ne.s32.totalorder %s27, %s28
      %p39 = scmp.eq.s32.totalorder %s19, 0
      %p40 = por %p38, %p39
      %p41 = scmp.ne.s32.totalorder %s27, %s28
      %p42 = scmp.eq.s32.totalorder %s20, 1
      %p43 = por %p41, %p42
      %p45 = scmp.ne.s32.totalorder %s28, %s44
      %p46 = scmp.eq.s32.totalorder %s20, 0
      %p47 = por %p45, %p46
      %s49 = sadd.s32 %s48, 1
      %p52 = scmp.eq.s32.totalorder %s14, 1
      %p53 = scmp.ne.s32.totalorder %s48, %s50
      %p54 = scmp.eq.s32.totalorder %s14, 0
      %p55 = por %p53, %p54
      %p56 = scmp.ne.s32.totalorder %s48, %s50
      %p57 = scmp.eq.s32.totalorder %s19, 1
      %p58 = por %p56, %p57
      %p59 = scmp.ne.s32.totalorder %s50, %s51
      %p60 = scmp.eq.s32.totalorder %s19, 0
      %p61 = por %p59, %p60
      %p62 = scmp.ne.s32.totalorder %s50, %s51
      %p63 = scmp.eq.s32.totalorder %s20, 1
      %p64 = por %p62, %p63
      %p66 = scmp.ne.s32.totalorder %s51, %s65
      %p67 = scmp.eq.s32.totalorder %s20, 0
      %p68 = por %p66, %p67
      %s70 = sadd.s32 %s69, 1
      %p73 = scmp.eq.s32.totalorder %s14, 1
      %p74 = scmp.ne.s32.totalorder %s69, %s71
      %p75 = scmp.eq.s32.totalorder %s14, 0
      %p76 = por %p74, %p75
      %p77 = scmp.ne.s32.totalorder %s69, %s71
      %p78 = scmp.eq.s32.totalorder %s19, 1
      %p79 = por %p77, %p78
      %p80 = scmp.ne.s32.totalorder %s71, %s72
      %p81 = scmp.eq.s32.totalorder %s19, 0
      %p82 = por %p80, %p81
      %p83 = scmp.ne.s32.totalorder %s71, %s72
      %p84 = scmp.eq.s32.totalorder %s20, 1
      %p85 = por %p83, %p84
      %p87 = scmp.ne.s32.totalorder %s72, %s86
      %p88 = scmp.eq.s32.totalorder %s20, 0
      %p89 = por %p87, %p88
      %s91 = sadd.s32 %s90, 1
      %p94 = scmp.eq.s32.totalorder %s14, 1
      %p95 = scmp.ne.s32.totalorder %s90, %s92
      %p96 = scmp.eq.s32.totalorder %s14, 0
      %p97 = por %p95, %p96
      %p98 = scmp.ne.s32.totalorder %s90, %s92
      %p99 = scmp.eq.s32.totalorder %s19, 1
      %p100 = por %p98, %p99
      %p101 = scmp.ne.s32.totalorder %s92, %s93
      %p102 = scmp.eq.s32.totalorder %s19, 0
      %p103 = por %p101, %p102
      %p104 = scmp.ne.s32.totalorder %s92, %s93
      %p105 = scmp.eq.s32.totalorder %s20, 1
      %p106 = por %p104, %p105
      %p108 = scmp.ne.s32.totalorder %s93, %s107
      %p109 = scmp.eq.s32.totalorder %s20, 0
      %p110 = por %p108, %p109
      %s112 = sadd.s32 %s111, 1
      %p115 = scmp.eq.s32.totalorder %s14, 1
      %p116 = scmp.ne.s32.totalorder %s111, %s113
      %p117 = scmp.eq.s32.totalorder %s14, 0
      %p118 = por %p116, %p117
      %p119 = scmp.ne.s32.totalorder %s111, %s113
      %p120 = scmp.eq.s32.totalorder %s19, 1
      %p121 = por %p119, %p120
      %p122 = scmp.ne.s32.totalorder %s113, %s114
      %p123 = scmp.eq.s32.totalorder %s19, 0
      %p124 = por %p122, %p123
      %p125 = scmp.ne.s32.totalorder %s113, %s114
      %p126 = scmp.eq.s32.totalorder %s20, 1
      %p127 = por %p125, %p126
      %p129 = scmp.ne.s32.totalorder %s114, %s128
      %p130 = scmp.eq.s32.totalorder %s20, 0
      %p131 = por %p129, %p130
      %s132 = ssub.s32 %s14, %s21
      %p133 = scmp.eq.s32.totalorder %s132, 0
      %s135 = sadd.s32 %s134, 1
      %s136 = scalar_select %p133, %s134, %s135
      %p139 = pneg %p133
      %p140 = scmp.eq.s32.totalorder %s14, 1
      %p141 = por %p139, %p140
      %p142 = scmp.ne.s32.totalorder %s134, %s137
      %p143 = scmp.eq.s32.totalorder %s14, 0
      %p144 = por %p142, %p143
      %p145 = scmp.ne.s32.totalorder %s134, %s137
      %p146 = scmp.eq.s32.totalorder %s19, 1
      %p147 = por %p145, %p146
      %p148 = scmp.ne.s32.totalorder %s137, %s138
      %p149 = scmp.eq.s32.totalorder %s19, 0
      %p150 = por %p148, %p149
      %p151 = scmp.ne.s32.totalorder %s137, %s138
      %p152 = scmp.eq.s32.totalorder %s20, 1
      %p153 = por %p151, %p152
      %p155 = scmp.ne.s32.totalorder %s138, %s154
      %p156 = scmp.eq.s32.totalorder %s20, 0
      %p157 = por %p155, %p156
      %p158 = scmp.le.s32.totalorder 1, %s14
      %p159 = scmp.lt.s32.totalorder %s14, 3
      %p160 = pnand %p158, %p159
      %p161 = pneg %p160
      // Predicated region
      $region9: #{bigram_lm_forward.13} parent=5 // pred_check
        _
      $region10: #{bigram_lm_forward.13} parent=5 // pred_check_branch
        %163 = sbr.rel (%p160) target = $region12
      $region11: #{bigram_lm_forward.13} parent=5 // pred_region
        %s164 = ssub.s32 %s14, 1
        // Predicated region
        $region13: #{bigram_lm_forward.13} parent=11 // pred_check
          %p165 = pneg %p61
        $region14: #{bigram_lm_forward.13} parent=11 // pred_check_branch
          %167 = sbr.rel (%p165) target = $region16
        $region15: #{bigram_lm_forward.13} parent=11 // pred_region
          _
        $region16: #{bigram_lm_forward.13} parent=11 // pred_fallthru
          _
        // Predicated region
        $region17: #{bigram_lm_forward.13} parent=11 // pred_check
          %p168 = pneg %p82
        $region18: #{bigram_lm_forward.13} parent=11 // pred_check_branch
          %170 = sbr.rel (%p168) target = $region20
        $region19: #{bigram_lm_forward.13} parent=11 // pred_region
          _
        $region20: #{bigram_lm_forward.13} parent=11 // pred_fallthru
          _
        // Predicated region
        $region21: #{bigram_lm_forward.13} parent=11 // pred_check
          %p171 = pneg %p103
        $region22: #{bigram_lm_forward.13} parent=11 // pred_check_branch
          %173 = sbr.rel (%p171) target = $region24
        $region23: #{bigram_lm_forward.13} parent=11 // pred_region
          _
        $region24: #{bigram_lm_forward.13} parent=11 // pred_fallthru
          _
        // Predicated region
        $region25: #{bigram_lm_forward.13} parent=11 // pred_check
          %p174 = pneg %p124
        $region26: #{bigram_lm_forward.13} parent=11 // pred_check_branch
          %176 = sbr.rel (%p174) target = $region28
        $region27: #{bigram_lm_forward.13} parent=11 // pred_region
          _
        $region28: #{bigram_lm_forward.13} parent=11 // pred_fallthru
          _
      $region12: #{bigram_lm_forward.13} parent=5 // pred_fallthru
        _
      %p177 = scmp.lt.s32.totalorder %s14, 2
      // Predicated region
      $region29: #{bigram_lm_forward.13} parent=5 // pred_check
        %p178 = pneg %p177
      $region30: #{bigram_lm_forward.13} parent=5 // pred_check_branch
        %180 = sbr.rel (%p178) target = $region32
      $region31: #{bigram_lm_forward.13} parent=5 // pred_region
        // Predicated region
        $region33: #{bigram_lm_forward.13} parent=31 // pred_check
          %p181 = pneg %p34
        $region34: #{bigram_lm_forward.13} parent=31 // pred_check_branch
          %183 = sbr.rel (%p181) target = $region36
        $region35: #{bigram_lm_forward.13} parent=31 // pred_region
          %p184 = scmp.lt.s32.totalorder %s14, 1
          %s185 = scalar_select %p184, %s14, 1
          %s186 = smul.addr %s185, 2
          %s187 = smul.addr %s186, 8
          %s188 = scalar_lea.vmem %s0, %s187
        $region36: #{bigram_lm_forward.13} parent=31 // pred_fallthru
          _
      $region32: #{bigram_lm_forward.13} parent=5 // pred_fallthru
        _
      %p189 = scmp.le.s32.totalorder 1, %s14
      %p190 = scmp.lt.s32.totalorder %s14, 3
      %p191 = pnand %p189, %p190
      %p192 = pneg %p191
      // Predicated region
      $region37: #{bigram_lm_forward.13} parent=5 // pred_check
        _
      $region38: #{bigram_lm_forward.13} parent=5 // pred_check_branch
        %194 = sbr.rel (%p191) target = $region40
      $region39: #{bigram_lm_forward.13} parent=5 // pred_region
        %s195 = ssub.s32 %s14, 1
        %p196 = scmp.lt.s32.totalorder %s19, 1
        %s197 = scalar_select %p196, %s19, 1
        %s198 = smul.addr %s197, 2
        %s199 = smul.addr %s198, 8
        %s200 = scalar_lea.vmem %s0, %s199
        %p201 = pneg %p40
        %p202 = pneg %p37
        %p203 = pneg %p61
        %p204 = pneg %p58
        %p205 = pneg %p82
        %p206 = pneg %p79
        %p207 = pneg %p103
        %p208 = pneg %p100
        %p209 = pneg %p124
        %p210 = pneg %p121
        %p211 = pneg %p150
        %p212 = pneg %p147
        %s213 = sand.u32 %s137, 1
        %s214 = scalar_lea.sflag [#allocation3], %s213
        %s215 = sand.u32 %s137, 1
        %s216 = smul.addr %s215, 16
        %s217 = scalar_lea.vmem [#allocation2], %s216
        %p218 = scmp.lt.s32.totalorder %s19, 1
        %s219 = scalar_select %p218, %s19, 1
        %s220 = smul.addr %s219, 2
        %s221 = smul.addr %s220, 8
        %s222 = scalar_lea.vmem %s0, %s221
        %v223 = vld [vmem:[%s222] sm:$0xff]
        %v224 = vld [vmem:[%s222 + $0x8] sm:$0xff]
        %v225 = vld [vmem:[%s1] sm:$0x1]
        %v226 = vld [vmem:[%s2] sm:$0x1]
        %227 = vadd.xlane.f32.xlu0 %v223
        %v228 = vpop.xlane.xlu0 %227
        %229 = vadd.xlane.f32.xlu0 %v224
        %v230 = vpop.xlane.xlu0 %229
        %v231 = vrcp.pop 128.0
        %v232 = vmul.f32 %v228, %v231
        %v233 = vmul.f32 %v230, %v231
        %v234 = vsub.f32 %v223, %v232
        %v235 = vsub.f32 %v224, %v233
        %v236 = vmul.f32 %v234, %v234
        %v237 = vmul.f32 %v235, %v235
        %238 = vadd.xlane.f32.xlu0 %v236
        %v239 = vpop.xlane.xlu0 %238
        %240 = vadd.xlane.f32.xlu0 %v237
        %v241 = vpop.xlane.xlu0 %240
        %v242 = vmul.f32 %v239, %v231
        %v243 = vmul.f32 %v241, %v231
        %v244 = vadd.f32 %v242, 1e-05
        %v245 = vadd.f32 %v243, 1e-05
        %v246 = vrsqrt.pop %v244
        %v247 = vrsqrt.pop %v245
        %v248 = vmul.f32 %v234, %v246
        %v249 = vmul.f32 %v235, %v247
        %v251 = vlaneseq
        %v252 = vshrl.u32 %v251, 7
        %v253 = vsub.s32 0, %v252
        %v254 = vrot.slane %v225, %v253
        %v256 = vmul.f32 %v248, %v254
        %v257 = vmul.f32 %v249, %v254
        %v259 = vlaneseq
        %v260 = vshrl.u32 %v259, 7
        %v261 = vsub.s32 0, %v260
        %v262 = vrot.slane %v226, %v261
        %v264 = vadd.f32 %v256, %v262
        %v265 = vadd.f32 %v257, %v262
        %v266 = vld [vmem:[%s3] sm:$0xff]
        %v267 = vld [vmem:[%s3 + $0x8] sm:$0xff]
        %v268 = vld [vmem:[%s3 + $0x10] sm:$0xff]
        %v269 = vld [vmem:[%s3 + $0x18] sm:$0xff]
        %v270 = vld [vmem:[%s3 + $0x20] sm:$0xff]
        %v271 = vld [vmem:[%s3 + $0x28] sm:$0xff]
        %v272 = vld [vmem:[%s3 + $0x30] sm:$0xff]
        %v273 = vld [vmem:[%s3 + $0x38] sm:$0xff]
        %v274 = vld [vmem:[%s3 + $0x40] sm:$0xff]
        %v275 = vld [vmem:[%s3 + $0x48] sm:$0xff]
        %v276 = vld [vmem:[%s3 + $0x50] sm:$0xff]
        %v277 = vld [vmem:[%s3 + $0x58] sm:$0xff]
        %v278 = vld [vmem:[%s3 + $0x60] sm:$0xff]
        %v279 = vld [vmem:[%s3 + $0x68] sm:$0xff]
        %v280 = vld [vmem:[%s3 + $0x70] sm:$0xff]
        %v281 = vld [vmem:[%s3 + $0x78] sm:$0xff]
        %v282 = vld [vmem:[%s4] sm:$0x1]
        %v284 = vlaneseq
        %v285 = vshrl.u32 %v284, 7
        %v286 = vsub.s32 0, %v285
        %v287 = vrot.slane %v282, %v286
        %289 = vmatprep.subr.mxu0 0.0
        %290 = vmatpush1.msra.mxu0 %v266
        %291 = vmatprep.subr.mxu0 0.0
        %292 = vmatpush1.msra.mxu0 %v267
        %293 = vmatprep.subr.mxu0 0.0
        %294 = vmatpush1.msra.mxu0 %v268
        %295 = vmatprep.subr.mxu0 0.0
        %296 = vmatpush1.msra.mxu0 %v269
        %297 = vmatprep.subr.mxu0 0.0
        %298 = vmatpush1.msra.mxu0 %v270
        %299 = vmatprep.subr.mxu0 0.0
        %300 = vmatpush1.msra.mxu0 %v271
        %301 = vmatprep.subr.mxu0 0.0
        %302 = vmatpush1.msra.mxu0 %v272
        %303 = vmatprep.subr.mxu0 0.0
        %304 = vmatpush1.msra.mxu0 %v273
        %305 = vmatprep.subr.mxu0 0.0
        %306 = vmatpush1.msra.mxu0 %v274
        %307 = vmatprep.subr.mxu0 0.0
        %308 = vmatpush1.msra.mxu0 %v275
        %309 = vmatprep.subr.mxu0 0.0
        %310 = vmatpush1.msra.mxu0 %v276
        %311 = vmatprep.subr.mxu0 0.0
        %312 = vmatpush1.msra.mxu0 %v277
        %313 = vmatprep.subr.mxu0 0.0
        %314 = vmatpush1.msra.mxu0 %v278
        %315 = vmatprep.subr.mxu0 0.0
        %316 = vmatpush1.msra.mxu0 %v279
        %317 = vmatprep.subr.mxu0 0.0
        %318 = vmatpush1.msra.mxu0 %v280
        %319 = vmatprep.subr.mxu0 0.0
        %320 = vmatpush1.msra.mxu0 %v281
        %321 = vmatprep.subr.mxu0 0.0
        %322 = vmatpush1.msra.mxu0 0.0
        %323 = vmatprep.subr.mxu0 0.0
        %324 = vmatpush1.msra.mxu0 0.0
        %325 = vmatprep.subr.mxu0 0.0
        %326 = vmatpush1.msra.mxu0 0.0
        %327 = vmatprep.subr.mxu0 0.0
        %328 = vmatpush1.msra.mxu0 0.0
        %329 = vmatprep.subr.mxu0 0.0
        %330 = vmatpush1.msra.mxu0 0.0
        %331 = vmatprep.subr.mxu0 0.0
        %332 = vmatpush1.msra.mxu0 0.0
        %333 = vmatprep.subr.mxu0 0.0
        %334 = vmatpush1.msra.mxu0 0.0
        %335 = vmatprep.subr.mxu0 0.0
        %336 = vmatpush1.msra.mxu0 0.0
        %337 = vmatprep.subr.mxu0 0.0
        %338 = vmatpush1.msra.mxu0 0.0
        %339 = vmatprep.subr.mxu0 0.0
        %340 = vmatpush1.msra.mxu0 0.0
        %341 = vmatprep.subr.mxu0 0.0
        %342 = vmatpush1.msra.mxu0 0.0
        %343 = vmatprep.subr.mxu0 0.0
        %344 = vmatpush1.msra.mxu0 0.0
        %345 = vmatprep.subr.mxu0 0.0
        %346 = vmatpush1.msra.mxu0 0.0
        %347 = vmatprep.subr.mxu0 0.0
        %348 = vmatpush1.msra.mxu0 0.0
        %349 = vmatprep.subr.mxu0 0.0
        %350 = vmatpush1.msra.mxu0 0.0
        %351 = vmatprep.subr.mxu0 0.0
        %352 = vmatpush1.msra.mxu0 0.0
        %353 = vmatprep.mubr.f32.mxu0 0.0
        %354 = vmatmul.mubr.f32.gmra.mrb[0].mxu0 %v264
        %v355 = vpop.f32.mrb[0].mxu0
        %v356 = vadd.f32 %v287, %v355
        %v357 = vpop.f32.mrb[0].mxu0
        %358 = vmatprep.mubr.f32.mxu0 0.0
        %359 = vmatmul.mubr.f32.gmra.mrb[0].mxu0 %v265
        %v360 = vpop.f32.mrb[0].mxu0
        %v361 = vadd.f32 %v287, %v360
        %v362 = vpop.f32.mrb[0].mxu0
        %363 = vdwg.mxu0
        %364 = vst [vmem:[%s217] sm:$0xff] %v356
        %365 = vst [vmem:[%s217 + $0x8] sm:$0xff] %v361
        %s366 = sand.u32 %s137, 1
        %s367 = scalar_lea.sflag [#allocation3], %s366
        %s368 = sand.u32 %s137, 1
        %s369 = smul.addr %s368, 16
        %s370 = scalar_lea.vmem [#allocation2], %s369
        // Predicated region
        $region41: #{bigram_lm_forward.13} parent=39 // pred_check
          %p371 = pneg %p147
        $region42: #{bigram_lm_forward.13} parent=39 // pred_check_branch
          %373 = sbr.rel (%p371) target = $region44
        $region43: #{bigram_lm_forward.13} parent=39 // pred_region
          %s375 = ssub.s32 256, 256
          %376 = vsyncadd %s367, %s375
          %s377 = smul.addr %s19, 2
          %s378 = smul.addr %s377, 128
          %s379 = scalar_lea.hbm %s5, %s378
          %s380 = sshll.u32 %s370, 4
          %s381 = int_to_ptr.vmem [resolvable:$true] %s380
          %386 = dma.vmem_to_hbm [thread:$0]  %s381, 256, %s379, %s367, 128, 128, 8
        $region44: #{bigram_lm_forward.13} parent=39 // pred_fallthru
          _
      $region40: #{bigram_lm_forward.13} parent=5 // pred_fallthru
        _
      %p387 = scmp.le.s32.totalorder 2, %s14
      // Predicated region
      $region45: #{bigram_lm_forward.13} parent=5 // pred_check
        %p388 = pneg %p387
      $region46: #{bigram_lm_forward.13} parent=5 // pred_check_branch
        %390 = sbr.rel (%p388) target = $region48
      $region47: #{bigram_lm_forward.13} parent=5 // pred_region
        %s391 = ssub.s32 %s14, 2
        // Predicated region
        $region49: #{bigram_lm_forward.13} parent=47 // pred_check
          %p392 = pneg %p153
        $region50: #{bigram_lm_forward.13} parent=47 // pred_check_branch
          %394 = sbr.rel (%p392) target = $region52
        $region51: #{bigram_lm_forward.13} parent=47 // pred_region
          %s395 = sand.u32 %s138, 1
          %s396 = scalar_lea.sflag [#allocation3], %s395
          %s397 = sand.u32 %s138, 1
          %s398 = smul.addr %s397, 16
          %s399 = scalar_lea.vmem [#allocation2], %s398
          %400 = dma.done %s396, 256
        $region52: #{bigram_lm_forward.13} parent=47 // pred_fallthru
          _
      $region48: #{bigram_lm_forward.13} parent=5 // pred_fallthru
        _
    $region6: #{bigram_lm_forward.13} parent=1 // loop_footer
      %s18 = sadd.s32 1, %s14
    $region7: #{bigram_lm_forward.13} parent=1 // loop_footer_branch
      %13 = sbr.rel target = $region3
    $region8: #{bigram_lm_forward.13} parent=1 // loop_exit
      _
    %401 = vsyncpa [#allocation3], 1
    %s402 = scalar_lea.sflag [#allocation3], 1
    %403 = vsyncpa %s402, 1

// kernel: bigram_lm_forward.7
$region0: #{bigram_lm_forward.7}
  #allocation0 [shape = 'u32[]', space=smem, size = 0x4, offset = 0x4, fixed_abs, tag = 'smem constant byte address 0x4 - core index']
  #allocation1 [shape = 'u32[144,128]{1,0:T(1,128)}', space=vmem, size = 0x12000, scoped, tag = 'internal scratch']
  %s0 = inlined_call_operand.vmem [shape: f32[2,16,128], index: 0, kind: input, shape index: {}]
  %s1 = inlined_call_operand.vmem [shape: f32[1,128], index: 1, kind: input, shape index: {}]
  %s2 = inlined_call_operand.vmem [shape: f32[1,128], index: 2, kind: input, shape index: {}]
  %s3 = inlined_call_operand.hbm [shape: f32[128,384], index: 3, kind: input, shape index: {}]
  %s4 = inlined_call_operand.vmem [shape: f32[128,128], index: 4, kind: input, shape index: {}]
  %s5 = inlined_call_operand.vmem [shape: f32[1,128], index: 5, kind: input, shape index: {}]
  %s6 = inlined_call_operand.hbm [shape: f32[1,128], index: 6, kind: input, shape index: {}]
  %s7 = inlined_call_operand.vmem [shape: f32[1,128], index: 7, kind: input, shape index: {}]
  %s8 = inlined_call_operand.vmem [shape: f32[128,512], index: 8, kind: input, shape index: {}]
  %s9 = inlined_call_operand.vmem [shape: f32[1,512], index: 9, kind: input, shape index: {}]
  %s10 = inlined_call_operand.hbm [shape: f32[512,128], index: 10, kind: input, shape index: {}]
  %s11 = inlined_call_operand.vmem [shape: f32[1,128], index: 11, kind: input, shape index: {}]
  %s12 = inlined_call_operand.vmem [shape: f32[2,16,128], index: 12, kind: output, shape index: {}]
  %s13 = sld [smem:[#allocation0]]
  $region93: #{bigram_lm_forward.7} parent=0
    _
  %s15 = ssub.s32 1, %s13
  %s16 = scalar_select 0, %s15, %s13
  $region1: #{bigram_lm_forward.7} parent=0
    #allocation2 [shape = 'u8[196608]{0}', space=vmem, size = 0x30000, scoped, tag = 'input window, operand 3, single buffered']
    #allocation3 [shape = 's32[2]{0}', space=sflag, size = 0x8, scoped, tag = 'scoped memory for bigram_lm_forward.7']
    #allocation4 [shape = 'u8[512]{0}', space=vmem, size = 0x400, scoped, tag = 'input window, operand 6, single buffered']
    #allocation5 [shape = 's32[1]{0}', space=sflag, size = 0x4, scoped, tag = 'scoped memory for bigram_lm_forward.7']
    #allocation6 [shape = 'u8[262144]{0}', space=vmem, size = 0x40000, scoped, tag = 'input window, operand 10, single buffered']
    %17 = vsyncpa [#allocation3], 0
    %18 = vsyncpa [#allocation5], 0
    loop: start=0, step=1, limit=4
    $region2: #{bigram_lm_forward.7} parent=1 // loop_pre_header
      _
    $region3: #{bigram_lm_forward.7} parent=1 // loop_header
      %s20 = sphi 0, %s24
      %p21 = scmp.ge.s32.totalorder %s20, 4
      %s30 = sphi 0, %s32
      %s33 = sphi 0, %s30
      %s34 = sphi 0, %s33
      %s50 = sphi 0, %s34
      %s54 = sphi 0, %s54
      %s56 = sphi 0, %s54
      %s57 = sphi 0, %s56
      %s71 = sphi 0, %s57
      %s75 = sphi 0, %s75
      %s77 = sphi 0, %s75
      %s78 = sphi 0, %s77
      %s92 = sphi 0, %s78
      %s96 = sphi 0, %s96
      %s98 = sphi 0, %s96
      %s99 = sphi 0, %s98
      %s113 = sphi 0, %s99
      %s117 = sphi 0, %s117
      %s119 = sphi 0, %s117
      %s120 = sphi 0, %s119
      %s134 = sphi 0, %s120
      %s138 = sphi 0, %s138
      %s140 = sphi 0, %s138
      %s141 = sphi 0, %s140
      %s155 = sphi 0, %s141
      %s159 = sphi 0, %s159
      %s161 = sphi 0, %s159
      %s162 = sphi 0, %s161
      %s176 = sphi 0, %s162
      %s180 = sphi 0, %s180
      %s182 = sphi 0, %s180
      %s183 = sphi 0, %s182
      %s197 = sphi 0, %s183
      %s201 = sphi 0, %s201
      %s203 = sphi 0, %s201
      %s204 = sphi 0, %s203
      %s218 = sphi 0, %s204
      %s222 = sphi 0, %s222
      %s224 = sphi 0, %s222
      %s225 = sphi 0, %s224
      %s239 = sphi 0, %s225
      %s243 = sphi 0, %s243
      %s245 = sphi 0, %s243
      %s246 = sphi 0, %s245
      %s260 = sphi 0, %s246
      %s264 = sphi 0, %s264
      %s266 = sphi 0, %s264
      %s267 = sphi 0, %s266
      %s281 = sphi 0, %s267
      %s287 = sphi 0, %s289
      %s290 = sphi 0, %s287
      %s291 = sphi 0, %s290
      %s307 = sphi 0, %s291
    $region4: #{bigram_lm_forward.7} parent=1 // loop_header_branch
      %23 = sbr.rel (%p21) target = $region8
    $region5: #{bigram_lm_forward.7} parent=1 // loop_body
      %s25 = ssub.s32 %s20, 1
      %s26 = ssub.s32 %s20, 2
      %s27 = sadd.s32 %s20, 1
      %s28 = ssub.s32 %s20, %s27
      %p29 = scmp.eq.s32.totalorder %s28, 0
      %s31 = sadd.s32 %s30, 1
      %s32 = scalar_select %p29, %s30, %s31
      %p35 = pneg %p29
      %p36 = scmp.eq.s32.totalorder %s20, 1
      %p37 = por %p35, %p36
      %p38 = scmp.ne.s32.totalorder %s30, %s33
      %p39 = scmp.eq.s32.totalorder %s20, 0
      %p40 = por %p38, %p39
      %p41 = scmp.ne.s32.totalorder %s30, %s33
      %p42 = scmp.eq.s32.totalorder %s25, 1
      %p43 = por %p41, %p42
      %p44 = scmp.ne.s32.totalorder %s33, %s34
      %p45 = scmp.eq.s32.totalorder %s25, 0
      %p46 = por %p44, %p45
      %p47 = scmp.ne.s32.totalorder %s33, %s34
      %p48 = scmp.eq.s32.totalorder %s26, 1
      %p49 = por %p47, %p48
      %p51 = scmp.ne.s32.totalorder %s34, %s50
      %p52 = scmp.eq.s32.totalorder %s26, 0
      %p53 = por %p51, %p52
      %s55 = sadd.s32 %s54, 1
      %p58 = scmp.eq.s32.totalorder %s20, 1
      %p59 = scmp.ne.s32.totalorder %s54, %s56
      %p60 = scmp.eq.s32.totalorder %s20, 0
      %p61 = por %p59, %p60
      %p62 = scmp.ne.s32.totalorder %s54, %s56
      %p63 = scmp.eq.s32.totalorder %s25, 1
      %p64 = por %p62, %p63
      %p65 = scmp.ne.s32.totalorder %s56, %s57
      %p66 = scmp.eq.s32.totalorder %s25, 0
      %p67 = por %p65, %p66
      %p68 = scmp.ne.s32.totalorder %s56, %s57
      %p69 = scmp.eq.s32.totalorder %s26, 1
      %p70 = por %p68, %p69
      %p72 = scmp.ne.s32.totalorder %s57, %s71
      %p73 = scmp.eq.s32.totalorder %s26, 0
      %p74 = por %p72, %p73
      %s76 = sadd.s32 %s75, 1
      %p79 = scmp.eq.s32.totalorder %s20, 1
      %p80 = scmp.ne.s32.totalorder %s75, %s77
      %p81 = scmp.eq.s32.totalorder %s20, 0
      %p82 = por %p80, %p81
      %p83 = scmp.ne.s32.totalorder %s75, %s77
      %p84 = scmp.eq.s32.totalorder %s25, 1
      %p85 = por %p83, %p84
      %p86 = scmp.ne.s32.totalorder %s77, %s78
      %p87 = scmp.eq.s32.totalorder %s25, 0
      %p88 = por %p86, %p87
      %p89 = scmp.ne.s32.totalorder %s77, %s78
      %p90 = scmp.eq.s32.totalorder %s26, 1
      %p91 = por %p89, %p90
      %p93 = scmp.ne.s32.totalorder %s78, %s92
      %p94 = scmp.eq.s32.totalorder %s26, 0
      %p95 = por %p93, %p94
      %s97 = sadd.s32 %s96, 1
      %p100 = scmp.eq.s32.totalorder %s20, 1
      %p101 = scmp.ne.s32.totalorder %s96, %s98
      %p102 = scmp.eq.s32.totalorder %s20, 0
      %p103 = por %p101, %p102
      %p104 = scmp.ne.s32.totalorder %s96, %s98
      %p105 = scmp.eq.s32.totalorder %s25, 1
      %p106 = por %p104, %p105
      %p107 = scmp.ne.s32.totalorder %s98, %s99
      %p108 = scmp.eq.s32.totalorder %s25, 0
      %p109 = por %p107, %p108
      %p110 = scmp.ne.s32.totalorder %s98, %s99
      %p111 = scmp.eq.s32.totalorder %s26, 1
      %p112 = por %p110, %p111
      %p114 = scmp.ne.s32.totalorder %s99, %s113
      %p115 = scmp.eq.s32.totalorder %s26, 0
      %p116 = por %p114, %p115
      %s118 = sadd.s32 %s117, 1
      %p121 = scmp.eq.s32.totalorder %s20, 1
      %p122 = scmp.ne.s32.totalorder %s117, %s119
      %p123 = scmp.eq.s32.totalorder %s20, 0
      %p124 = por %p122, %p123
      %p125 = scmp.ne.s32.totalorder %s117, %s119
      %p126 = scmp.eq.s32.totalorder %s25, 1
      %p127 = por %p125, %p126
      %p128 = scmp.ne.s32.totalorder %s119, %s120
      %p129 = scmp.eq.s32.totalorder %s25, 0
      %p130 = por %p128, %p129
      %p131 = scmp.ne.s32.totalorder %s119, %s120
      %p132 = scmp.eq.s32.totalorder %s26, 1
      %p133 = por %p131, %p132
      %p135 = scmp.ne.s32.totalorder %s120, %s134
      %p136 = scmp.eq.s32.totalorder %s26, 0
      %p137 = por %p135, %p136
      %s139 = sadd.s32 %s138, 1
      %p142 = scmp.eq.s32.totalorder %s20, 1
      %p143 = scmp.ne.s32.totalorder %s138, %s140
      %p144 = scmp.eq.s32.totalorder %s20, 0
      %p145 = por %p143, %p144
      %p146 = scmp.ne.s32.totalorder %s138, %s140
      %p147 = scmp.eq.s32.totalorder %s25, 1
      %p148 = por %p146, %p147
      %p149 = scmp.ne.s32.totalorder %s140, %s141
      %p150 = scmp.eq.s32.totalorder %s25, 0
      %p151 = por %p149, %p150
      %p152 = scmp.ne.s32.totalorder %s140, %s141
      %p153 = scmp.eq.s32.totalorder %s26, 1
      %p154 = por %p152, %p153
      %p156 = scmp.ne.s32.totalorder %s141, %s155
      %p157 = scmp.eq.s32.totalorder %s26, 0
      %p158 = por %p156, %p157
      %s160 = sadd.s32 %s159, 1
      %p163 = scmp.eq.s32.totalorder %s20, 1
      %p164 = scmp.ne.s32.totalorder %s159, %s161
      %p165 = scmp.eq.s32.totalorder %s20, 0
      %p166 = por %p164, %p165
      %p167 = scmp.ne.s32.totalorder %s159, %s161
      %p168 = scmp.eq.s32.totalorder %s25, 1
      %p169 = por %p167, %p168
      %p170 = scmp.ne.s32.totalorder %s161, %s162
      %p171 = scmp.eq.s32.totalorder %s25, 0
      %p172 = por %p170, %p171
      %p173 = scmp.ne.s32.totalorder %s161, %s162
      %p174 = scmp.eq.s32.totalorder %s26, 1
      %p175 = por %p173, %p174
      %p177 = scmp.ne.s32.totalorder %s162, %s176
      %p178 = scmp.eq.s32.totalorder %s26, 0
      %p179 = por %p177, %p178
      %s181 = sadd.s32 %s180, 1
      %p184 = scmp.eq.s32.totalorder %s20, 1
      %p185 = scmp.ne.s32.totalorder %s180, %s182
      %p186 = scmp.eq.s32.totalorder %s20, 0
      %p187 = por %p185, %p186
      %p188 = scmp.ne.s32.totalorder %s180, %s182
      %p189 = scmp.eq.s32.totalorder %s25, 1
      %p190 = por %p188, %p189
      %p191 = scmp.ne.s32.totalorder %s182, %s183
      %p192 = scmp.eq.s32.totalorder %s25, 0
      %p193 = por %p191, %p192
      %p194 = scmp.ne.s32.totalorder %s182, %s183
      %p195 = scmp.eq.s32.totalorder %s26, 1
      %p196 = por %p194, %p195
      %p198 = scmp.ne.s32.totalorder %s183, %s197
      %p199 = scmp.eq.s32.totalorder %s26, 0
      %p200 = por %p198, %p199
      %s202 = sadd.s32 %s201, 1
      %p205 = scmp.eq.s32.totalorder %s20, 1
      %p206 = scmp.ne.s32.totalorder %s201, %s203
      %p207 = scmp.eq.s32.totalorder %s20, 0
      %p208 = por %p206, %p207
      %p209 = scmp.ne.s32.totalorder %s201, %s203
      %p210 = scmp.eq.s32.totalorder %s25, 1
      %p211 = por %p209, %p210
      %p212 = scmp.ne.s32.totalorder %s203, %s204
      %p213 = scmp.eq.s32.totalorder %s25, 0
      %p214 = por %p212, %p213
      %p215 = scmp.ne.s32.totalorder %s203, %s204
      %p216 = scmp.eq.s32.totalorder %s26, 1
      %p217 = por %p215, %p216
      %p219 = scmp.ne.s32.totalorder %s204, %s218
      %p220 = scmp.eq.s32.totalorder %s26, 0
      %p221 = por %p219, %p220
      %s223 = sadd.s32 %s222, 1
      %p226 = scmp.eq.s32.totalorder %s20, 1
      %p227 = scmp.ne.s32.totalorder %s222, %s224
      %p228 = scmp.eq.s32.totalorder %s20, 0
      %p229 = por %p227, %p228
      %p230 = scmp.ne.s32.totalorder %s222, %s224
      %p231 = scmp.eq.s32.totalorder %s25, 1
      %p232 = por %p230, %p231
      %p233 = scmp.ne.s32.totalorder %s224, %s225
      %p234 = scmp.eq.s32.totalorder %s25, 0
      %p235 = por %p233, %p234
      %p236 = scmp.ne.s32.totalorder %s224, %s225
      %p237 = scmp.eq.s32.totalorder %s26, 1
      %p238 = por %p236, %p237
      %p240 = scmp.ne.s32.totalorder %s225, %s239
      %p241 = scmp.eq.s32.totalorder %s26, 0
      %p242 = por %p240, %p241
      %s244 = sadd.s32 %s243, 1
      %p247 = scmp.eq.s32.totalorder %s20, 1
      %p248 = scmp.ne.s32.totalorder %s243, %s245
      %p249 = scmp.eq.s32.totalorder %s20, 0
      %p250 = por %p248, %p249
      %p251 = scmp.ne.s32.totalorder %s243, %s245
      %p252 = scmp.eq.s32.totalorder %s25, 1
      %p253 = por %p251, %p252
      %p254 = scmp.ne.s32.totalorder %s245, %s246
      %p255 = scmp.eq.s32.totalorder %s25, 0
      %p256 = por %p254, %p255
      %p257 = scmp.ne.s32.totalorder %s245, %s246
      %p258 = scmp.eq.s32.totalorder %s26, 1
      %p259 = por %p257, %p258
      %p261 = scmp.ne.s32.totalorder %s246, %s260
      %p262 = scmp.eq.s32.totalorder %s26, 0
      %p263 = por %p261, %p262
      %s265 = sadd.s32 %s264, 1
      %p268 = scmp.eq.s32.totalorder %s20, 1
      %p269 = scmp.ne.s32.totalorder %s264, %s266
      %p270 = scmp.eq.s32.totalorder %s20, 0
      %p271 = por %p269, %p270
      %p272 = scmp.ne.s32.totalorder %s264, %s266
      %p273 = scmp.eq.s32.totalorder %s25, 1
      %p274 = por %p272, %p273
      %p275 = scmp.ne.s32.totalorder %s266, %s267
      %p276 = scmp.eq.s32.totalorder %s25, 0
      %p277 = por %p275, %p276
      %p278 = scmp.ne.s32.totalorder %s266, %s267
      %p279 = scmp.eq.s32.totalorder %s26, 1
      %p280 = por %p278, %p279
      %p282 = scmp.ne.s32.totalorder %s267, %s281
      %p283 = scmp.eq.s32.totalorder %s26, 0
      %p284 = por %p282, %p283
      %s285 = ssub.s32 %s20, %s27
      %p286 = scmp.eq.s32.totalorder %s285, 0
      %s288 = sadd.s32 %s287, 1
      %s289 = scalar_select %p286, %s287, %s288
      %p292 = pneg %p286
      %p293 = scmp.eq.s32.totalorder %s20, 1
      %p294 = por %p292, %p293
      %p295 = scmp.ne.s32.totalorder %s287, %s290
      %p296 = scmp.eq.s32.totalorder %s20, 0
      %p297 = por %p295, %p296
      %p298 = scmp.ne.s32.totalorder %s287, %s290
      %p299 = scmp.eq.s32.totalorder %s25, 1
      %p300 = por %p298, %p299
      %p301 = scmp.ne.s32.totalorder %s290, %s291
      %p302 = scmp.eq.s32.totalorder %s25, 0
      %p303 = por %p301, %p302
      %p304 = scmp.ne.s32.totalorder %s290, %s291
      %p305 = scmp.eq.s32.totalorder %s26, 1
      %p306 = por %p304, %p305
      %p308 = scmp.ne.s32.totalorder %s291, %s307
      %p309 = scmp.eq.s32.totalorder %s26, 0
      %p310 = por %p308, %p309
      %p311 = scmp.le.s32.totalorder 1, %s20
      %p312 = scmp.lt.s32.totalorder %s20, 3
      %p313 = pnand %p311, %p312
      %p314 = pneg %p313
      // Predicated region
      $region9: #{bigram_lm_forward.7} parent=5 // pred_check
        _
      $region10: #{bigram_lm_forward.7} parent=5 // pred_check_branch
        %316 = sbr.rel (%p313) target = $region12
      $region11: #{bigram_lm_forward.7} parent=5 // pred_region
        %s317 = ssub.s32 %s20, 1
        // Predicated region
        $region13: #{bigram_lm_forward.7} parent=11 // pred_check
          %p318 = pneg %p67
        $region14: #{bigram_lm_forward.7} parent=11 // pred_check_branch
          %320 = sbr.rel (%p318) target = $region16
        $region15: #{bigram_lm_forward.7} parent=11 // pred_region
          _
        $region16: #{bigram_lm_forward.7} parent=11 // pred_fallthru
          _
        // Predicated region
        $region17: #{bigram_lm_forward.7} parent=11 // pred_check
          %p321 = pneg %p88
        $region18: #{bigram_lm_forward.7} parent=11 // pred_check_branch
          %323 = sbr.rel (%p321) target = $region20
        $region19: #{bigram_lm_forward.7} parent=11 // pred_region
          _
        $region20: #{bigram_lm_forward.7} parent=11 // pred_fallthru
          _
        // Predicated region
        $region21: #{bigram_lm_forward.7} parent=11 // pred_check
          %p324 = pneg %p109
        $region22: #{bigram_lm_forward.7} parent=11 // pred_check_branch
          %326 = sbr.rel (%p324) target = $region24
        $region23: #{bigram_lm_forward.7} parent=11 // pred_region
          %s328 = ssub.s32 6144, 6144
          %329 = vsyncadd [#allocation3], %s328
          %s330 = sshll.u32 [#allocation2], 4
          %s331 = int_to_ptr.vmem [resolvable:$true] %s330
          %336 = dma.hbm_to_vmem [thread:$0]  %s3, 6144, %s331, [#allocation3], 384, 384, 24
        $region24: #{bigram_lm_forward.7} parent=11 // pred_fallthru
          _
        // Predicated region
        $region25: #{bigram_lm_forward.7} parent=11 // pred_check
          %p337 = pneg %p130
        $region26: #{bigram_lm_forward.7} parent=11 // pred_check_branch
          %339 = sbr.rel (%p337) target = $region28
        $region27: #{bigram_lm_forward.7} parent=11 // pred_region
          _
        $region28: #{bigram_lm_forward.7} parent=11 // pred_fallthru
          _
        // Predicated region
        $region29: #{bigram_lm_forward.7} parent=11 // pred_check
          %p340 = pneg %p151
        $region30: #{bigram_lm_forward.7} parent=11 // pred_check_branch
          %342 = sbr.rel (%p340) target = $region32
        $region31: #{bigram_lm_forward.7} parent=11 // pred_region
          _
        $region32: #{bigram_lm_forward.7} parent=11 // pred_fallthru
          _
        // Predicated region
        $region33: #{bigram_lm_forward.7} parent=11 // pred_check
          %p343 = pneg %p172
        $region34: #{bigram_lm_forward.7} parent=11 // pred_check_branch
          %345 = sbr.rel (%p343) target = $region36
        $region35: #{bigram_lm_forward.7} parent=11 // pred_region
          %s347 = ssub.s32 16, 16
          %348 = vsyncadd [#allocation5], %s347
          %s350 = sshll.u32 [#allocation4], 4
          %s351 = int_to_ptr.vmem [resolvable:$true] %s350
          %353 = dma.hbm_to_vmem [thread:$0]  %s6, 16, %s351, [#allocation5]
        $region36: #{bigram_lm_forward.7} parent=11 // pred_fallthru
          _
        // Predicated region
        $region37: #{bigram_lm_forward.7} parent=11 // pred_check
          %p354 = pneg %p193
        $region38: #{bigram_lm_forward.7} parent=11 // pred_check_branch
          %356 = sbr.rel (%p354) target = $region40
        $region39: #{bigram_lm_forward.7} parent=11 // pred_region
          _
        $region40: #{bigram_lm_forward.7} parent=11 // pred_fallthru
          _
        // Predicated region
        $region41: #{bigram_lm_forward.7} parent=11 // pred_check
          %p357 = pneg %p214
        $region42: #{bigram_lm_forward.7} parent=11 // pred_check_branch
          %359 = sbr.rel (%p357) target = $region44
        $region43: #{bigram_lm_forward.7} parent=11 // pred_region
          _
        $region44: #{bigram_lm_forward.7} parent=11 // pred_fallthru
          _
        // Predicated region
        $region45: #{bigram_lm_forward.7} parent=11 // pred_check
          %p360 = pneg %p235
        $region46: #{bigram_lm_forward.7} parent=11 // pred_check_branch
          %362 = sbr.rel (%p360) target = $region48
        $region47: #{bigram_lm_forward.7} parent=11 // pred_region
          _
        $region48: #{bigram_lm_forward.7} parent=11 // pred_fallthru
          _
        // Predicated region
        $region49: #{bigram_lm_forward.7} parent=11 // pred_check
          %p363 = pneg %p256
        $region50: #{bigram_lm_forward.7} parent=11 // pred_check_branch
          %365 = sbr.rel (%p363) target = $region52
        $region51: #{bigram_lm_forward.7} parent=11 // pred_region
          %s367 = ssub.s32 8192, 8192
          %368 = vsyncadd [#allocation5], %s367
          %s369 = sshll.u32 [#allocation6], 4
          %s370 = int_to_ptr.vmem [resolvable:$true] %s369
          %375 = dma.hbm_to_vmem [thread:$0]  %s10, 8192, %s370, [#allocation5], 128, 128, 8
        $region52: #{bigram_lm_forward.7} parent=11 // pred_fallthru
          _
        // Predicated region
        $region53: #{bigram_lm_forward.7} parent=11 // pred_check
          %p376 = pneg %p277
        $region54: #{bigram_lm_forward.7} parent=11 // pred_check_branch
          %378 = sbr.rel (%p376) target = $region56
        $region55: #{bigram_lm_forward.7} parent=11 // pred_region
          _
        $region56: #{bigram_lm_forward.7} parent=11 // pred_fallthru
          _
      $region12: #{bigram_lm_forward.7} parent=5 // pred_fallthru
        _
      %p379 = scmp.lt.s32.totalorder %s20, 2
      // Predicated region
      $region57: #{bigram_lm_forward.7} parent=5 // pred_check
        %p380 = pneg %p379
      $region58: #{bigram_lm_forward.7} parent=5 // pred_check_branch
        %382 = sbr.rel (%p380) target = $region60
      $region59: #{bigram_lm_forward.7} parent=5 // pred_region
        // Predicated region
        $region61: #{bigram_lm_forward.7} parent=59 // pred_check
          %p383 = pneg %p40
        $region62: #{bigram_lm_forward.7} parent=59 // pred_check_branch
          %385 = sbr.rel (%p383) target = $region64
        $region63: #{bigram_lm_forward.7} parent=59 // pred_region
          %p386 = scmp.lt.s32.totalorder %s20, 1
          %s387 = scalar_select %p386, %s20, 1
          %s388 = smul.addr %s387, 2
          %s389 = smul.addr %s388, 8
          %s390 = scalar_lea.vmem %s0, %s389
        $region64: #{bigram_lm_forward.7} parent=59 // pred_fallthru
          _
      $region60: #{bigram_lm_forward.7} parent=5 // pred_fallthru
        _
      %p391 = scmp.le.s32.totalorder 1, %s20
      %p392 = scmp.lt.s32.totalorder %s20, 3
      %p393 = pnand %p391, %p392
      %p394 = pneg %p393
      // Predicated region
      $region65: #{bigram_lm_forward.7} parent=5 // pred_check
        _
      $region66: #{bigram_lm_forward.7} parent=5 // pred_check_branch
        %396 = sbr.rel (%p393) target = $region68
      $region67: #{bigram_lm_forward.7} parent=5 // pred_region
        %s397 = ssub.s32 %s20, 1
        // Predicated region
        $region69: #{bigram_lm_forward.7} parent=67 // pred_check
          %p398 = pneg %p109
        $region70: #{bigram_lm_forward.7} parent=67 // pred_check_branch
          %400 = sbr.rel (%p398) target = $region72
        $region71: #{bigram_lm_forward.7} parent=67 // pred_region
          %401 = dma.done [#allocation3], 6144
        $region72: #{bigram_lm_forward.7} parent=67 // pred_fallthru
          _
        // Predicated region
        $region73: #{bigram_lm_forward.7} parent=67 // pred_check
          %p402 = pneg %p172
        $region74: #{bigram_lm_forward.7} parent=67 // pred_check_branch
          %404 = sbr.rel (%p402) target = $region76
        $region75: #{bigram_lm_forward.7} parent=67 // pred_region
          %405 = dma.done [#allocation5], 16
        $region76: #{bigram_lm_forward.7} parent=67 // pred_fallthru
          _
        // Predicated region
        $region77: #{bigram_lm_forward.7} parent=67 // pred_check
          %p406 = pneg %p256
        $region78: #{bigram_lm_forward.7} parent=67 // pred_check_branch
          %408 = sbr.rel (%p406) target = $region80
        $region79: #{bigram_lm_forward.7} parent=67 // pred_region
          %409 = dma.done [#allocation5], 8192
        $region80: #{bigram_lm_forward.7} parent=67 // pred_fallthru
          _
        %p410 = scmp.lt.s32.totalorder %s25, 1
        %s411 = scalar_select %p410, %s25, 1
        %s412 = smul.addr %s411, 2
        %s413 = smul.addr %s412, 8
        %s414 = scalar_lea.vmem %s0, %s413
        %p415 = pneg %p46
        %p416 = pneg %p43
        %p417 = pneg %p67
        %p418 = pneg %p64
        %p419 = pneg %p88
        %p420 = pneg %p85
        %p421 = pneg %p109
        %p422 = pneg %p106
        %p423 = pneg %p130
        %p424 = pneg %p127
        %p425 = pneg %p151
        %p426 = pneg %p148
        %p427 = pneg %p172
        %p428 = pneg %p169
        %p429 = pneg %p193
        %p430 = pneg %p190
        %p431 = pneg %p214
        %p432 = pneg %p211
        %p433 = pneg %p235
        %p434 = pneg %p232
        %p435 = pneg %p256
        %p436 = pneg %p253
        %p437 = pneg %p277
        %p438 = pneg %p274
        %p439 = pneg %p303
        %p440 = pneg %p300
        %p441 = scmp.lt.s32.totalorder %s25, 1
        %s442 = scalar_select %p441, %s25, 1
        %s443 = smul.addr %s442, 2
        %s444 = smul.addr %s443, 8
        %s445 = scalar_lea.vmem %s12, %s444
        %p446 = scmp.lt.s32.totalorder %s25, 1
        %s447 = scalar_select %p446, %s25, 1
        %s448 = smul.addr %s447, 2
        %s449 = smul.addr %s448, 8
        %s450 = scalar_lea.vmem %s0, %s449
        %p451 = scmp.lt.s32.totalorder %s25, 1
        %s452 = scalar_select %p451, %s25, 1
        %s453 = smul.addr %s452, 2
        %s454 = smul.addr %s453, 8
        %s455 = scalar_lea.vmem %s12, %s454
        %v456 = vld [vmem:[%s450] sm:$0xff]
        %v457 = vld [vmem:[%s450 + $0x8] sm:$0xff]
        %v458 = vld [vmem:[%s1] sm:$0x1]
        %v459 = vld [vmem:[%s2] sm:$0x1]
        %460 = vadd.xlane.f32.xlu0 %v456
        %v461 = vpop.xlane.xlu0 %460
        %462 = vadd.xlane.f32.xlu0 %v457
        %v463 = vpop.xlane.xlu0 %462
        %v464 = vrcp.pop 128.0
        %v465 = vmul.f32 %v461, %v464
        %v466 = vmul.f32 %v463, %v464
        %v467 = vsub.f32 %v456, %v465
        %v468 = vsub.f32 %v457, %v466
        %v469 = vmul.f32 %v467, %v467
        %v470 = vmul.f32 %v468, %v468
        %471 = vadd.xlane.f32.xlu0 %v469
        %v472 = vpop.xlane.xlu0 %471
        %473 = vadd.xlane.f32.xlu0 %v470
        %v474 = vpop.xlane.xlu0 %473
        %v475 = vmul.f32 %v472, %v464
        %v476 = vmul.f32 %v474, %v464
        %v477 = vadd.f32 %v475, 1e-05
        %v478 = vadd.f32 %v476, 1e-05
        %v479 = vrsqrt.pop %v477
        %v480 = vrsqrt.pop %v478
        %v481 = vmul.f32 %v467, %v479
        %v482 = vmul.f32 %v468, %v480
        %v484 = vlaneseq
        %v485 = vshrl.u32 %v484, 7
        %v486 = vsub.s32 0, %v485
        %v487 = vrot.slane %v458, %v486
        %v489 = vmul.f32 %v481, %v487
        %v490 = vmul.f32 %v482, %v487
        %v492 = vlaneseq
        %v493 = vshrl.u32 %v492, 7
        %v494 = vsub.s32 0, %v493
        %v495 = vrot.slane %v459, %v494
        %v497 = vadd.f32 %v489, %v495
        %v498 = vadd.f32 %v490, %v495
        %v499 = vld [vmem:[#allocation2] sm:$0xff]
        %v500 = vld [vmem:[#allocation2 + $0x8] sm:$0xff]
        %v501 = vld [vmem:[#allocation2 + $0x10] sm:$0xff]
        %v502 = vld [vmem:[#allocation2 + $0x18] sm:$0xff]
        %v503 = vld [vmem:[#allocation2 + $0x20] sm:$0xff]
        %v504 = vld [vmem:[#allocation2 + $0x28] sm:$0xff]
        %v505 = vld [vmem:[#allocation2 + $0x30] sm:$0xff]
        %v506 = vld [vmem:[#allocation2 + $0x38] sm:$0xff]
        %v507 = vld [vmem:[#allocation2 + $0x40] sm:$0xff]
        %v508 = vld [vmem:[#allocation2 + $0x48] sm:$0xff]
        %v509 = vld [vmem:[#allocation2 + $0x50] sm:$0xff]
        %v510 = vld [vmem:[#allocation2 + $0x58] sm:$0xff]
        %v511 = vld [vmem:[#allocation2 + $0x60] sm:$0xff]
        %v512 = vld [vmem:[#allocation2 + $0x68] sm:$0xff]
        %v513 = vld [vmem:[#allocation2 + $0x70] sm:$0xff]
        %v514 = vld [vmem:[#allocation2 + $0x78] sm:$0xff]
        %v515 = vld [vmem:[#allocation2 + $0x80] sm:$0xff]
        %v516 = vld [vmem:[#allocation2 + $0x88] sm:$0xff]
        %v517 = vld [vmem:[#allocation2 + $0x90] sm:$0xff]
        %v518 = vld [vmem:[#allocation2 + $0x98] sm:$0xff]
        %v519 = vld [vmem:[#allocation2 + $0xa0] sm:$0xff]
        %v520 = vld [vmem:[#allocation2 + $0xa8] sm:$0xff]
        %v521 = vld [vmem:[#allocation2 + $0xb0] sm:$0xff]
        %v522 = vld [vmem:[#allocation2 + $0xb8] sm:$0xff]
        %v523 = vld [vmem:[#allocation2 + $0xc0] sm:$0xff]
        %v524 = vld [vmem:[#allocation2 + $0xc8] sm:$0xff]
        %v525 = vld [vmem:[#allocation2 + $0xd0] sm:$0xff]
        %v526 = vld [vmem:[#allocation2 + $0xd8] sm:$0xff]
        %v527 = vld [vmem:[#allocation2 + $0xe0] sm:$0xff]
        %v528 = vld [vmem:[#allocation2 + $0xe8] sm:$0xff]
        %v529 = vld [vmem:[#allocation2 + $0xf0] sm:$0xff]
        %v530 = vld [vmem:[#allocation2 + $0xf8] sm:$0xff]
        %v531 = vld [vmem:[#allocation2 + $0x100] sm:$0xff]
        %v532 = vld [vmem:[#allocation2 + $0x108] sm:$0xff]
        %v533 = vld [vmem:[#allocation2 + $0x110] sm:$0xff]
        %v534 = vld [vmem:[#allocation2 + $0x118] sm:$0xff]
        %v535 = vld [vmem:[#allocation2 + $0x120] sm:$0xff]
        %v536 = vld [vmem:[#allocation2 + $0x128] sm:$0xff]
        %v537 = vld [vmem:[#allocation2 + $0x130] sm:$0xff]
        %v538 = vld [vmem:[#allocation2 + $0x138] sm:$0xff]
        %v539 = vld [vmem:[#allocation2 + $0x140] sm:$0xff]
        %v540 = vld [vmem:[#allocation2 + $0x148] sm:$0xff]
        %v541 = vld [vmem:[#allocation2 + $0x150] sm:$0xff]
        %v542 = vld [vmem:[#allocation2 + $0x158] sm:$0xff]
        %v543 = vld [vmem:[#allocation2 + $0x160] sm:$0xff]
        %v544 = vld [vmem:[#allocation2 + $0x168] sm:$0xff]
        %v545 = vld [vmem:[#allocation2 + $0x170] sm:$0xff]
        %v546 = vld [vmem:[#allocation2 + $0x178] sm:$0xff]
        %547 = vmatprep.subr.mxu0 %v500
        %548 = vmatpush1.msra.mxu0 %v499
        %549 = vmatprep.subr.mxu0 %v503
        %550 = vmatpush1.msra.mxu0 %v502
        %551 = vmatprep.subr.mxu0 %v506
        %552 = vmatpush1.msra.mxu0 %v505
        %553 = vmatprep.subr.mxu0 %v509
        %554 = vmatpush1.msra.mxu0 %v508
        %555 = vmatprep.subr.mxu0 %v512
        %556 = vmatpush1.msra.mxu0 %v511
        %557 = vmatprep.subr.mxu0 %v515
        %558 = vmatpush1.msra.mxu0 %v514
        %559 = vmatprep.subr.mxu0 %v518
        %560 = vmatpush1.msra.mxu0 %v517
        %561 = vmatprep.subr.mxu0 %v521
        %562 = vmatpush1.msra.mxu0 %v520
        %563 = vmatprep.subr.mxu0 %v524
        %564 = vmatpush1.msra.mxu0 %v523
        %565 = vmatprep.subr.mxu0 %v527
        %566 = vmatpush1.msra.mxu0 %v526
        %567 = vmatprep.subr.mxu0 %v530
        %568 = vmatpush1.msra.mxu0 %v529
        %569 = vmatprep.subr.mxu0 %v533
        %570 = vmatpush1.msra.mxu0 %v532
        %571 = vmatprep.subr.mxu0 %v536
        %572 = vmatpush1.msra.mxu0 %v535
        %573 = vmatprep.subr.mxu0 %v539
        %574 = vmatpush1.msra.mxu0 %v538
        %575 = vmatprep.subr.mxu0 %v542
        %576 = vmatpush1.msra.mxu0 %v541
        %577 = vmatprep.subr.mxu0 %v545
        %578 = vmatpush1.msra.mxu0 %v544
        %579 = vmatprep.subr.mxu0 0.0
        %580 = vmatpush1.msra.mxu0 0.0
        %581 = vmatprep.subr.mxu0 0.0
        %582 = vmatpush1.msra.mxu0 0.0
        %583 = vmatprep.subr.mxu0 0.0
        %584 = vmatpush1.msra.mxu0 0.0
        %585 = vmatprep.subr.mxu0 0.0
        %586 = vmatpush1.msra.mxu0 0.0
        %587 = vmatprep.subr.mxu0 0.0
        %588 = vmatpush1.msra.mxu0 0.0
        %589 = vmatprep.subr.mxu0 0.0
        %590 = vmatpush1.msra.mxu0 0.0
        %591 = vmatprep.subr.mxu0 0.0
        %592 = vmatpush1.msra.mxu0 0.0
        %593 = vmatprep.subr.mxu0 0.0
        %594 = vmatpush1.msra.mxu0 0.0
        %595 = vmatprep.subr.mxu0 0.0
        %596 = vmatpush1.msra.mxu0 0.0
        %597 = vmatprep.subr.mxu0 0.0
        %598 = vmatpush1.msra.mxu0 0.0
        %599 = vmatprep.subr.mxu0 0.0
        %600 = vmatpush1.msra.mxu0 0.0
        %601 = vmatprep.subr.mxu0 0.0
        %602 = vmatpush1.msra.mxu0 0.0
        %603 = vmatprep.subr.mxu0 0.0
        %604 = vmatpush1.msra.mxu0 0.0
        %605 = vmatprep.subr.mxu0 0.0
        %606 = vmatpush1.msra.mxu0 0.0
        %607 = vmatprep.subr.mxu0 0.0
        %608 = vmatpush1.msra.mxu0 0.0
        %609 = vmatprep.subr.mxu0 0.0
        %610 = vmatpush1.msra.mxu0 0.0
        %611 = vmatprep.mubr.f32.mxu0 0.0
        %612 = vmatmul.mubr.f32.gmra.mrb[0].mxu0 %v497
        %v613 = vpop.f32.mrb[0].mxu0
        %v614 = vadd.f32 0.0, %v613
        %v615 = vpop.f32.mrb[0].mxu0
        %v616 = vadd.f32 0.0, %v615
        %617 = vmatprep.mubr.f32.mxu0 0.0
        %618 = vmatmul.mubr.f32.gmra.mrb[0].mxu0 %v498
        %v619 = vpop.f32.mrb[0].mxu0
        %v620 = vadd.f32 0.0, %v619
        %v621 = vpop.f32.mrb[0].mxu0
        %v622 = vadd.f32 0.0, %v621
        %623 = vdwg.mxu0
        %624 = vmatprep.subr.mxu0 0.0
        %625 = vmatpush1.msra.mxu0 %v501
        %626 = vmatprep.subr.mxu0 0.0
        %627 = vmatpush1.msra.mxu0 %v504
        %628 = vmatprep.subr.mxu0 0.0
        %629 = vmatpush1.msra.mxu0 %v507
        %630 = vmatprep.subr.mxu0 0.0
        %631 = vmatpush1.msra.mxu0 %v510
        %632 = vmatprep.subr.mxu0 0.0
        %633 = vmatpush1.msra.mxu0 %v513
        %634 = vmatprep.subr.mxu0 0.0
        %635 = vmatpush1.msra.mxu0 %v516
        %636 = vmatprep.subr.mxu0 0.0
        %637 = vmatpush1.msra.mxu0 %v519
        %638 = vmatprep.subr.mxu0 0.0
        %639 = vmatpush1.msra.mxu0 %v522
        %640 = vmatprep.subr.mxu0 0.0
        %641 = vmatpush1.msra.mxu0 %v525
        %642 = vmatprep.subr.mxu0 0.0
        %643 = vmatpush1.msra.mxu0 %v528
        %644 = vmatprep.subr.mxu0 0.0
        %645 = vmatpush1.msra.mxu0 %v531
        %646 = vmatprep.subr.mxu0 0.0
        %647 = vmatpush1.msra.mxu0 %v534
        %648 = vmatprep.subr.mxu0 0.0
        %649 = vmatpush1.msra.mxu0 %v537
        %650 = vmatprep.subr.mxu0 0.0
        %651 = vmatpush1.msra.mxu0 %v540
        %652 = vmatprep.subr.mxu0 0.0
        %653 = vmatpush1.msra.mxu0 %v543
        %654 = vmatprep.subr.mxu0 0.0
        %655 = vmatpush1.msra.mxu0 %v546
        %656 = vmatprep.subr.mxu0 0.0
        %657 = vmatpush1.msra.mxu0 0.0
        %658 = vmatprep.subr.mxu0 0.0
        %659 = vmatpush1.msra.mxu0 0.0
        %660 = vmatprep.subr.mxu0 0.0
        %661 = vmatpush1.msra.mxu0 0.0
        %662 = vmatprep.subr.mxu0 0.0
        %663 = vmatpush1.msra.mxu0 0.0
        %664 = vmatprep.subr.mxu0 0.0
        %665 = vmatpush1.msra.mxu0 0.0
        %666 = vmatprep.subr.mxu0 0.0
        %667 = vmatpush1.msra.mxu0 0.0
        %668 = vmatprep.subr.mxu0 0.0
        %669 = vmatpush1.msra.mxu0 0.0
        %670 = vmatprep.subr.mxu0 0.0
        %671 = vmatpush1.msra.mxu0 0.0
        %672 = vmatprep.subr.mxu0 0.0
        %673 = vmatpush1.msra.mxu0 0.0
        %674 = vmatprep.subr.mxu0 0.0
        %675 = vmatpush1.msra.mxu0 0.0
        %676 = vmatprep.subr.mxu0 0.0
        %677 = vmatpush1.msra.mxu0 0.0
        %678 = vmatprep.subr.mxu0 0.0
        %679 = vmatpush1.msra.mxu0 0.0
        %680 = vmatprep.subr.mxu0 0.0
        %681 = vmatpush1.msra.mxu0 0.0
        %682 = vmatprep.subr.mxu0 0.0
        %683 = vmatpush1.msra.mxu0 0.0
        %684 = vmatprep.subr.mxu0 0.0
        %685 = vmatpush1.msra.mxu0 0.0
        %686 = vmatprep.subr.mxu0 0.0
        %687 = vmatpush1.msra.mxu0 0.0
        %688 = vmatprep.mubr.f32.mxu0 0.0
        %689 = vmatmul.mubr.f32.gmra.mrb[0].mxu0 %v497
        %v690 = vpop.f32.mrb[0].mxu0
        %v691 = vadd.f32 0.0, %v690
        %v692 = vpop.f32.mrb[0].mxu0
        %693 = vmatprep.mubr.f32.mxu0 0.0
        %694 = vmatmul.mubr.f32.gmra.mrb[0].mxu0 %v498
        %v695 = vpop.f32.mrb[0].mxu0
        %v696 = vadd.f32 0.0, %v695
        %v697 = vpop.f32.mrb[0].mxu0
        %698 = vdwg.mxu0
        %v699 = vmul.f32 %v614, 0.088388346
        %v700 = vmul.f32 %v620, 0.088388346
        %v701 = vlaneseq
        %v702 = vshrl.u32 %v701, 7
        %v703 = vadd.s32 %v702, 8
        %v704 = vlaneseq
        %v705 = vand.u32 %v704, 127
        %vm706 = vcmp.le.s32.totalorder %v705, %v702
        %vm707 = vcmp.le.s32.totalorder %v705, %v703
        %vm708 = vcmask 261120
        %v710 = vsel %vm708, %v699, 0
        %v713 = vsel %vm708, %v700, 0
        %v716 = vsel %vm708, %v616, 0
        %v719 = vsel %vm708, %v622, 0
        %721 = vmatprep.subr.mxu0 0.0
        %722 = vmatpush1.xpose.msra.mxu0 %v716
        %723 = vmatprep.subr.mxu0 0.0
        %724 = vmatpush1.xpose.msra.mxu0 %v719
        %725 = vmatprep.subr.mxu0 0.0
        %726 = vmatpush1.xpose.msra.mxu0 0.0
        %727 = vmatprep.subr.mxu0 0.0
        %728 = vmatpush1.xpose.msra.mxu0 0.0
        %729 = vmatprep.subr.mxu0 0.0
        %730 = vmatpush1.xpose.msra.mxu0 0.0
        %731 = vmatprep.subr.mxu0 0.0
        %732 = vmatpush1.xpose.msra.mxu0 0.0
        %733 = vmatprep.subr.mxu0 0.0
        %734 = vmatpush1.xpose.msra.mxu0 0.0
        %735 = vmatprep.subr.mxu0 0.0
        %736 = vmatpush1.xpose.msra.mxu0 0.0
        %737 = vmatprep.subr.mxu0 0.0
        %738 = vmatpush1.xpose.msra.mxu0 0.0
        %739 = vmatprep.subr.mxu0 0.0
        %740 = vmatpush1.xpose.msra.mxu0 0.0
        %741 = vmatprep.subr.mxu0 0.0
        %742 = vmatpush1.xpose.msra.mxu0 0.0
        %743 = vmatprep.subr.mxu0 0.0
        %744 = vmatpush1.xpose.msra.mxu0 0.0
        %745 = vmatprep.subr.mxu0 0.0
        %746 = vmatpush1.xpose.msra.mxu0 0.0
        %747 = vmatprep.subr.mxu0 0.0
        %748 = vmatpush1.xpose.msra.mxu0 0.0
        %749 = vmatprep.subr.mxu0 0.0
        %750 = vmatpush1.xpose.msra.mxu0 0.0
        %751 = vmatprep.subr.mxu0 0.0
        %752 = vmatpush1.xpose.msra.mxu0 0.0
        %753 = vmatprep.subr.mxu0 0.0
        %754 = vmatpush1.xpose.msra.mxu0 0.0
        %755 = vmatprep.subr.mxu0 0.0
        %756 = vmatpush1.xpose.msra.mxu0 0.0
        %757 = vmatprep.subr.mxu0 0.0
        %758 = vmatpush1.xpose.msra.mxu0 0.0
        %759 = vmatprep.subr.mxu0 0.0
        %760 = vmatpush1.xpose.msra.mxu0 0.0
        %761 = vmatprep.subr.mxu0 0.0
        %762 = vmatpush1.xpose.msra.mxu0 0.0
        %763 = vmatprep.subr.mxu0 0.0
        %764 = vmatpush1.xpose.msra.mxu0 0.0
        %765 = vmatprep.subr.mxu0 0.0
        %766 = vmatpush1.xpose.msra.mxu0 0.0
        %767 = vmatprep.subr.mxu0 0.0
        %768 = vmatpush1.xpose.msra.mxu0 0.0
        %769 = vmatprep.subr.mxu0 0.0
        %770 = vmatpush1.xpose.msra.mxu0 0.0
        %771 = vmatprep.subr.mxu0 0.0
        %772 = vmatpush1.xpose.msra.mxu0 0.0
        %773 = vmatprep.subr.mxu0 0.0
        %774 = vmatpush1.xpose.msra.mxu0 0.0
        %775 = vmatprep.subr.mxu0 0.0
        %776 = vmatpush1.xpose.msra.mxu0 0.0
        %777 = vmatprep.subr.mxu0 0.0
        %778 = vmatpush1.xpose.msra.mxu0 0.0
        %779 = vmatprep.subr.mxu0 0.0
        %780 = vmatpush1.xpose.msra.mxu0 0.0
        %781 = vmatprep.subr.mxu0 0.0
        %782 = vmatpush1.xpose.msra.mxu0 0.0
        %783 = vmatprep.subr.mxu0 0.0
        %784 = vmatpush1.xpose.msra.mxu0 0.0
        %785 = vmatprep.mubr.f32.mxu0 0.0
        %786 = vmatmul.mubr.f32.gmra.mrb[0].mxu0 %v710
        %v787 = vpop.f32.mrb[0].mxu0
        %v788 = vadd.f32 0.0, %v787
        %v789 = vpop.f32.mrb[0].mxu0
        %790 = vmatprep.mubr.f32.mxu0 0.0
        %791 = vmatmul.mubr.f32.gmra.mrb[0].mxu0 %v713
        %v792 = vpop.f32.mrb[0].mxu0
        %v793 = vadd.f32 0.0, %v792
        %v794 = vpop.f32.mrb[0].mxu0
        %795 = vdwg.mxu0
        %v796 = vsel %vm706, %v788, -inf
        %v797 = vsel %vm707, %v793, -inf
        %vm798 = vcmask 130048
        %v799 = vsel %vm798, %v796, -inf
        %800 = vmax.xlane.f32.xlu0 %v799
        %v801 = vpop.xlane.xlu0 %800
        %v802 = vsel %vm798, %v797, -inf
        %803 = vmax.xlane.f32.xlu0 %v802
        %v804 = vpop.xlane.xlu0 %803
        %v805 = vsub.f32 %v796, %v801
        %v806 = vsub.f32 %v797, %v804
        %v807 = vmul.f32 %v805, 1.442695
        %v808 = vpow.pop %v807
        %v809 = vmul.f32 %v806, 1.442695
        %v810 = vpow.pop %v809
        %v811 = vsel %vm798, %v808, 0.0
        %812 = vadd.xlane.f32.xlu0 %v811
        %v813 = vpop.xlane.xlu0 %812
        %v814 = vsel %vm798, %v810, 0.0
        %815 = vadd.xlane.f32.xlu0 %v814
        %v816 = vpop.xlane.xlu0 %815
        %v817 = vrcp.pop %v813
        %v818 = vrcp.pop %v816
        %v819 = vmul.f32 %v808, %v817
        %v820 = vmul.f32 %v810, %v818
        %v822 = vsel %vm798, %v819, 0
        %v825 = vsel %vm798, %v820, 0
        %827 = vmatprep.subr.mxu0 0.0
        %828 = vmatpush1.msra.mxu0 %v691
        %829 = vmatprep.subr.mxu0 0.0
        %830 = vmatpush1.msra.mxu0 %v696
        %831 = vmatprep.subr.mxu0 0.0
        %832 = vmatpush1.msra.mxu0 0.0
        %833 = vmatprep.subr.mxu0 0.0
        %834 = vmatpush1.msra.mxu0 0.0
        %835 = vmatprep.subr.mxu0 0.0
        %836 = vmatpush1.msra.mxu0 0.0
        %837 = vmatprep.subr.mxu0 0.0
        %838 = vmatpush1.msra.mxu0 0.0
        %839 = vmatprep.subr.mxu0 0.0
        %840 = vmatpush1.msra.mxu0 0.0
        %841 = vmatprep.subr.mxu0 0.0
        %842 = vmatpush1.msra.mxu0 0.0
        %843 = vmatprep.subr.mxu0 0.0
        %844 = vmatpush1.msra.mxu0 0.0
        %845 = vmatprep.subr.mxu0 0.0
        %846 = vmatpush1.msra.mxu0 0.0
        %847 = vmatprep.subr.mxu0 0.0
        %848 = vmatpush1.msra.mxu0 0.0
        %849 = vmatprep.subr.mxu0 0.0
        %850 = vmatpush1.msra.mxu0 0.0
        %851 = vmatprep.subr.mxu0 0.0
        %852 = vmatpush1.msra.mxu0 0.0
        %853 = vmatprep.subr.mxu0 0.0
        %854 = vmatpush1.msra.mxu0 0.0
        %855 = vmatprep.subr.mxu0 0.0
        %856 = vmatpush1.msra.mxu0 0.0
        %857 = vmatprep.subr.mxu0 0.0
        %858 = vmatpush1.msra.mxu0 0.0
        %859 = vmatprep.subr.mxu0 0.0
        %860 = vmatpush1.msra.mxu0 0.0
        %861 = vmatprep.subr.mxu0 0.0
        %862 = vmatpush1.msra.mxu0 0.0
        %863 = vmatprep.subr.mxu0 0.0
        %864 = vmatpush1.msra.mxu0 0.0
        %865 = vmatprep.subr.mxu0 0.0
        %866 = vmatpush1.msra.mxu0 0.0
        %867 = vmatprep.subr.mxu0 0.0
        %868 = vmatpush1.msra.mxu0 0.0
        %869 = vmatprep.subr.mxu0 0.0
        %870 = vmatpush1.msra.mxu0 0.0
        %871 = vmatprep.subr.mxu0 0.0
        %872 = vmatpush1.msra.mxu0 0.0
        %873 = vmatprep.subr.mxu0 0.0
        %874 = vmatpush1.msra.mxu0 0.0
        %875 = vmatprep.subr.mxu0 0.0
        %876 = vmatpush1.msra.mxu0 0.0
        %877 = vmatprep.subr.mxu0 0.0
        %878 = vmatpush1.msra.mxu0 0.0
        %879 = vmatprep.subr.mxu0 0.0
        %880 = vmatpush1.msra.mxu0 0.0
        %881 = vmatprep.subr.mxu0 0.0
        %882 = vmatpush1.msra.mxu0 0.0
        %883 = vmatprep.subr.mxu0 0.0
        %884 = vmatpush1.msra.mxu0 0.0
        %885 = vmatprep.subr.mxu0 0.0
        %886 = vmatpush1.msra.mxu0 0.0
        %887 = vmatprep.subr.mxu0 0.0
        %888 = vmatpush1.msra.mxu0 0.0
        %889 = vmatprep.subr.mxu0 0.0
        %890 = vmatpush1.msra.mxu0 0.0
        %891 = vmatprep.mubr.f32.mxu0 0.0
        %892 = vmatmul.mubr.f32.gmra.mrb[0].mxu0 %v822
        %v893 = vpop.f32.mrb[0].mxu0
        %v894 = vadd.f32 0.0, %v893
        %v895 = vpop.f32.mrb[0].mxu0
        %896 = vmatprep.mubr.f32.mxu0 0.0
        %897 = vmatmul.mubr.f32.gmra.mrb[0].mxu0 %v825
        %v898 = vpop.f32.mrb[0].mxu0
        %v899 = vadd.f32 0.0, %v898
        %v900 = vpop.f32.mrb[0].mxu0
        %901 = vdwg.mxu0
        %v902 = vld [vmem:[%s4] sm:$0xff]
        %v903 = vld [vmem:[%s4 + $0x8] sm:$0xff]
        %v904 = vld [vmem:[%s4 + $0x10] sm:$0xff]
        %v905 = vld [vmem:[%s4 + $0x18] sm:$0xff]
        %906 = vrot.lane.b32.xlu0 %v699, 96
        %v907 = vpop.permute.xlu0 %906
        %908 = vrot.lane.b32.xlu0 %v700, 96
        %v909 = vpop.permute.xlu0 %908
        %910 = vrot.lane.b32.xlu0 %v616, 96
        %v911 = vpop.permute.xlu0 %910
        %912 = vrot.lane.b32.xlu0 %v622, 96
        %v913 = vpop.permute.xlu0 %912
        %v914 = vsel %vm708, %v907, 0
        %v916 = vsel %vm708, %v909, 0
        %v918 = vsel %vm708, %v911, 0
        %v920 = vsel %vm708, %v913, 0
        %922 = vmatprep.subr.mxu0 0.0
        %923 = vmatpush1.xpose.msra.mxu0 %v918
        %924 = vmatprep.subr.mxu0 0.0
        %925 = vmatpush1.xpose.msra.mxu0 %v920
        %926 = vmatprep.subr.mxu0 0.0
        %927 = vmatpush1.xpose.msra.mxu0 0.0
        %928 = vmatprep.subr.mxu0 0.0
        %929 = vmatpush1.xpose.msra.mxu0 0.0
        %930 = vmatprep.subr.mxu0 0.0
        %931 = vmatpush1.xpose.msra.mxu0 0.0
        %932 = vmatprep.subr.mxu0 0.0
        %933 = vmatpush1.xpose.msra.mxu0 0.0
        %934 = vmatprep.subr.mxu0 0.0
        %935 = vmatpush1.xpose.msra.mxu0 0.0
        %936 = vmatprep.subr.mxu0 0.0
        %937 = vmatpush1.xpose.msra.mxu0 0.0
        %938 = vmatprep.subr.mxu0 0.0
        %939 = vmatpush1.xpose.msra.mxu0 0.0
        %940 = vmatprep.subr.mxu0 0.0
        %941 = vmatpush1.xpose.msra.mxu0 0.0
        %942 = vmatprep.subr.mxu0 0.0
        %943 = vmatpush1.xpose.msra.mxu0 0.0
        %944 = vmatprep.subr.mxu0 0.0
        %945 = vmatpush1.xpose.msra.mxu0 0.0
        %946 = vmatprep.subr.mxu0 0.0
        %947 = vmatpush1.xpose.msra.mxu0 0.0
        %948 = vmatprep.subr.mxu0 0.0
        %949 = vmatpush1.xpose.msra.mxu0 0.0
        %950 = vmatprep.subr.mxu0 0.0
        %951 = vmatpush1.xpose.msra.mxu0 0.0
        %952 = vmatprep.subr.mxu0 0.0
        %953 = vmatpush1.xpose.msra.mxu0 0.0
        %954 = vmatprep.subr.mxu0 0.0
        %955 = vmatpush1.xpose.msra.mxu0 0.0
        %956 = vmatprep.subr.mxu0 0.0
        %957 = vmatpush1.xpose.msra.mxu0 0.0
        %958 = vmatprep.subr.mxu0 0.0
        %959 = vmatpush1.xpose.msra.mxu0 0.0
        %960 = vmatprep.subr.mxu0 0.0
        %961 = vmatpush1.xpose.msra.mxu0 0.0
        %962 = vmatprep.subr.mxu0 0.0
        %963 = vmatpush1.xpose.msra.mxu0 0.0
        %964 = vmatprep.subr.mxu0 0.0
        %965 = vmatpush1.xpose.msra.mxu0 0.0
        %966 = vmatprep.subr.mxu0 0.0
        %967 = vmatpush1.xpose.msra.mxu0 0.0
        %968 = vmatprep.subr.mxu0 0.0
        %969 = vmatpush1.xpose.msra.mxu0 0.0
        %970 = vmatprep.subr.mxu0 0.0
        %971 = vmatpush1.xpose.msra.mxu0 0.0
        %972 = vmatprep.subr.mxu0 0.0
        %973 = vmatpush1.xpose.msra.mxu0 0.0
        %974 = vmatprep.subr.mxu0 0.0
        %975 = vmatpush1.xpose.msra.mxu0 0.0
        %976 = vmatprep.subr.mxu0 0.0
        %977 = vmatpush1.xpose.msra.mxu0 0.0
        %978 = vmatprep.subr.mxu0 0.0
        %979 = vmatpush1.xpose.msra.mxu0 0.0
        %980 = vmatprep.subr.mxu0 0.0
        %981 = vmatpush1.xpose.msra.mxu0 0.0
        %982 = vmatprep.subr.mxu0 0.0
        %983 = vmatpush1.xpose.msra.mxu0 0.0
        %984 = vmatprep.subr.mxu0 0.0
        %985 = vmatpush1.xpose.msra.mxu0 0.0
        %986 = vmatprep.mubr.f32.mxu0 0.0
        %987 = vmatmul.mubr.f32.gmra.mrb[0].mxu0 %v914
        %v988 = vpop.f32.mrb[0].mxu0
        %v989 = vadd.f32 0.0, %v988
        %v990 = vpop.f32.mrb[0].mxu0
        %991 = vmatprep.mubr.f32.mxu0 0.0
        %992 = vmatmul.mubr.f32.gmra.mrb[0].mxu0 %v916
        %v993 = vpop.f32.mrb[0].mxu0
        %v994 = vadd.f32 0.0, %v993
        %v995 = vpop.f32.mrb[0].mxu0
        %996 = vdwg.mxu0
        %v997 = vsel %vm706, %v989, -inf
        %v998 = vsel %vm707, %v994, -inf
        %v999 = vsel %vm798, %v997, -inf
        %1000 = vmax.xlane.f32.xlu0 %v999
        %v1001 = vpop.xlane.xlu0 %1000
        %v1002 = vsel %vm798, %v998, -inf
        %1003 = vmax.xlane.f32.xlu0 %v1002
        %v1004 = vpop.xlane.xlu0 %1003
        %v1005 = vsub.f32 %v997, %v1001
        %v1006 = vsub.f32 %v998, %v1004
        %v1007 = vmul.f32 %v1005, 1.442695
        %v1008 = vpow.pop %v1007
        %v1009 = vmul.f32 %v1006, 1.442695
        %v1010 = vpow.pop %v1009
        %v1011 = vsel %vm798, %v1008, 0.0
        %1012 = vadd.xlane.f32.xlu0 %v1011
        %v1013 = vpop.xlane.xlu0 %1012
        %v1014 = vsel %vm798, %v1010, 0.0
        %1015 = vadd.xlane.f32.xlu0 %v1014
        %v1016 = vpop.xlane.xlu0 %1015
        %v1017 = vrcp.pop %v1013
        %v1018 = vrcp.pop %v1016
        %v1019 = vmul.f32 %v1008, %v1017
        %v1020 = vmul.f32 %v1010, %v1018
        %1023 = vrot.lane.b32.xlu0 %v691, 96
        %v1024 = vpop.permute.xlu0 %1023
        %1025 = vrot.lane.b32.xlu0 %v696, 96
        %v1026 = vpop.permute.xlu0 %1025
        %v1030 = vsel %vm798, %v1019, 0
        %v1033 = vsel %vm798, %v1020, 0
        %1035 = vmatprep.subr.mxu0 0.0
        %1036 = vmatpush1.msra.mxu0 %v1024
        %1037 = vmatprep.subr.mxu0 0.0
        %1038 = vmatpush1.msra.mxu0 %v1026
        %1039 = vmatprep.subr.mxu0 0.0
        %1040 = vmatpush1.msra.mxu0 0.0
        %1041 = vmatprep.subr.mxu0 0.0
        %1042 = vmatpush1.msra.mxu0 0.0
        %1043 = vmatprep.subr.mxu0 0.0
        %1044 = vmatpush1.msra.mxu0 0.0
        %1045 = vmatprep.subr.mxu0 0.0
        %1046 = vmatpush1.msra.mxu0 0.0
        %1047 = vmatprep.subr.mxu0 0.0
        %1048 = vmatpush1.msra.mxu0 0.0
        %1049 = vmatprep.subr.mxu0 0.0
        %1050 = vmatpush1.msra.mxu0 0.0
        %1051 = vmatprep.subr.mxu0 0.0
        %1052 = vmatpush1.msra.mxu0 0.0
        %1053 = vmatprep.subr.mxu0 0.0
        %1054 = vmatpush1.msra.mxu0 0.0
        %1055 = vmatprep.subr.mxu0 0.0
        %1056 = vmatpush1.msra.mxu0 0.0
        %1057 = vmatprep.subr.mxu0 0.0
        %1058 = vmatpush1.msra.mxu0 0.0
        %1059 = vmatprep.subr.mxu0 0.0
        %1060 = vmatpush1.msra.mxu0 0.0
        %1061 = vmatprep.subr.mxu0 0.0
        %1062 = vmatpush1.msra.mxu0 0.0
        %1063 = vmatprep.subr.mxu0 0.0
        %1064 = vmatpush1.msra.mxu0 0.0
        %1065 = vmatprep.subr.mxu0 0.0
        %1066 = vmatpush1.msra.mxu0 0.0
        %1067 = vmatprep.subr.mxu0 0.0
        %1068 = vmatpush1.msra.mxu0 0.0
        %1069 = vmatprep.subr.mxu0 0.0
        %1070 = vmatpush1.msra.mxu0 0.0
        %1071 = vmatprep.subr.mxu0 0.0
        %1072 = vmatpush1.msra.mxu0 0.0
        %1073 = vmatprep.subr.mxu0 0.0
        %1074 = vmatpush1.msra.mxu0 0.0
        %1075 = vmatprep.subr.mxu0 0.0
        %1076 = vmatpush1.msra.mxu0 0.0
        %1077 = vmatprep.subr.mxu0 0.0
        %1078 = vmatpush1.msra.mxu0 0.0
        %1079 = vmatprep.subr.mxu0 0.0
        %1080 = vmatpush1.msra.mxu0 0.0
        %1081 = vmatprep.subr.mxu0 0.0
        %1082 = vmatpush1.msra.mxu0 0.0
        %1083 = vmatprep.subr.mxu0 0.0
        %1084 = vmatpush1.msra.mxu0 0.0
        %1085 = vmatprep.subr.mxu0 0.0
        %1086 = vmatpush1.msra.mxu0 0.0
        %1087 = vmatprep.subr.mxu0 0.0
        %1088 = vmatpush1.msra.mxu0 0.0
        %1089 = vmatprep.subr.mxu0 0.0
        %1090 = vmatpush1.msra.mxu0 0.0
        %1091 = vmatprep.subr.mxu0 0.0
        %1092 = vmatpush1.msra.mxu0 0.0
        %1093 = vmatprep.subr.mxu0 0.0
        %1094 = vmatpush1.msra.mxu0 0.0
        %1095 = vmatprep.subr.mxu0 0.0
        %1096 = vmatpush1.msra.mxu0 0.0
        %1097 = vmatprep.subr.mxu0 0.0
        %1098 = vmatpush1.msra.mxu0 0.0
        %1099 = vmatprep.mubr.f32.mxu0 0.0
        %1100 = vmatmul.mubr.f32.gmra.mrb[0].mxu0 %v1030
        %v1101 = vpop.f32.mrb[0].mxu0
        %v1102 = vadd.f32 0.0, %v1101
        %v1103 = vpop.f32.mrb[0].mxu0
        %1104 = vmatprep.mubr.f32.mxu0 0.0
        %1105 = vmatmul.mubr.f32.gmra.mrb[0].mxu0 %v1033
        %v1106 = vpop.f32.mrb[0].mxu0
        %v1107 = vadd.f32 0.0, %v1106
        %v1108 = vpop.f32.mrb[0].mxu0
        %1109 = vdwg.mxu0
        %v1110 = vld [vmem:[%s4 + $0x20] sm:$0xff]
        %v1111 = vld [vmem:[%s4 + $0x28] sm:$0xff]
        %v1112 = vld [vmem:[%s4 + $0x30] sm:$0xff]
        %v1113 = vld [vmem:[%s4 + $0x38] sm:$0xff]
        %v1115 = vsel %vm708, %v1102, 0
        %v1118 = vsel %vm708, %v1107, 0
        %1120 = vmatprep.subr.mxu0 0.0
        %1121 = vmatpush1.msra.mxu0 %v1110
        %1122 = vmatprep.subr.mxu0 0.0
        %1123 = vmatpush1.msra.mxu0 %v1111
        %1124 = vmatprep.subr.mxu0 0.0
        %1125 = vmatpush1.msra.mxu0 %v1112
        %1126 = vmatprep.subr.mxu0 0.0
        %1127 = vmatpush1.msra.mxu0 %v1113
        %1128 = vmatprep.subr.mxu0 0.0
        %1129 = vmatpush1.msra.mxu0 0.0
        %1130 = vmatprep.subr.mxu0 0.0
        %1131 = vmatpush1.msra.mxu0 0.0
        %1132 = vmatprep.subr.mxu0 0.0
        %1133 = vmatpush1.msra.mxu0 0.0
        %1134 = vmatprep.subr.mxu0 0.0
        %1135 = vmatpush1.msra.mxu0 0.0
        %1136 = vmatprep.subr.mxu0 0.0
        %1137 = vmatpush1.msra.mxu0 0.0
        %1138 = vmatprep.subr.mxu0 0.0
        %1139 = vmatpush1.msra.mxu0 0.0
        %1140 = vmatprep.subr.mxu0 0.0
        %1141 = vmatpush1.msra.mxu0 0.0
        %1142 = vmatprep.subr.mxu0 0.0
        %1143 = vmatpush1.msra.mxu0 0.0
        %1144 = vmatprep.subr.mxu0 0.0
        %1145 = vmatpush1.msra.mxu0 0.0
        %1146 = vmatprep.subr.mxu0 0.0
        %1147 = vmatpush1.msra.mxu0 0.0
        %1148 = vmatprep.subr.mxu0 0.0
        %1149 = vmatpush1.msra.mxu0 0.0
        %1150 = vmatprep.subr.mxu0 0.0
        %1151 = vmatpush1.msra.mxu0 0.0
        %1152 = vmatprep.subr.mxu0 0.0
        %1153 = vmatpush1.msra.mxu0 0.0
        %1154 = vmatprep.subr.mxu0 0.0
        %1155 = vmatpush1.msra.mxu0 0.0
        %1156 = vmatprep.subr.mxu0 0.0
        %1157 = vmatpush1.msra.mxu0 0.0
        %1158 = vmatprep.subr.mxu0 0.0
        %1159 = vmatpush1.msra.mxu0 0.0
        %1160 = vmatprep.subr.mxu0 0.0
        %1161 = vmatpush1.msra.mxu0 0.0
        %1162 = vmatprep.subr.mxu0 0.0
        %1163 = vmatpush1.msra.mxu0 0.0
        %1164 = vmatprep.subr.mxu0 0.0
        %1165 = vmatpush1.msra.mxu0 0.0
        %1166 = vmatprep.subr.mxu0 0.0
        %1167 = vmatpush1.msra.mxu0 0.0
        %1168 = vmatprep.subr.mxu0 0.0
        %1169 = vmatpush1.msra.mxu0 0.0
        %1170 = vmatprep.subr.mxu0 0.0
        %1171 = vmatpush1.msra.mxu0 0.0
        %1172 = vmatprep.subr.mxu0 0.0
        %1173 = vmatpush1.msra.mxu0 0.0
        %1174 = vmatprep.subr.mxu0 0.0
        %1175 = vmatpush1.msra.mxu0 0.0
        %1176 = vmatprep.subr.mxu0 0.0
        %1177 = vmatpush1.msra.mxu0 0.0
        %1178 = vmatprep.subr.mxu0 0.0
        %1179 = vmatpush1.msra.mxu0 0.0
        %1180 = vmatprep.subr.mxu0 0.0
        %1181 = vmatpush1.msra.mxu0 0.0
        %1182 = vmatprep.subr.mxu0 0.0
        %1183 = vmatpush1.msra.mxu0 0.0
        %1184 = vmatprep.mubr.f32.mxu0 0.0
        %1185 = vmatmul.mubr.f32.gmra.mrb[0].mxu0 %v1115
        %v1186 = vpop.f32.mrb[0].mxu0
        %v1187 = vadd.f32 0.0, %v1186
        %v1188 = vpop.f32.mrb[0].mxu0
        %1189 = vmatprep.mubr.f32.mxu0 0.0
        %1190 = vmatmul.mubr.f32.gmra.mrb[0].mxu0 %v1118
        %v1191 = vpop.f32.mrb[0].mxu0
        %v1192 = vadd.f32 0.0, %v1191
        %v1193 = vpop.f32.mrb[0].mxu0
        %1194 = vdwg.mxu0
        %v1196 = vsel %vm708, %v894, 0
        %v1199 = vsel %vm708, %v899, 0
        %1201 = vmatprep.subr.mxu0 0.0
        %1202 = vmatpush1.msra.mxu0 %v902
        %1203 = vmatprep.subr.mxu0 0.0
        %1204 = vmatpush1.msra.mxu0 %v903
        %1205 = vmatprep.subr.mxu0 0.0
        %1206 = vmatpush1.msra.mxu0 %v904
        %1207 = vmatprep.subr.mxu0 0.0
        %1208 = vmatpush1.msra.mxu0 %v905
        %1209 = vmatprep.subr.mxu0 0.0
        %1210 = vmatpush1.msra.mxu0 0.0
        %1211 = vmatprep.subr.mxu0 0.0
        %1212 = vmatpush1.msra.mxu0 0.0
        %1213 = vmatprep.subr.mxu0 0.0
        %1214 = vmatpush1.msra.mxu0 0.0
        %1215 = vmatprep.subr.mxu0 0.0
        %1216 = vmatpush1.msra.mxu0 0.0
        %1217 = vmatprep.subr.mxu0 0.0
        %1218 = vmatpush1.msra.mxu0 0.0
        %1219 = vmatprep.subr.mxu0 0.0
        %1220 = vmatpush1.msra.mxu0 0.0
        %1221 = vmatprep.subr.mxu0 0.0
        %1222 = vmatpush1.msra.mxu0 0.0
        %1223 = vmatprep.subr.mxu0 0.0
        %1224 = vmatpush1.msra.mxu0 0.0
        %1225 = vmatprep.subr.mxu0 0.0
        %1226 = vmatpush1.msra.mxu0 0.0
        %1227 = vmatprep.subr.mxu0 0.0
        %1228 = vmatpush1.msra.mxu0 0.0
        %1229 = vmatprep.subr.mxu0 0.0
        %1230 = vmatpush1.msra.mxu0 0.0
        %1231 = vmatprep.subr.mxu0 0.0
        %1232 = vmatpush1.msra.mxu0 0.0
        %1233 = vmatprep.subr.mxu0 0.0
        %1234 = vmatpush1.msra.mxu0 0.0
        %1235 = vmatprep.subr.mxu0 0.0
        %1236 = vmatpush1.msra.mxu0 0.0
        %1237 = vmatprep.subr.mxu0 0.0
        %1238 = vmatpush1.msra.mxu0 0.0
        %1239 = vmatprep.subr.mxu0 0.0
        %1240 = vmatpush1.msra.mxu0 0.0
        %1241 = vmatprep.subr.mxu0 0.0
        %1242 = vmatpush1.msra.mxu0 0.0
        %1243 = vmatprep.subr.mxu0 0.0
        %1244 = vmatpush1.msra.mxu0 0.0
        %1245 = vmatprep.subr.mxu0 0.0
        %1246 = vmatpush1.msra.mxu0 0.0
        %1247 = vmatprep.subr.mxu0 0.0
        %1248 = vmatpush1.msra.mxu0 0.0
        %1249 = vmatprep.subr.mxu0 0.0
        %1250 = vmatpush1.msra.mxu0 0.0
        %1251 = vmatprep.subr.mxu0 0.0
        %1252 = vmatpush1.msra.mxu0 0.0
        %1253 = vmatprep.subr.mxu0 0.0
        %1254 = vmatpush1.msra.mxu0 0.0
        %1255 = vmatprep.subr.mxu0 0.0
        %1256 = vmatpush1.msra.mxu0 0.0
        %1257 = vmatprep.subr.mxu0 0.0
        %1258 = vmatpush1.msra.mxu0 0.0
        %1259 = vmatprep.subr.mxu0 0.0
        %1260 = vmatpush1.msra.mxu0 0.0
        %1261 = vmatprep.subr.mxu0 0.0
        %1262 = vmatpush1.msra.mxu0 0.0
        %1263 = vmatprep.subr.mxu0 0.0
        %1264 = vmatpush1.msra.mxu0 0.0
        %1265 = vmatprep.mubr.f32.mxu0 0.0
        %1266 = vmatmul.mubr.f32.gmra.mrb[0].mxu0 %v1196
        %v1267 = vpop.f32.mrb[0].mxu0
        %v1268 = vadd.f32 %v1187, %v1267
        %v1269 = vpop.f32.mrb[0].mxu0
        %1270 = vmatprep.mubr.f32.mxu0 0.0
        %1271 = vmatmul.mubr.f32.gmra.mrb[0].mxu0 %v1199
        %v1272 = vpop.f32.mrb[0].mxu0
        %v1273 = vadd.f32 %v1192, %v1272
        %v1274 = vpop.f32.mrb[0].mxu0
        %1275 = vdwg.mxu0
        %1276 = vrot.lane.b32.xlu0 %v699, 64
        %v1277 = vpop.permute.xlu0 %1276
        %1278 = vrot.lane.b32.xlu0 %v700, 64
        %v1279 = vpop.permute.xlu0 %1278
        %1280 = vrot.lane.b32.xlu0 %v616, 64
        %v1281 = vpop.permute.xlu0 %1280
        %1282 = vrot.lane.b32.xlu0 %v622, 64
        %v1283 = vpop.permute.xlu0 %1282
        %v1284 = vsel %vm708, %v1277, 0
        %v1286 = vsel %vm708, %v1279, 0
        %v1288 = vsel %vm708, %v1281, 0
        %v1290 = vsel %vm708, %v1283, 0
        %1292 = vmatprep.subr.mxu0 0.0
        %1293 = vmatpush1.xpose.msra.mxu0 %v1288
        %1294 = vmatprep.subr.mxu0 0.0
        %1295 = vmatpush1.xpose.msra.mxu0 %v1290
        %1296 = vmatprep.subr.mxu0 0.0
        %1297 = vmatpush1.xpose.msra.mxu0 0.0
        %1298 = vmatprep.subr.mxu0 0.0
        %1299 = vmatpush1.xpose.msra.mxu0 0.0
        %1300 = vmatprep.subr.mxu0 0.0
        %1301 = vmatpush1.xpose.msra.mxu0 0.0
        %1302 = vmatprep.subr.mxu0 0.0
        %1303 = vmatpush1.xpose.msra.mxu0 0.0
        %1304 = vmatprep.subr.mxu0 0.0
        %1305 = vmatpush1.xpose.msra.mxu0 0.0
        %1306 = vmatprep.subr.mxu0 0.0
        %1307 = vmatpush1.xpose.msra.mxu0 0.0
        %1308 = vmatprep.subr.mxu0 0.0
        %1309 = vmatpush1.xpose.msra.mxu0 0.0
        %1310 = vmatprep.subr.mxu0 0.0
        %1311 = vmatpush1.xpose.msra.mxu0 0.0
        %1312 = vmatprep.subr.mxu0 0.0
        %1313 = vmatpush1.xpose.msra.mxu0 0.0
        %1314 = vmatprep.subr.mxu0 0.0
        %1315 = vmatpush1.xpose.msra.mxu0 0.0
        %1316 = vmatprep.subr.mxu0 0.0
        %1317 = vmatpush1.xpose.msra.mxu0 0.0
        %1318 = vmatprep.subr.mxu0 0.0
        %1319 = vmatpush1.xpose.msra.mxu0 0.0
        %1320 = vmatprep.subr.mxu0 0.0
        %1321 = vmatpush1.xpose.msra.mxu0 0.0
        %1322 = vmatprep.subr.mxu0 0.0
        %1323 = vmatpush1.xpose.msra.mxu0 0.0
        %1324 = vmatprep.subr.mxu0 0.0
        %1325 = vmatpush1.xpose.msra.mxu0 0.0
        %1326 = vmatprep.subr.mxu0 0.0
        %1327 = vmatpush1.xpose.msra.mxu0 0.0
        %1328 = vmatprep.subr.mxu0 0.0
        %1329 = vmatpush1.xpose.msra.mxu0 0.0
        %1330 = vmatprep.subr.mxu0 0.0
        %1331 = vmatpush1.xpose.msra.mxu0 0.0
        %1332 = vmatprep.subr.mxu0 0.0
        %1333 = vmatpush1.xpose.msra.mxu0 0.0
        %1334 = vmatprep.subr.mxu0 0.0
        %1335 = vmatpush1.xpose.msra.mxu0 0.0
        %1336 = vmatprep.subr.mxu0 0.0
        %1337 = vmatpush1.xpose.msra.mxu0 0.0
        %1338 = vmatprep.subr.mxu0 0.0
        %1339 = vmatpush1.xpose.msra.mxu0 0.0
        %1340 = vmatprep.subr.mxu0 0.0
        %1341 = vmatpush1.xpose.msra.mxu0 0.0
        %1342 = vmatprep.subr.mxu0 0.0
        %1343 = vmatpush1.xpose.msra.mxu0 0.0
        %1344 = vmatprep.subr.mxu0 0.0
        %1345 = vmatpush1.xpose.msra.mxu0 0.0
        %1346 = vmatprep.subr.mxu0 0.0
        %1347 = vmatpush1.xpose.msra.mxu0 0.0
        %1348 = vmatprep.subr.mxu0 0.0
        %1349 = vmatpush1.xpose.msra.mxu0 0.0
        %1350 = vmatprep.subr.mxu0 0.0
        %1351 = vmatpush1.xpose.msra.mxu0 0.0
        %1352 = vmatprep.subr.mxu0 0.0
        %1353 = vmatpush1.xpose.msra.mxu0 0.0
        %1354 = vmatprep.subr.mxu0 0.0
        %1355 = vmatpush1.xpose.msra.mxu0 0.0
        %1356 = vmatprep.mubr.f32.mxu0 0.0
        %1357 = vmatmul.mubr.f32.gmra.mrb[0].mxu0 %v1284
        %v1358 = vpop.f32.mrb[0].mxu0
        %v1359 = vadd.f32 0.0, %v1358
        %v1360 = vpop.f32.mrb[0].mxu0
        %1361 = vmatprep.mubr.f32.mxu0 0.0
        %1362 = vmatmul.mubr.f32.gmra.mrb[0].mxu0 %v1286
        %v1363 = vpop.f32.mrb[0].mxu0
        %v1364 = vadd.f32 0.0, %v1363
        %v1365 = vpop.f32.mrb[0].mxu0
        %1366 = vdwg.mxu0
        %v1367 = vsel %vm706, %v1359, -inf
        %v1368 = vsel %vm707, %v1364, -inf
        %v1369 = vsel %vm798, %v1367, -inf
        %1370 = vmax.xlane.f32.xlu0 %v1369
        %v1371 = vpop.xlane.xlu0 %1370
        %v1372 = vsel %vm798, %v1368, -inf
        %1373 = vmax.xlane.f32.xlu0 %v1372
        %v1374 = vpop.xlane.xlu0 %1373
        %v1375 = vsub.f32 %v1367, %v1371
        %v1376 = vsub.f32 %v1368, %v1374
        %v1377 = vmul.f32 %v1375, 1.442695
        %v1378 = vpow.pop %v1377
        %v1379 = vmul.f32 %v1376, 1.442695
        %v1380 = vpow.pop %v1379
        %v1381 = vsel %vm798, %v1378, 0.0
        %1382 = vadd.xlane.f32.xlu0 %v1381
        %v1383 = vpop.xlane.xlu0 %1382
        %v1384 = vsel %vm798, %v1380, 0.0
        %1385 = vadd.xlane.f32.xlu0 %v1384
        %v1386 = vpop.xlane.xlu0 %1385
        %v1387 = vrcp.pop %v1383
        %v1388 = vrcp.pop %v1386
        %v1389 = vmul.f32 %v1378, %v1387
        %v1390 = vmul.f32 %v1380, %v1388
        %1391 = vrot.lane.b32.xlu0 %v691, 64
        %v1392 = vpop.permute.xlu0 %1391
        %1393 = vrot.lane.b32.xlu0 %v696, 64
        %v1394 = vpop.permute.xlu0 %1393
        %v1398 = vsel %vm798, %v1389, 0
        %v1401 = vsel %vm798, %v1390, 0
        %1403 = vmatprep.subr.mxu0 0.0
        %1404 = vmatpush1.msra.mxu0 %v1392
        %1405 = vmatprep.subr.mxu0 0.0
        %1406 = vmatpush1.msra.mxu0 %v1394
        %1407 = vmatprep.subr.mxu0 0.0
        %1408 = vmatpush1.msra.mxu0 0.0
        %1409 = vmatprep.subr.mxu0 0.0
        %1410 = vmatpush1.msra.mxu0 0.0
        %1411 = vmatprep.subr.mxu0 0.0
        %1412 = vmatpush1.msra.mxu0 0.0
        %1413 = vmatprep.subr.mxu0 0.0
        %1414 = vmatpush1.msra.mxu0 0.0
        %1415 = vmatprep.subr.mxu0 0.0
        %1416 = vmatpush1.msra.mxu0 0.0
        %1417 = vmatprep.subr.mxu0 0.0
        %1418 = vmatpush1.msra.mxu0 0.0
        %1419 = vmatprep.subr.mxu0 0.0
        %1420 = vmatpush1.msra.mxu0 0.0
        %1421 = vmatprep.subr.mxu0 0.0
        %1422 = vmatpush1.msra.mxu0 0.0
        %1423 = vmatprep.subr.mxu0 0.0
        %1424 = vmatpush1.msra.mxu0 0.0
        %1425 = vmatprep.subr.mxu0 0.0
        %1426 = vmatpush1.msra.mxu0 0.0
        %1427 = vmatprep.subr.mxu0 0.0
        %1428 = vmatpush1.msra.mxu0 0.0
        %1429 = vmatprep.subr.mxu0 0.0
        %1430 = vmatpush1.msra.mxu0 0.0
        %1431 = vmatprep.subr.mxu0 0.0
        %1432 = vmatpush1.msra.mxu0 0.0
        %1433 = vmatprep.subr.mxu0 0.0
        %1434 = vmatpush1.msra.mxu0 0.0
        %1435 = vmatprep.subr.mxu0 0.0
        %1436 = vmatpush1.msra.mxu0 0.0
        %1437 = vmatprep.subr.mxu0 0.0
        %1438 = vmatpush1.msra.mxu0 0.0
        %1439 = vmatprep.subr.mxu0 0.0
        %1440 = vmatpush1.msra.mxu0 0.0
        %1441 = vmatprep.subr.mxu0 0.0
        %1442 = vmatpush1.msra.mxu0 0.0
        %1443 = vmatprep.subr.mxu0 0.0
        %1444 = vmatpush1.msra.mxu0 0.0
        %1445 = vmatprep.subr.mxu0 0.0
        %1446 = vmatpush1.msra.mxu0 0.0
        %1447 = vmatprep.subr.mxu0 0.0
        %1448 = vmatpush1.msra.mxu0 0.0
        %1449 = vmatprep.subr.mxu0 0.0
        %1450 = vmatpush1.msra.mxu0 0.0
        %1451 = vmatprep.subr.mxu0 0.0
        %1452 = vmatpush1.msra.mxu0 0.0
        %1453 = vmatprep.subr.mxu0 0.0
        %1454 = vmatpush1.msra.mxu0 0.0
        %1455 = vmatprep.subr.mxu0 0.0
        %1456 = vmatpush1.msra.mxu0 0.0
        %1457 = vmatprep.subr.mxu0 0.0
        %1458 = vmatpush1.msra.mxu0 0.0
        %1459 = vmatprep.subr.mxu0 0.0
        %1460 = vmatpush1.msra.mxu0 0.0
        %1461 = vmatprep.subr.mxu0 0.0
        %1462 = vmatpush1.msra.mxu0 0.0
        %1463 = vmatprep.subr.mxu0 0.0
        %1464 = vmatpush1.msra.mxu0 0.0
        %1465 = vmatprep.subr.mxu0 0.0
        %1466 = vmatpush1.msra.mxu0 0.0
        %1467 = vmatprep.mubr.f32.mxu0 0.0
        %1468 = vmatmul.mubr.f32.gmra.mrb[0].mxu0 %v1398
        %v1469 = vpop.f32.mrb[0].mxu0
        %v1470 = vadd.f32 0.0, %v1469
        %v1471 = vpop.f32.mrb[0].mxu0
        %1472 = vmatprep.mubr.f32.mxu0 0.0
        %1473 = vmatmul.mubr.f32.gmra.mrb[0].mxu0 %v1401
        %v1474 = vpop.f32.mrb[0].mxu0
        %v1475 = vadd.f32 0.0, %v1474
        %v1476 = vpop.f32.mrb[0].mxu0
        %1477 = vdwg.mxu0
        %v1478 = vld [vmem:[%s4 + $0x40] sm:$0xff]
        %v1479 = vld [vmem:[%s4 + $0x48] sm:$0xff]
        %v1480 = vld [vmem:[%s4 + $0x50] sm:$0xff]
        %v1481 = vld [vmem:[%s4 + $0x58] sm:$0xff]
        %v1483 = vsel %vm708, %v1470, 0
        %v1486 = vsel %vm708, %v1475, 0
        %1488 = vmatprep.subr.mxu0 0.0
        %1489 = vmatpush1.msra.mxu0 %v1478
        %1490 = vmatprep.subr.mxu0 0.0
        %1491 = vmatpush1.msra.mxu0 %v1479
        %1492 = vmatprep.subr.mxu0 0.0
        %1493 = vmatpush1.msra.mxu0 %v1480
        %1494 = vmatprep.subr.mxu0 0.0
        %1495 = vmatpush1.msra.mxu0 %v1481
        %1496 = vmatprep.subr.mxu0 0.0
        %1497 = vmatpush1.msra.mxu0 0.0
        %1498 = vmatprep.subr.mxu0 0.0
        %1499 = vmatpush1.msra.mxu0 0.0
        %1500 = vmatprep.subr.mxu0 0.0
        %1501 = vmatpush1.msra.mxu0 0.0
        %1502 = vmatprep.subr.mxu0 0.0
        %1503 = vmatpush1.msra.mxu0 0.0
        %1504 = vmatprep.subr.mxu0 0.0
        %1505 = vmatpush1.msra.mxu0 0.0
        %1506 = vmatprep.subr.mxu0 0.0
        %1507 = vmatpush1.msra.mxu0 0.0
        %1508 = vmatprep.subr.mxu0 0.0
        %1509 = vmatpush1.msra.mxu0 0.0
        %1510 = vmatprep.subr.mxu0 0.0
        %1511 = vmatpush1.msra.mxu0 0.0
        %1512 = vmatprep.subr.mxu0 0.0
        %1513 = vmatpush1.msra.mxu0 0.0
        %1514 = vmatprep.subr.mxu0 0.0
        %1515 = vmatpush1.msra.mxu0 0.0
        %1516 = vmatprep.subr.mxu0 0.0
        %1517 = vmatpush1.msra.mxu0 0.0
        %1518 = vmatprep.subr.mxu0 0.0
        %1519 = vmatpush1.msra.mxu0 0.0
        %1520 = vmatprep.subr.mxu0 0.0
        %1521 = vmatpush1.msra.mxu0 0.0
        %1522 = vmatprep.subr.mxu0 0.0
        %1523 = vmatpush1.msra.mxu0 0.0
        %1524 = vmatprep.subr.mxu0 0.0
        %1525 = vmatpush1.msra.mxu0 0.0
        %1526 = vmatprep.subr.mxu0 0.0
        %1527 = vmatpush1.msra.mxu0 0.0
        %1528 = vmatprep.subr.mxu0 0.0
        %1529 = vmatpush1.msra.mxu0 0.0
        %1530 = vmatprep.subr.mxu0 0.0
        %1531 = vmatpush1.msra.mxu0 0.0
        %1532 = vmatprep.subr.mxu0 0.0
        %1533 = vmatpush1.msra.mxu0 0.0
        %1534 = vmatprep.subr.mxu0 0.0
        %1535 = vmatpush1.msra.mxu0 0.0
        %1536 = vmatprep.subr.mxu0 0.0
        %1537 = vmatpush1.msra.mxu0 0.0
        %1538 = vmatprep.subr.mxu0 0.0
        %1539 = vmatpush1.msra.mxu0 0.0
        %1540 = vmatprep.subr.mxu0 0.0
        %1541 = vmatpush1.msra.mxu0 0.0
        %1542 = vmatprep.subr.mxu0 0.0
        %1543 = vmatpush1.msra.mxu0 0.0
        %1544 = vmatprep.subr.mxu0 0.0
        %1545 = vmatpush1.msra.mxu0 0.0
        %1546 = vmatprep.subr.mxu0 0.0
        %1547 = vmatpush1.msra.mxu0 0.0
        %1548 = vmatprep.subr.mxu0 0.0
        %1549 = vmatpush1.msra.mxu0 0.0
        %1550 = vmatprep.subr.mxu0 0.0
        %1551 = vmatpush1.msra.mxu0 0.0
        %1552 = vmatprep.mubr.f32.mxu0 0.0
        %1553 = vmatmul.mubr.f32.gmra.mrb[0].mxu0 %v1483
        %v1554 = vpop.f32.mrb[0].mxu0
        %v1555 = vadd.f32 0.0, %v1554
        %v1556 = vpop.f32.mrb[0].mxu0
        %1557 = vmatprep.mubr.f32.mxu0 0.0
        %1558 = vmatmul.mubr.f32.gmra.mrb[0].mxu0 %v1486
        %v1559 = vpop.f32.mrb[0].mxu0
        %v1560 = vadd.f32 0.0, %v1559
        %v1561 = vpop.f32.mrb[0].mxu0
        %1562 = vdwg.mxu0
        %v1563 = vadd.f32 %v1268, %v1555
        %v1564 = vadd.f32 %v1273, %v1560
        %1565 = vrot.lane.b32.xlu0 %v699, 32
        %v1566 = vpop.permute.xlu0 %1565
        %1567 = vrot.lane.b32.xlu0 %v700, 32
        %v1568 = vpop.permute.xlu0 %1567
        %1569 = vrot.lane.b32.xlu0 %v616, 32
        %v1570 = vpop.permute.xlu0 %1569
        %1571 = vrot.lane.b32.xlu0 %v622, 32
        %v1572 = vpop.permute.xlu0 %1571
        %v1573 = vsel %vm708, %v1566, 0
        %v1575 = vsel %vm708, %v1568, 0
        %v1577 = vsel %vm708, %v1570, 0
        %v1579 = vsel %vm708, %v1572, 0
        %1581 = vmatprep.subr.mxu0 0.0
        %1582 = vmatpush1.xpose.msra.mxu0 %v1577
        %1583 = vmatprep.subr.mxu0 0.0
        %1584 = vmatpush1.xpose.msra.mxu0 %v1579
        %1585 = vmatprep.subr.mxu0 0.0
        %1586 = vmatpush1.xpose.msra.mxu0 0.0
        %1587 = vmatprep.subr.mxu0 0.0
        %1588 = vmatpush1.xpose.msra.mxu0 0.0
        %1589 = vmatprep.subr.mxu0 0.0
        %1590 = vmatpush1.xpose.msra.mxu0 0.0
        %1591 = vmatprep.subr.mxu0 0.0
        %1592 = vmatpush1.xpose.msra.mxu0 0.0
        %1593 = vmatprep.subr.mxu0 0.0
        %1594 = vmatpush1.xpose.msra.mxu0 0.0
        %1595 = vmatprep.subr.mxu0 0.0
        %1596 = vmatpush1.xpose.msra.mxu0 0.0
        %1597 = vmatprep.subr.mxu0 0.0
        %1598 = vmatpush1.xpose.msra.mxu0 0.0
        %1599 = vmatprep.subr.mxu0 0.0
        %1600 = vmatpush1.xpose.msra.mxu0 0.0
        %1601 = vmatprep.subr.mxu0 0.0
        %1602 = vmatpush1.xpose.msra.mxu0 0.0
        %1603 = vmatprep.subr.mxu0 0.0
        %1604 = vmatpush1.xpose.msra.mxu0 0.0
        %1605 = vmatprep.subr.mxu0 0.0
        %1606 = vmatpush1.xpose.msra.mxu0 0.0
        %1607 = vmatprep.subr.mxu0 0.0
        %1608 = vmatpush1.xpose.msra.mxu0 0.0
        %1609 = vmatprep.subr.mxu0 0.0
        %1610 = vmatpush1.xpose.msra.mxu0 0.0
        %1611 = vmatprep.subr.mxu0 0.0
        %1612 = vmatpush1.xpose.msra.mxu0 0.0
        %1613 = vmatprep.subr.mxu0 0.0
        %1614 = vmatpush1.xpose.msra.mxu0 0.0
        %1615 = vmatprep.subr.mxu0 0.0
        %1616 = vmatpush1.xpose.msra.mxu0 0.0
        %1617 = vmatprep.subr.mxu0 0.0
        %1618 = vmatpush1.xpose.msra.mxu0 0.0
        %1619 = vmatprep.subr.mxu0 0.0
        %1620 = vmatpush1.xpose.msra.mxu0 0.0
        %1621 = vmatprep.subr.mxu0 0.0
        %1622 = vmatpush1.xpose.msra.mxu0 0.0
        %1623 = vmatprep.subr.mxu0 0.0
        %1624 = vmatpush1.xpose.msra.mxu0 0.0
        %1625 = vmatprep.subr.mxu0 0.0
        %1626 = vmatpush1.xpose.msra.mxu0 0.0
        %1627 = vmatprep.subr.mxu0 0.0
        %1628 = vmatpush1.xpose.msra.mxu0 0.0
        %1629 = vmatprep.subr.mxu0 0.0
        %1630 = vmatpush1.xpose.msra.mxu0 0.0
        %1631 = vmatprep.subr.mxu0 0.0
        %1632 = vmatpush1.xpose.msra.mxu0 0.0
        %1633 = vmatprep.subr.mxu0 0.0
        %1634 = vmatpush1.xpose.msra.mxu0 0.0
        %1635 = vmatprep.subr.mxu0 0.0
        %1636 = vmatpush1.xpose.msra.mxu0 0.0
        %1637 = vmatprep.subr.mxu0 0.0
        %1638 = vmatpush1.xpose.msra.mxu0 0.0
        %1639 = vmatprep.subr.mxu0 0.0
        %1640 = vmatpush1.xpose.msra.mxu0 0.0
        %1641 = vmatprep.subr.mxu0 0.0
        %1642 = vmatpush1.xpose.msra.mxu0 0.0
        %1643 = vmatprep.subr.mxu0 0.0
        %1644 = vmatpush1.xpose.msra.mxu0 0.0
        %1645 = vmatprep.mubr.f32.mxu0 0.0
        %1646 = vmatmul.mubr.f32.gmra.mrb[0].mxu0 %v1573
        %v1647 = vpop.f32.mrb[0].mxu0
        %v1648 = vadd.f32 0.0, %v1647
        %v1649 = vpop.f32.mrb[0].mxu0
        %1650 = vmatprep.mubr.f32.mxu0 0.0
        %1651 = vmatmul.mubr.f32.gmra.mrb[0].mxu0 %v1575
        %v1652 = vpop.f32.mrb[0].mxu0
        %v1653 = vadd.f32 0.0, %v1652
        %v1654 = vpop.f32.mrb[0].mxu0
        %1655 = vdwg.mxu0
        %v1656 = vsel %vm706, %v1648, -inf
        %v1657 = vsel %vm707, %v1653, -inf
        %v1658 = vsel %vm798, %v1656, -inf
        %1659 = vmax.xlane.f32.xlu0 %v1658
        %v1660 = vpop.xlane.xlu0 %1659
        %v1661 = vsel %vm798, %v1657, -inf
        %1662 = vmax.xlane.f32.xlu0 %v1661
        %v1663 = vpop.xlane.xlu0 %1662
        %v1664 = vsub.f32 %v1656, %v1660
        %v1665 = vsub.f32 %v1657, %v1663
        %v1666 = vmul.f32 %v1664, 1.442695
        %v1667 = vpow.pop %v1666
        %v1668 = vmul.f32 %v1665, 1.442695
        %v1669 = vpow.pop %v1668
        %v1670 = vsel %vm798, %v1667, 0.0
        %1671 = vadd.xlane.f32.xlu0 %v1670
        %v1672 = vpop.xlane.xlu0 %1671
        %v1673 = vsel %vm798, %v1669, 0.0
        %1674 = vadd.xlane.f32.xlu0 %v1673
        %v1675 = vpop.xlane.xlu0 %1674
        %v1676 = vrcp.pop %v1672
        %v1677 = vrcp.pop %v1675
        %v1678 = vmul.f32 %v1667, %v1676
        %v1679 = vmul.f32 %v1669, %v1677
        %1680 = vrot.lane.b32.xlu0 %v691, 32
        %v1681 = vpop.permute.xlu0 %1680
        %1682 = vrot.lane.b32.xlu0 %v696, 32
        %v1683 = vpop.permute.xlu0 %1682
        %v1687 = vsel %vm798, %v1678, 0
        %v1690 = vsel %vm798, %v1679, 0
        %1692 = vmatprep.subr.mxu0 0.0
        %1693 = vmatpush1.msra.mxu0 %v1681
        %1694 = vmatprep.subr.mxu0 0.0
        %1695 = vmatpush1.msra.mxu0 %v1683
        %1696 = vmatprep.subr.mxu0 0.0
        %1697 = vmatpush1.msra.mxu0 0.0
        %1698 = vmatprep.subr.mxu0 0.0
        %1699 = vmatpush1.msra.mxu0 0.0
        %1700 = vmatprep.subr.mxu0 0.0
        %1701 = vmatpush1.msra.mxu0 0.0
        %1702 = vmatprep.subr.mxu0 0.0
        %1703 = vmatpush1.msra.mxu0 0.0
        %1704 = vmatprep.subr.mxu0 0.0
        %1705 = vmatpush1.msra.mxu0 0.0
        %1706 = vmatprep.subr.mxu0 0.0
        %1707 = vmatpush1.msra.mxu0 0.0
        %1708 = vmatprep.subr.mxu0 0.0
        %1709 = vmatpush1.msra.mxu0 0.0
        %1710 = vmatprep.subr.mxu0 0.0
        %1711 = vmatpush1.msra.mxu0 0.0
        %1712 = vmatprep.subr.mxu0 0.0
        %1713 = vmatpush1.msra.mxu0 0.0
        %1714 = vmatprep.subr.mxu0 0.0
        %1715 = vmatpush1.msra.mxu0 0.0
        %1716 = vmatprep.subr.mxu0 0.0
        %1717 = vmatpush1.msra.mxu0 0.0
        %1718 = vmatprep.subr.mxu0 0.0
        %1719 = vmatpush1.msra.mxu0 0.0
        %1720 = vmatprep.subr.mxu0 0.0
        %1721 = vmatpush1.msra.mxu0 0.0
        %1722 = vmatprep.subr.mxu0 0.0
        %1723 = vmatpush1.msra.mxu0 0.0
        %1724 = vmatprep.subr.mxu0 0.0
        %1725 = vmatpush1.msra.mxu0 0.0
        %1726 = vmatprep.subr.mxu0 0.0
        %1727 = vmatpush1.msra.mxu0 0.0
        %1728 = vmatprep.subr.mxu0 0.0
        %1729 = vmatpush1.msra.mxu0 0.0
        %1730 = vmatprep.subr.mxu0 0.0
        %1731 = vmatpush1.msra.mxu0 0.0
        %1732 = vmatprep.subr.mxu0 0.0
        %1733 = vmatpush1.msra.mxu0 0.0
        %1734 = vmatprep.subr.mxu0 0.0
        %1735 = vmatpush1.msra.mxu0 0.0
        %1736 = vmatprep.subr.mxu0 0.0
        %1737 = vmatpush1.msra.mxu0 0.0
        %1738 = vmatprep.subr.mxu0 0.0
        %1739 = vmatpush1.msra.mxu0 0.0
        %1740 = vmatprep.subr.mxu0 0.0
        %1741 = vmatpush1.msra.mxu0 0.0
        %1742 = vmatprep.subr.mxu0 0.0
        %1743 = vmatpush1.msra.mxu0 0.0
        %1744 = vmatprep.subr.mxu0 0.0
        %1745 = vmatpush1.msra.mxu0 0.0
        %1746 = vmatprep.subr.mxu0 0.0
        %1747 = vmatpush1.msra.mxu0 0.0
        %1748 = vmatprep.subr.mxu0 0.0
        %1749 = vmatpush1.msra.mxu0 0.0
        %1750 = vmatprep.subr.mxu0 0.0
        %1751 = vmatpush1.msra.mxu0 0.0
        %1752 = vmatprep.subr.mxu0 0.0
        %1753 = vmatpush1.msra.mxu0 0.0
        %1754 = vmatprep.subr.mxu0 0.0
        %1755 = vmatpush1.msra.mxu0 0.0
        %1756 = vmatprep.mubr.f32.mxu0 0.0
        %1757 = vmatmul.mubr.f32.gmra.mrb[0].mxu0 %v1687
        %v1758 = vpop.f32.mrb[0].mxu0
        %v1759 = vadd.f32 0.0, %v1758
        %v1760 = vpop.f32.mrb[0].mxu0
        %1761 = vmatprep.mubr.f32.mxu0 0.0
        %1762 = vmatmul.mubr.f32.gmra.mrb[0].mxu0 %v1690
        %v1763 = vpop.f32.mrb[0].mxu0
        %v1764 = vadd.f32 0.0, %v1763
        %v1765 = vpop.f32.mrb[0].mxu0
        %1766 = vdwg.mxu0
        %v1767 = vld [vmem:[%s4 + $0x60] sm:$0xff]
        %v1768 = vld [vmem:[%s4 + $0x68] sm:$0xff]
        %v1769 = vld [vmem:[%s4 + $0x70] sm:$0xff]
        %v1770 = vld [vmem:[%s4 + $0x78] sm:$0xff]
        %v1772 = vsel %vm708, %v1759, 0
        %v1775 = vsel %vm708, %v1764, 0
        %1777 = vmatprep.subr.mxu0 0.0
        %1778 = vmatpush1.msra.mxu0 %v1767
        %1779 = vmatprep.subr.mxu0 0.0
        %1780 = vmatpush1.msra.mxu0 %v1768
        %1781 = vmatprep.subr.mxu0 0.0
        %1782 = vmatpush1.msra.mxu0 %v1769
        %1783 = vmatprep.subr.mxu0 0.0
        %1784 = vmatpush1.msra.mxu0 %v1770
        %1785 = vmatprep.subr.mxu0 0.0
        %1786 = vmatpush1.msra.mxu0 0.0
        %1787 = vmatprep.subr.mxu0 0.0
        %1788 = vmatpush1.msra.mxu0 0.0
        %1789 = vmatprep.subr.mxu0 0.0
        %1790 = vmatpush1.msra.mxu0 0.0
        %1791 = vmatprep.subr.mxu0 0.0
        %1792 = vmatpush1.msra.mxu0 0.0
        %1793 = vmatprep.subr.mxu0 0.0
        %1794 = vmatpush1.msra.mxu0 0.0
        %1795 = vmatprep.subr.mxu0 0.0
        %1796 = vmatpush1.msra.mxu0 0.0
        %1797 = vmatprep.subr.mxu0 0.0
        %1798 = vmatpush1.msra.mxu0 0.0
        %1799 = vmatprep.subr.mxu0 0.0
        %1800 = vmatpush1.msra.mxu0 0.0
        %1801 = vmatprep.subr.mxu0 0.0
        %1802 = vmatpush1.msra.mxu0 0.0
        %1803 = vmatprep.subr.mxu0 0.0
        %1804 = vmatpush1.msra.mxu0 0.0
        %1805 = vmatprep.subr.mxu0 0.0
        %1806 = vmatpush1.msra.mxu0 0.0
        %1807 = vmatprep.subr.mxu0 0.0
        %1808 = vmatpush1.msra.mxu0 0.0
        %1809 = vmatprep.subr.mxu0 0.0
        %1810 = vmatpush1.msra.mxu0 0.0
        %1811 = vmatprep.subr.mxu0 0.0
        %1812 = vmatpush1.msra.mxu0 0.0
        %1813 = vmatprep.subr.mxu0 0.0
        %1814 = vmatpush1.msra.mxu0 0.0
        %1815 = vmatprep.subr.mxu0 0.0
        %1816 = vmatpush1.msra.mxu0 0.0
        %1817 = vmatprep.subr.mxu0 0.0
        %1818 = vmatpush1.msra.mxu0 0.0
        %1819 = vmatprep.subr.mxu0 0.0
        %1820 = vmatpush1.msra.mxu0 0.0
        %1821 = vmatprep.subr.mxu0 0.0
        %1822 = vmatpush1.msra.mxu0 0.0
        %1823 = vmatprep.subr.mxu0 0.0
        %1824 = vmatpush1.msra.mxu0 0.0
        %1825 = vmatprep.subr.mxu0 0.0
        %1826 = vmatpush1.msra.mxu0 0.0
        %1827 = vmatprep.subr.mxu0 0.0
        %1828 = vmatpush1.msra.mxu0 0.0
        %1829 = vmatprep.subr.mxu0 0.0
        %1830 = vmatpush1.msra.mxu0 0.0
        %1831 = vmatprep.subr.mxu0 0.0
        %1832 = vmatpush1.msra.mxu0 0.0
        %1833 = vmatprep.subr.mxu0 0.0
        %1834 = vmatpush1.msra.mxu0 0.0
        %1835 = vmatprep.subr.mxu0 0.0
        %1836 = vmatpush1.msra.mxu0 0.0
        %1837 = vmatprep.subr.mxu0 0.0
        %1838 = vmatpush1.msra.mxu0 0.0
        %1839 = vmatprep.subr.mxu0 0.0
        %1840 = vmatpush1.msra.mxu0 0.0
        %1841 = vmatprep.mubr.f32.mxu0 0.0
        %1842 = vmatmul.mubr.f32.gmra.mrb[0].mxu0 %v1772
        %v1843 = vpop.f32.mrb[0].mxu0
        %v1844 = vadd.f32 0.0, %v1843
        %v1845 = vpop.f32.mrb[0].mxu0
        %1846 = vmatprep.mubr.f32.mxu0 0.0
        %1847 = vmatmul.mubr.f32.gmra.mrb[0].mxu0 %v1775
        %v1848 = vpop.f32.mrb[0].mxu0
        %v1849 = vadd.f32 0.0, %v1848
        %v1850 = vpop.f32.mrb[0].mxu0
        %1851 = vdwg.mxu0
        %v1852 = vadd.f32 %v1563, %v1844
        %v1853 = vadd.f32 %v1564, %v1849
        %v1854 = vadd.f32 %v456, %v1852
        %v1855 = vadd.f32 %v457, %v1853
        %v1856 = vld [vmem:[%s5] sm:$0x1]
        %v1858 = vlaneseq
        %v1859 = vshrl.u32 %v1858, 7
        %v1860 = vsub.s32 0, %v1859
        %v1861 = vrot.slane %v1856, %v1860
        %v1863 = vadd.f32 %v1854, %v1861
        %v1864 = vadd.f32 %v1855, %v1861
        %v1865 = vld [vmem:[#allocation4] sm:$0x1]
        %v1866 = vld [vmem:[%s7] sm:$0x1]
        %1867 = vadd.xlane.f32.xlu0 %v1863
        %v1868 = vpop.xlane.xlu0 %1867
        %1869 = vadd.xlane.f32.xlu0 %v1864
        %v1870 = vpop.xlane.xlu0 %1869
        %v1871 = vmul.f32 %v1868, %v464
        %v1872 = vmul.f32 %v1870, %v464
        %v1873 = vsub.f32 %v1863, %v1871
        %v1874 = vsub.f32 %v1864, %v1872
        %v1875 = vmul.f32 %v1873, %v1873
        %v1876 = vmul.f32 %v1874, %v1874
        %1877 = vadd.xlane.f32.xlu0 %v1875
        %v1878 = vpop.xlane.xlu0 %1877
        %1879 = vadd.xlane.f32.xlu0 %v1876
        %v1880 = vpop.xlane.xlu0 %1879
        %v1881 = vmul.f32 %v1878, %v464
        %v1882 = vmul.f32 %v1880, %v464
        %v1883 = vadd.f32 %v1881, 1e-05
        %v1884 = vadd.f32 %v1882, 1e-05
        %v1885 = vrsqrt.pop %v1883
        %v1886 = vrsqrt.pop %v1884
        %v1887 = vmul.f32 %v1873, %v1885
        %v1888 = vmul.f32 %v1874, %v1886
        %v1890 = vlaneseq
        %v1891 = vshrl.u32 %v1890, 7
        %v1892 = vsub.s32 0, %v1891
        %v1893 = vrot.slane %v1865, %v1892
        %v1895 = vmul.f32 %v1887, %v1893
        %v1896 = vmul.f32 %v1888, %v1893
        %v1898 = vlaneseq
        %v1899 = vshrl.u32 %v1898, 7
        %v1900 = vsub.s32 0, %v1899
        %v1901 = vrot.slane %v1866, %v1900
        %v1903 = vadd.f32 %v1895, %v1901
        %v1904 = vadd.f32 %v1896, %v1901
        %v1905 = vld [vmem:[%s8] sm:$0xff]
        %v1906 = vld [vmem:[%s8 + $0x8] sm:$0xff]
        %v1907 = vld [vmem:[%s8 + $0x10] sm:$0xff]
        %v1908 = vld [vmem:[%s8 + $0x18] sm:$0xff]
        %v1909 = vld [vmem:[%s8 + $0x20] sm:$0xff]
        %v1910 = vld [vmem:[%s8 + $0x28] sm:$0xff]
        %v1911 = vld [vmem:[%s8 + $0x30] sm:$0xff]
        %v1912 = vld [vmem:[%s8 + $0x38] sm:$0xff]
        %v1913 = vld [vmem:[%s8 + $0x40] sm:$0xff]
        %v1914 = vld [vmem:[%s8 + $0x48] sm:$0xff]
        %v1915 = vld [vmem:[%s8 + $0x50] sm:$0xff]
        %v1916 = vld [vmem:[%s8 + $0x58] sm:$0xff]
        %v1917 = vld [vmem:[%s8 + $0x60] sm:$0xff]
        %v1918 = vld [vmem:[%s8 + $0x68] sm:$0xff]
        %v1919 = vld [vmem:[%s8 + $0x70] sm:$0xff]
        %v1920 = vld [vmem:[%s8 + $0x78] sm:$0xff]
        %v1921 = vld [vmem:[%s8 + $0x80] sm:$0xff]
        %v1922 = vld [vmem:[%s8 + $0x88] sm:$0xff]
        %v1923 = vld [vmem:[%s8 + $0x90] sm:$0xff]
        %v1924 = vld [vmem:[%s8 + $0x98] sm:$0xff]
        %v1925 = vld [vmem:[%s8 + $0xa0] sm:$0xff]
        %v1926 = vld [vmem:[%s8 + $0xa8] sm:$0xff]
        %v1927 = vld [vmem:[%s8 + $0xb0] sm:$0xff]
        %v1928 = vld [vmem:[%s8 + $0xb8] sm:$0xff]
        %v1929 = vld [vmem:[%s8 + $0xc0] sm:$0xff]
        %v1930 = vld [vmem:[%s8 + $0xc8] sm:$0xff]
        %v1931 = vld [vmem:[%s8 + $0xd0] sm:$0xff]
        %v1932 = vld [vmem:[%s8 + $0xd8] sm:$0xff]
        %v1933 = vld [vmem:[%s8 + $0xe0] sm:$0xff]
        %v1934 = vld [vmem:[%s8 + $0xe8] sm:$0xff]
        %v1935 = vld [vmem:[%s8 + $0xf0] sm:$0xff]
        %v1936 = vld [vmem:[%s8 + $0xf8] sm:$0xff]
        %v1937 = vld [vmem:[%s8 + $0x100] sm:$0xff]
        %v1938 = vld [vmem:[%s8 + $0x108] sm:$0xff]
        %v1939 = vld [vmem:[%s8 + $0x110] sm:$0xff]
        %v1940 = vld [vmem:[%s8 + $0x118] sm:$0xff]
        %v1941 = vld [vmem:[%s8 + $0x120] sm:$0xff]
        %v1942 = vld [vmem:[%s8 + $0x128] sm:$0xff]
        %v1943 = vld [vmem:[%s8 + $0x130] sm:$0xff]
        %v1944 = vld [vmem:[%s8 + $0x138] sm:$0xff]
        %v1945 = vld [vmem:[%s8 + $0x140] sm:$0xff]
        %v1946 = vld [vmem:[%s8 + $0x148] sm:$0xff]
        %v1947 = vld [vmem:[%s8 + $0x150] sm:$0xff]
        %v1948 = vld [vmem:[%s8 + $0x158] sm:$0xff]
        %v1949 = vld [vmem:[%s8 + $0x160] sm:$0xff]
        %v1950 = vld [vmem:[%s8 + $0x168] sm:$0xff]
        %v1951 = vld [vmem:[%s8 + $0x170] sm:$0xff]
        %v1952 = vld [vmem:[%s8 + $0x178] sm:$0xff]
        %v1953 = vld [vmem:[%s8 + $0x180] sm:$0xff]
        %v1954 = vld [vmem:[%s8 + $0x188] sm:$0xff]
        %v1955 = vld [vmem:[%s8 + $0x190] sm:$0xff]
        %v1956 = vld [vmem:[%s8 + $0x198] sm:$0xff]
        %v1957 = vld [vmem:[%s8 + $0x1a0] sm:$0xff]
        %v1958 = vld [vmem:[%s8 + $0x1a8] sm:$0xff]
        %v1959 = vld [vmem:[%s8 + $0x1b0] sm:$0xff]
        %v1960 = vld [vmem:[%s8 + $0x1b8] sm:$0xff]
        %v1961 = vld [vmem:[%s8 + $0x1c0] sm:$0xff]
        %v1962 = vld [vmem:[%s8 + $0x1c8] sm:$0xff]
        %v1963 = vld [vmem:[%s8 + $0x1d0] sm:$0xff]
        %v1964 = vld [vmem:[%s8 + $0x1d8] sm:$0xff]
        %v1965 = vld [vmem:[%s8 + $0x1e0] sm:$0xff]
        %v1966 = vld [vmem:[%s8 + $0x1e8] sm:$0xff]
        %v1967 = vld [vmem:[%s8 + $0x1f0] sm:$0xff]
        %v1968 = vld [vmem:[%s8 + $0x1f8] sm:$0xff]
        %v1969 = vld [vmem:[%s9] sm:$0xf]
        %v1971 = vlaneseq
        %v1972 = vshrl.u32 %v1971, 7
        %v1973 = vsub.s32 0, %v1972
        %v1974 = vrot.slane %v1969, %v1973
        %v1975 = vlaneseq
        %v1976 = vshrl.u32 %v1975, 7
        %v1977 = vsub.s32 1, %v1976
        %v1978 = vrot.slane %v1969, %v1977
        %v1979 = vlaneseq
        %v1980 = vshrl.u32 %v1979, 7
        %v1981 = vsub.s32 2, %v1980
        %v1982 = vrot.slane %v1969, %v1981
        %v1983 = vlaneseq
        %v1984 = vshrl.u32 %v1983, 7
        %v1985 = vsub.s32 3, %v1984
        %v1986 = vrot.slane %v1969, %v1985
        %1991 = vmatprep.subr.mxu0 %v1906
        %1992 = vmatpush1.msra.mxu0 %v1905
        %1993 = vmatprep.subr.mxu0 %v1910
        %1994 = vmatpush1.msra.mxu0 %v1909
        %1995 = vmatprep.subr.mxu0 %v1914
        %1996 = vmatpush1.msra.mxu0 %v1913
        %1997 = vmatprep.subr.mxu0 %v1918
        %1998 = vmatpush1.msra.mxu0 %v1917
        %1999 = vmatprep.subr.mxu0 %v1922
        %2000 = vmatpush1.msra.mxu0 %v1921
        %2001 = vmatprep.subr.mxu0 %v1926
        %2002 = vmatpush1.msra.mxu0 %v1925
        %2003 = vmatprep.subr.mxu0 %v1930
        %2004 = vmatpush1.msra.mxu0 %v1929
        %2005 = vmatprep.subr.mxu0 %v1934
        %2006 = vmatpush1.msra.mxu0 %v1933
        %2007 = vmatprep.subr.mxu0 %v1938
        %2008 = vmatpush1.msra.mxu0 %v1937
        %2009 = vmatprep.subr.mxu0 %v1942
        %2010 = vmatpush1.msra.mxu0 %v1941
        %2011 = vmatprep.subr.mxu0 %v1946
        %2012 = vmatpush1.msra.mxu0 %v1945
        %2013 = vmatprep.subr.mxu0 %v1950
        %2014 = vmatpush1.msra.mxu0 %v1949
        %2015 = vmatprep.subr.mxu0 %v1954
        %2016 = vmatpush1.msra.mxu0 %v1953
        %2017 = vmatprep.subr.mxu0 %v1958
        %2018 = vmatpush1.msra.mxu0 %v1957
        %2019 = vmatprep.subr.mxu0 %v1962
        %2020 = vmatpush1.msra.mxu0 %v1961
        %2021 = vmatprep.subr.mxu0 %v1966
        %2022 = vmatpush1.msra.mxu0 %v1965
        %2023 = vmatprep.subr.mxu0 0.0
        %2024 = vmatpush1.msra.mxu0 0.0
        %2025 = vmatprep.subr.mxu0 0.0
        %2026 = vmatpush1.msra.mxu0 0.0
        %2027 = vmatprep.subr.mxu0 0.0
        %2028 = vmatpush1.msra.mxu0 0.0
        %2029 = vmatprep.subr.mxu0 0.0
        %2030 = vmatpush1.msra.mxu0 0.0
        %2031 = vmatprep.subr.mxu0 0.0
        %2032 = vmatpush1.msra.mxu0 0.0
        %2033 = vmatprep.subr.mxu0 0.0
        %2034 = vmatpush1.msra.mxu0 0.0
        %2035 = vmatprep.subr.mxu0 0.0
        %2036 = vmatpush1.msra.mxu0 0.0
        %2037 = vmatprep.subr.mxu0 0.0
        %2038 = vmatpush1.msra.mxu0 0.0
        %2039 = vmatprep.subr.mxu0 0.0
        %2040 = vmatpush1.msra.mxu0 0.0
        %2041 = vmatprep.subr.mxu0 0.0
        %2042 = vmatpush1.msra.mxu0 0.0
        %2043 = vmatprep.subr.mxu0 0.0
        %2044 = vmatpush1.msra.mxu0 0.0
        %2045 = vmatprep.subr.mxu0 0.0
        %2046 = vmatpush1.msra.mxu0 0.0
        %2047 = vmatprep.subr.mxu0 0.0
        %2048 = vmatpush1.msra.mxu0 0.0
        %2049 = vmatprep.subr.mxu0 0.0
        %2050 = vmatpush1.msra.mxu0 0.0
        %2051 = vmatprep.subr.mxu0 0.0
        %2052 = vmatpush1.msra.mxu0 0.0
        %2053 = vmatprep.subr.mxu0 0.0
        %2054 = vmatpush1.msra.mxu0 0.0
        %2055 = vmatprep.mubr.f32.mxu0 0.0
        %2056 = vmatmul.mubr.f32.gmra.mrb[0].mxu0 %v1903
        %v2057 = vpop.f32.mrb[0].mxu0
        %v2058 = vadd.f32 %v1974, %v2057
        %v2059 = vpop.f32.mrb[0].mxu0
        %v2060 = vadd.f32 %v1978, %v2059
        %2061 = vmatprep.mubr.f32.mxu0 0.0
        %2062 = vmatmul.mubr.f32.gmra.mrb[0].mxu0 %v1904
        %v2063 = vpop.f32.mrb[0].mxu0
        %v2064 = vadd.f32 %v1974, %v2063
        %v2065 = vpop.f32.mrb[0].mxu0
        %v2066 = vadd.f32 %v1978, %v2065
        %2067 = vdwg.mxu0
        %2068 = vmatprep.subr.mxu0 %v1908
        %2069 = vmatpush1.msra.mxu0 %v1907
        %2070 = vmatprep.subr.mxu0 %v1912
        %2071 = vmatpush1.msra.mxu0 %v1911
        %2072 = vmatprep.subr.mxu0 %v1916
        %2073 = vmatpush1.msra.mxu0 %v1915
        %2074 = vmatprep.subr.mxu0 %v1920
        %2075 = vmatpush1.msra.mxu0 %v1919
        %2076 = vmatprep.subr.mxu0 %v1924
        %2077 = vmatpush1.msra.mxu0 %v1923
        %2078 = vmatprep.subr.mxu0 %v1928
        %2079 = vmatpush1.msra.mxu0 %v1927
        %2080 = vmatprep.subr.mxu0 %v1932
        %2081 = vmatpush1.msra.mxu0 %v1931
        %2082 = vmatprep.subr.mxu0 %v1936
        %2083 = vmatpush1.msra.mxu0 %v1935
        %2084 = vmatprep.subr.mxu0 %v1940
        %2085 = vmatpush1.msra.mxu0 %v1939
        %2086 = vmatprep.subr.mxu0 %v1944
        %2087 = vmatpush1.msra.mxu0 %v1943
        %2088 = vmatprep.subr.mxu0 %v1948
        %2089 = vmatpush1.msra.mxu0 %v1947
        %2090 = vmatprep.subr.mxu0 %v1952
        %2091 = vmatpush1.msra.mxu0 %v1951
        %2092 = vmatprep.subr.mxu0 %v1956
        %2093 = vmatpush1.msra.mxu0 %v1955
        %2094 = vmatprep.subr.mxu0 %v1960
        %2095 = vmatpush1.msra.mxu0 %v1959
        %2096 = vmatprep.subr.mxu0 %v1964
        %2097 = vmatpush1.msra.mxu0 %v1963
        %2098 = vmatprep.subr.mxu0 %v1968
        %2099 = vmatpush1.msra.mxu0 %v1967
        %2100 = vmatprep.subr.mxu0 0.0
        %2101 = vmatpush1.msra.mxu0 0.0
        %2102 = vmatprep.subr.mxu0 0.0
        %2103 = vmatpush1.msra.mxu0 0.0
        %2104 = vmatprep.subr.mxu0 0.0
        %2105 = vmatpush1.msra.mxu0 0.0
        %2106 = vmatprep.subr.mxu0 0.0
        %2107 = vmatpush1.msra.mxu0 0.0
        %2108 = vmatprep.subr.mxu0 0.0
        %2109 = vmatpush1.msra.mxu0 0.0
        %2110 = vmatprep.subr.mxu0 0.0
        %2111 = vmatpush1.msra.mxu0 0.0
        %2112 = vmatprep.subr.mxu0 0.0
        %2113 = vmatpush1.msra.mxu0 0.0
        %2114 = vmatprep.subr.mxu0 0.0
        %2115 = vmatpush1.msra.mxu0 0.0
        %2116 = vmatprep.subr.mxu0 0.0
        %2117 = vmatpush1.msra.mxu0 0.0
        %2118 = vmatprep.subr.mxu0 0.0
        %2119 = vmatpush1.msra.mxu0 0.0
        %2120 = vmatprep.subr.mxu0 0.0
        %2121 = vmatpush1.msra.mxu0 0.0
        %2122 = vmatprep.subr.mxu0 0.0
        %2123 = vmatpush1.msra.mxu0 0.0
        %2124 = vmatprep.subr.mxu0 0.0
        %2125 = vmatpush1.msra.mxu0 0.0
        %2126 = vmatprep.subr.mxu0 0.0
        %2127 = vmatpush1.msra.mxu0 0.0
        %2128 = vmatprep.subr.mxu0 0.0
        %2129 = vmatpush1.msra.mxu0 0.0
        %2130 = vmatprep.subr.mxu0 0.0
        %2131 = vmatpush1.msra.mxu0 0.0
        %2132 = vmatprep.mubr.f32.mxu0 0.0
        %2133 = vmatmul.mubr.f32.gmra.mrb[0].mxu0 %v1903
        %v2134 = vpop.f32.mrb[0].mxu0
        %v2135 = vadd.f32 %v1982, %v2134
        %v2136 = vpop.f32.mrb[0].mxu0
        %v2137 = vadd.f32 %v1986, %v2136
        %2138 = vmatprep.mubr.f32.mxu0 0.0
        %2139 = vmatmul.mubr.f32.gmra.mrb[0].mxu0 %v1904
        %v2140 = vpop.f32.mrb[0].mxu0
        %v2141 = vadd.f32 %v1982, %v2140
        %v2142 = vpop.f32.mrb[0].mxu0
        %v2143 = vadd.f32 %v1986, %v2142
        %2144 = vdwg.mxu0
        %v2145 = vmax.f32 %v2058, 0.0
        %v2146 = vmax.f32 %v2060, 0.0
        %v2147 = vmax.f32 %v2135, 0.0
        %v2148 = vmax.f32 %v2137, 0.0
        %v2149 = vmax.f32 %v2064, 0.0
        %v2150 = vmax.f32 %v2066, 0.0
        %v2151 = vmax.f32 %v2141, 0.0
        %v2152 = vmax.f32 %v2143, 0.0
        %v2153 = vld [vmem:[#allocation6] sm:$0xff]
        %v2154 = vld [vmem:[#allocation6 + $0x8] sm:$0xff]
        %v2155 = vld [vmem:[#allocation6 + $0x10] sm:$0xff]
        %v2156 = vld [vmem:[#allocation6 + $0x18] sm:$0xff]
        %v2157 = vld [vmem:[#allocation6 + $0x20] sm:$0xff]
        %v2158 = vld [vmem:[#allocation6 + $0x28] sm:$0xff]
        %v2159 = vld [vmem:[#allocation6 + $0x30] sm:$0xff]
        %v2160 = vld [vmem:[#allocation6 + $0x38] sm:$0xff]
        %v2161 = vld [vmem:[#allocation6 + $0x40] sm:$0xff]
        %v2162 = vld [vmem:[#allocation6 + $0x48] sm:$0xff]
        %v2163 = vld [vmem:[#allocation6 + $0x50] sm:$0xff]
        %v2164 = vld [vmem:[#allocation6 + $0x58] sm:$0xff]
        %v2165 = vld [vmem:[#allocation6 + $0x60] sm:$0xff]
        %v2166 = vld [vmem:[#allocation6 + $0x68] sm:$0xff]
        %v2167 = vld [vmem:[#allocation6 + $0x70] sm:$0xff]
        %v2168 = vld [vmem:[#allocation6 + $0x78] sm:$0xff]
        %v2169 = vld [vmem:[#allocation6 + $0x80] sm:$0xff]
        %v2170 = vld [vmem:[#allocation6 + $0x88] sm:$0xff]
        %v2171 = vld [vmem:[#allocation6 + $0x90] sm:$0xff]
        %v2172 = vld [vmem:[#allocation6 + $0x98] sm:$0xff]
        %v2173 = vld [vmem:[#allocation6 + $0xa0] sm:$0xff]
        %v2174 = vld [vmem:[#allocation6 + $0xa8] sm:$0xff]
        %v2175 = vld [vmem:[#allocation6 + $0xb0] sm:$0xff]
        %v2176 = vld [vmem:[#allocation6 + $0xb8] sm:$0xff]
        %v2177 = vld [vmem:[#allocation6 + $0xc0] sm:$0xff]
        %v2178 = vld [vmem:[#allocation6 + $0xc8] sm:$0xff]
        %v2179 = vld [vmem:[#allocation6 + $0xd0] sm:$0xff]
        %v2180 = vld [vmem:[#allocation6 + $0xd8] sm:$0xff]
        %v2181 = vld [vmem:[#allocation6 + $0xe0] sm:$0xff]
        %v2182 = vld [vmem:[#allocation6 + $0xe8] sm:$0xff]
        %v2183 = vld [vmem:[#allocation6 + $0xf0] sm:$0xff]
        %v2184 = vld [vmem:[#allocation6 + $0xf8] sm:$0xff]
        %v2185 = vld [vmem:[#allocation6 + $0x100] sm:$0xff]
        %v2186 = vld [vmem:[#allocation6 + $0x108] sm:$0xff]
        %v2187 = vld [vmem:[#allocation6 + $0x110] sm:$0xff]
        %v2188 = vld [vmem:[#allocation6 + $0x118] sm:$0xff]
        %v2189 = vld [vmem:[#allocation6 + $0x120] sm:$0xff]
        %v2190 = vld [vmem:[#allocation6 + $0x128] sm:$0xff]
        %v2191 = vld [vmem:[#allocation6 + $0x130] sm:$0xff]
        %v2192 = vld [vmem:[#allocation6 + $0x138] sm:$0xff]
        %v2193 = vld [vmem:[#allocation6 + $0x140] sm:$0xff]
        %v2194 = vld [vmem:[#allocation6 + $0x148] sm:$0xff]
        %v2195 = vld [vmem:[#allocation6 + $0x150] sm:$0xff]
        %v2196 = vld [vmem:[#allocation6 + $0x158] sm:$0xff]
        %v2197 = vld [vmem:[#allocation6 + $0x160] sm:$0xff]
        %v2198 = vld [vmem:[#allocation6 + $0x168] sm:$0xff]
        %v2199 = vld [vmem:[#allocation6 + $0x170] sm:$0xff]
        %v2200 = vld [vmem:[#allocation6 + $0x178] sm:$0xff]
        %v2201 = vld [vmem:[#allocation6 + $0x180] sm:$0xff]
        %v2202 = vld [vmem:[#allocation6 + $0x188] sm:$0xff]
        %v2203 = vld [vmem:[#allocation6 + $0x190] sm:$0xff]
        %v2204 = vld [vmem:[#allocation6 + $0x198] sm:$0xff]
        %v2205 = vld [vmem:[#allocation6 + $0x1a0] sm:$0xff]
        %v2206 = vld [vmem:[#allocation6 + $0x1a8] sm:$0xff]
        %v2207 = vld [vmem:[#allocation6 + $0x1b0] sm:$0xff]
        %v2208 = vld [vmem:[#allocation6 + $0x1b8] sm:$0xff]
        %v2209 = vld [vmem:[#allocation6 + $0x1c0] sm:$0xff]
        %v2210 = vld [vmem:[#allocation6 + $0x1c8] sm:$0xff]
        %v2211 = vld [vmem:[#allocation6 + $0x1d0] sm:$0xff]
        %v2212 = vld [vmem:[#allocation6 + $0x1d8] sm:$0xff]
        %v2213 = vld [vmem:[#allocation6 + $0x1e0] sm:$0xff]
        %v2214 = vld [vmem:[#allocation6 + $0x1e8] sm:$0xff]
        %v2215 = vld [vmem:[#allocation6 + $0x1f0] sm:$0xff]
        %v2216 = vld [vmem:[#allocation6 + $0x1f8] sm:$0xff]
        %v2217 = vld [vmem:[%s11] sm:$0x1]
        %v2219 = vlaneseq
        %v2220 = vshrl.u32 %v2219, 7
        %v2221 = vsub.s32 0, %v2220
        %v2222 = vrot.slane %v2217, %v2221
        %2224 = vmatprep.subr.mxu0 0.0
        %2225 = vmatpush1.msra.mxu0 %v2153
        %2226 = vmatprep.subr.mxu0 0.0
        %2227 = vmatpush1.msra.mxu0 %v2154
        %2228 = vmatprep.subr.mxu0 0.0
        %2229 = vmatpush1.msra.mxu0 %v2155
        %2230 = vmatprep.subr.mxu0 0.0
        %2231 = vmatpush1.msra.mxu0 %v2156
        %2232 = vmatprep.subr.mxu0 0.0
        %2233 = vmatpush1.msra.mxu0 %v2157
        %2234 = vmatprep.subr.mxu0 0.0
        %2235 = vmatpush1.msra.mxu0 %v2158
        %2236 = vmatprep.subr.mxu0 0.0
        %2237 = vmatpush1.msra.mxu0 %v2159
        %2238 = vmatprep.subr.mxu0 0.0
        %2239 = vmatpush1.msra.mxu0 %v2160
        %2240 = vmatprep.subr.mxu0 0.0
        %2241 = vmatpush1.msra.mxu0 %v2161
        %2242 = vmatprep.subr.mxu0 0.0
        %2243 = vmatpush1.msra.mxu0 %v2162
        %2244 = vmatprep.subr.mxu0 0.0
        %2245 = vmatpush1.msra.mxu0 %v2163
        %2246 = vmatprep.subr.mxu0 0.0
        %2247 = vmatpush1.msra.mxu0 %v2164
        %2248 = vmatprep.subr.mxu0 0.0
        %2249 = vmatpush1.msra.mxu0 %v2165
        %2250 = vmatprep.subr.mxu0 0.0
        %2251 = vmatpush1.msra.mxu0 %v2166
        %2252 = vmatprep.subr.mxu0 0.0
        %2253 = vmatpush1.msra.mxu0 %v2167
        %2254 = vmatprep.subr.mxu0 0.0
        %2255 = vmatpush1.msra.mxu0 %v2168
        %2256 = vmatprep.subr.mxu0 0.0
        %2257 = vmatpush1.msra.mxu0 %v2169
        %2258 = vmatprep.subr.mxu0 0.0
        %2259 = vmatpush1.msra.mxu0 %v2170
        %2260 = vmatprep.subr.mxu0 0.0
        %2261 = vmatpush1.msra.mxu0 %v2171
        %2262 = vmatprep.subr.mxu0 0.0
        %2263 = vmatpush1.msra.mxu0 %v2172
        %2264 = vmatprep.subr.mxu0 0.0
        %2265 = vmatpush1.msra.mxu0 %v2173
        %2266 = vmatprep.subr.mxu0 0.0
        %2267 = vmatpush1.msra.mxu0 %v2174
        %2268 = vmatprep.subr.mxu0 0.0
        %2269 = vmatpush1.msra.mxu0 %v2175
        %2270 = vmatprep.subr.mxu0 0.0
        %2271 = vmatpush1.msra.mxu0 %v2176
        %2272 = vmatprep.subr.mxu0 0.0
        %2273 = vmatpush1.msra.mxu0 %v2177
        %2274 = vmatprep.subr.mxu0 0.0
        %2275 = vmatpush1.msra.mxu0 %v2178
        %2276 = vmatprep.subr.mxu0 0.0
        %2277 = vmatpush1.msra.mxu0 %v2179
        %2278 = vmatprep.subr.mxu0 0.0
        %2279 = vmatpush1.msra.mxu0 %v2180
        %2280 = vmatprep.subr.mxu0 0.0
        %2281 = vmatpush1.msra.mxu0 %v2181
        %2282 = vmatprep.subr.mxu0 0.0
        %2283 = vmatpush1.msra.mxu0 %v2182
        %2284 = vmatprep.subr.mxu0 0.0
        %2285 = vmatpush1.msra.mxu0 %v2183
        %2286 = vmatprep.subr.mxu0 0.0
        %2287 = vmatpush1.msra.mxu0 %v2184
        %2288 = vmatprep.mubr.f32.mxu0 %v2146
        %2289 = vmatmul.mubr.f32.gmra.mrb[0].mxu0 %v2145
        %v2290 = vpop.f32.mrb[0].mxu0
        %v2291 = vadd.f32 %v2222, %v2290
        %v2292 = vpop.f32.mrb[0].mxu0
        %2293 = vmatprep.mubr.f32.mxu0 %v2150
        %2294 = vmatmul.mubr.f32.gmra.mrb[0].mxu0 %v2149
        %v2295 = vpop.f32.mrb[0].mxu0
        %v2296 = vadd.f32 %v2222, %v2295
        %v2297 = vpop.f32.mrb[0].mxu0
        %2298 = vdwg.mxu0
        %2299 = vmatprep.subr.mxu0 0.0
        %2300 = vmatpush1.msra.mxu0 %v2185
        %2301 = vmatprep.subr.mxu0 0.0
        %2302 = vmatpush1.msra.mxu0 %v2186
        %2303 = vmatprep.subr.mxu0 0.0
        %2304 = vmatpush1.msra.mxu0 %v2187
        %2305 = vmatprep.subr.mxu0 0.0
        %2306 = vmatpush1.msra.mxu0 %v2188
        %2307 = vmatprep.subr.mxu0 0.0
        %2308 = vmatpush1.msra.mxu0 %v2189
        %2309 = vmatprep.subr.mxu0 0.0
        %2310 = vmatpush1.msra.mxu0 %v2190
        %2311 = vmatprep.subr.mxu0 0.0
        %2312 = vmatpush1.msra.mxu0 %v2191
        %2313 = vmatprep.subr.mxu0 0.0
        %2314 = vmatpush1.msra.mxu0 %v2192
        %2315 = vmatprep.subr.mxu0 0.0
        %2316 = vmatpush1.msra.mxu0 %v2193
        %2317 = vmatprep.subr.mxu0 0.0
        %2318 = vmatpush1.msra.mxu0 %v2194
        %2319 = vmatprep.subr.mxu0 0.0
        %2320 = vmatpush1.msra.mxu0 %v2195
        %2321 = vmatprep.subr.mxu0 0.0
        %2322 = vmatpush1.msra.mxu0 %v2196
        %2323 = vmatprep.subr.mxu0 0.0
        %2324 = vmatpush1.msra.mxu0 %v2197
        %2325 = vmatprep.subr.mxu0 0.0
        %2326 = vmatpush1.msra.mxu0 %v2198
        %2327 = vmatprep.subr.mxu0 0.0
        %2328 = vmatpush1.msra.mxu0 %v2199
        %2329 = vmatprep.subr.mxu0 0.0
        %2330 = vmatpush1.msra.mxu0 %v2200
        %2331 = vmatprep.subr.mxu0 0.0
        %2332 = vmatpush1.msra.mxu0 %v2201
        %2333 = vmatprep.subr.mxu0 0.0
        %2334 = vmatpush1.msra.mxu0 %v2202
        %2335 = vmatprep.subr.mxu0 0.0
        %2336 = vmatpush1.msra.mxu0 %v2203
        %2337 = vmatprep.subr.mxu0 0.0
        %2338 = vmatpush1.msra.mxu0 %v2204
        %2339 = vmatprep.subr.mxu0 0.0
        %2340 = vmatpush1.msra.mxu0 %v2205
        %2341 = vmatprep.subr.mxu0 0.0
        %2342 = vmatpush1.msra.mxu0 %v2206
        %2343 = vmatprep.subr.mxu0 0.0
        %2344 = vmatpush1.msra.mxu0 %v2207
        %2345 = vmatprep.subr.mxu0 0.0
        %2346 = vmatpush1.msra.mxu0 %v2208
        %2347 = vmatprep.subr.mxu0 0.0
        %2348 = vmatpush1.msra.mxu0 %v2209
        %2349 = vmatprep.subr.mxu0 0.0
        %2350 = vmatpush1.msra.mxu0 %v2210
        %2351 = vmatprep.subr.mxu0 0.0
        %2352 = vmatpush1.msra.mxu0 %v2211
        %2353 = vmatprep.subr.mxu0 0.0
        %2354 = vmatpush1.msra.mxu0 %v2212
        %2355 = vmatprep.subr.mxu0 0.0
        %2356 = vmatpush1.msra.mxu0 %v2213
        %2357 = vmatprep.subr.mxu0 0.0
        %2358 = vmatpush1.msra.mxu0 %v2214
        %2359 = vmatprep.subr.mxu0 0.0
        %2360 = vmatpush1.msra.mxu0 %v2215
        %2361 = vmatprep.subr.mxu0 0.0
        %2362 = vmatpush1.msra.mxu0 %v2216
        %2363 = vmatprep.mubr.f32.mxu0 %v2148
        %2364 = vmatmul.mubr.f32.gmra.mrb[0].mxu0 %v2147
        %v2365 = vpop.f32.mrb[0].mxu0
        %v2366 = vadd.f32 %v2291, %v2365
        %v2367 = vpop.f32.mrb[0].mxu0
        %2368 = vmatprep.mubr.f32.mxu0 %v2152
        %2369 = vmatmul.mubr.f32.gmra.mrb[0].mxu0 %v2151
        %v2370 = vpop.f32.mrb[0].mxu0
        %v2371 = vadd.f32 %v2296, %v2370
        %v2372 = vpop.f32.mrb[0].mxu0
        %2373 = vdwg.mxu0
        %v2374 = vadd.f32 %v1863, %v2366
        %v2375 = vadd.f32 %v1864, %v2371
        %2376 = vst [vmem:[%s455] sm:$0xff] %v2374
        %2377 = vst [vmem:[%s455 + $0x8] sm:$0xff] %v2375
        %p2378 = scmp.lt.s32.totalorder %s25, 1
        %s2379 = scalar_select %p2378, %s25, 1
        %s2380 = smul.addr %s2379, 2
        %s2381 = smul.addr %s2380, 8
        %s2382 = scalar_lea.vmem %s12, %s2381
        // Predicated region
        $region81: #{bigram_lm_forward.7} parent=67 // pred_check
          %p2383 = pneg %p300
        $region82: #{bigram_lm_forward.7} parent=67 // pred_check_branch
          %2385 = sbr.rel (%p2383) target = $region84
        $region83: #{bigram_lm_forward.7} parent=67 // pred_region
          _
        $region84: #{bigram_lm_forward.7} parent=67 // pred_fallthru
          _
      $region68: #{bigram_lm_forward.7} parent=5 // pred_fallthru
        _
      %p2386 = scmp.le.s32.totalorder 2, %s20
      // Predicated region
      $region85: #{bigram_lm_forward.7} parent=5 // pred_check
        %p2387 = pneg %p2386
      $region86: #{bigram_lm_forward.7} parent=5 // pred_check_branch
        %2389 = sbr.rel (%p2387) target = $region88
      $region87: #{bigram_lm_forward.7} parent=5 // pred_region
        %s2390 = ssub.s32 %s20, 2
        // Predicated region
        $region89: #{bigram_lm_forward.7} parent=87 // pred_check
          %p2391 = pneg %p306
        $region90: #{bigram_lm_forward.7} parent=87 // pred_check_branch
          %2393 = sbr.rel (%p2391) target = $region92
        $region91: #{bigram_lm_forward.7} parent=87 // pred_region
          %p2394 = scmp.lt.s32.totalorder %s26, 1
          %s2395 = scalar_select %p2394, %s26, 1
          %s2396 = smul.addr %s2395, 2
          %s2397 = smul.addr %s2396, 8
          %s2398 = scalar_lea.vmem %s12, %s2397
        $region92: #{bigram_lm_forward.7} parent=87 // pred_fallthru
          _
      $region88: #{bigram_lm_forward.7} parent=5 // pred_fallthru
        _
    $region6: #{bigram_lm_forward.7} parent=1 // loop_footer
      %s24 = sadd.s32 1, %s20
    $region7: #{bigram_lm_forward.7} parent=1 // loop_footer_branch
      %19 = sbr.rel target = $region3
    $region8: #{bigram_lm_forward.7} parent=1 // loop_exit
      _
    %2399 = vsyncpa [#allocation3], 1
    %s2400 = scalar_lea.sflag [#allocation3], 1
    %2401 = vsyncpa %s2400, 1
    %2402 = vsyncpa [#allocation5], 1

// kernel: bigram_lm_forward.8
$region0: #{bigram_lm_forward.8}
  #allocation0 [shape = 'u32[]', space=smem, size = 0x4, offset = 0x4, fixed_abs, tag = 'smem constant byte address 0x4 - core index']
  #allocation1 [shape = 'u32[144,128]{1,0:T(1,128)}', space=vmem, size = 0x12000, scoped, tag = 'internal scratch']
  %s0 = inlined_call_operand.vmem [shape: f32[2,16,128], index: 0, kind: input, shape index: {}]
  %s1 = inlined_call_operand.vmem [shape: f32[1,128], index: 1, kind: input, shape index: {}]
  %s2 = inlined_call_operand.vmem [shape: f32[1,128], index: 2, kind: input, shape index: {}]
  %s3 = inlined_call_operand.vmem [shape: f32[128,384], index: 3, kind: input, shape index: {}]
  %s4 = inlined_call_operand.vmem [shape: f32[128,128], index: 4, kind: input, shape index: {}]
  %s5 = inlined_call_operand.vmem [shape: f32[1,128], index: 5, kind: input, shape index: {}]
  %s6 = inlined_call_operand.vmem [shape: f32[1,128], index: 6, kind: input, shape index: {}]
  %s7 = inlined_call_operand.vmem [shape: f32[1,128], index: 7, kind: input, shape index: {}]
  %s8 = inlined_call_operand.vmem [shape: f32[128,512], index: 8, kind: input, shape index: {}]
  %s9 = inlined_call_operand.vmem [shape: f32[1,512], index: 9, kind: input, shape index: {}]
  %s10 = inlined_call_operand.vmem [shape: f32[512,128], index: 10, kind: input, shape index: {}]
  %s11 = inlined_call_operand.vmem [shape: f32[1,128], index: 11, kind: input, shape index: {}]
  %s12 = inlined_call_operand.vmem [shape: f32[2,16,128], index: 12, kind: output, shape index: {}]
  %s13 = sld [smem:[#allocation0]]
  $region81: #{bigram_lm_forward.8} parent=0
    _
  %s15 = ssub.s32 1, %s13
  %s16 = scalar_select 0, %s15, %s13
  loop: start=0, step=1, limit=4
  $region2: #{bigram_lm_forward.8} parent=0 // loop_pre_header
    _
  $region3: #{bigram_lm_forward.8} parent=0 // loop_header
    %s18 = sphi 0, %s22
    %p19 = scmp.ge.s32.totalorder %s18, 4
    %s28 = sphi 0, %s30
    %s31 = sphi 0, %s28
    %s32 = sphi 0, %s31
    %s48 = sphi 0, %s32
    %s52 = sphi 0, %s52
    %s54 = sphi 0, %s52
    %s55 = sphi 0, %s54
    %s69 = sphi 0, %s55
    %s73 = sphi 0, %s73
    %s75 = sphi 0, %s73
    %s76 = sphi 0, %s75
    %s90 = sphi 0, %s76
    %s94 = sphi 0, %s94
    %s96 = sphi 0, %s94
    %s97 = sphi 0, %s96
    %s111 = sphi 0, %s97
    %s115 = sphi 0, %s115
    %s117 = sphi 0, %s115
    %s118 = sphi 0, %s117
    %s132 = sphi 0, %s118
    %s136 = sphi 0, %s136
    %s138 = sphi 0, %s136
    %s139 = sphi 0, %s138
    %s153 = sphi 0, %s139
    %s157 = sphi 0, %s157
    %s159 = sphi 0, %s157
    %s160 = sphi 0, %s159
    %s174 = sphi 0, %s160
    %s178 = sphi 0, %s178
    %s180 = sphi 0, %s178
    %s181 = sphi 0, %s180
    %s195 = sphi 0, %s181
    %s199 = sphi 0, %s199
    %s201 = sphi 0, %s199
    %s202 = sphi 0, %s201
    %s216 = sphi 0, %s202
    %s220 = sphi 0, %s220
    %s222 = sphi 0, %s220
    %s223 = sphi 0, %s222
    %s237 = sphi 0, %s223
    %s241 = sphi 0, %s241
    %s243 = sphi 0, %s241
    %s244 = sphi 0, %s243
    %s258 = sphi 0, %s244
    %s262 = sphi 0, %s262
    %s264 = sphi 0, %s262
    %s265 = sphi 0, %s264
    %s279 = sphi 0, %s265
    %s285 = sphi 0, %s287
    %s288 = sphi 0, %s285
    %s289 = sphi 0, %s288
    %s305 = sphi 0, %s289
  $region4: #{bigram_lm_forward.8} parent=0 // loop_header_branch
    %21 = sbr.rel (%p19) target = $region8
  $region5: #{bigram_lm_forward.8} parent=0 // loop_body
    %s23 = ssub.s32 %s18, 1
    %s24 = ssub.s32 %s18, 2
    %s25 = sadd.s32 %s18, 1
    %s26 = ssub.s32 %s18, %s25
    %p27 = scmp.eq.s32.totalorder %s26, 0
    %s29 = sadd.s32 %s28, 1
    %s30 = scalar_select %p27, %s28, %s29
    %p33 = pneg %p27
    %p34 = scmp.eq.s32.totalorder %s18, 1
    %p35 = por %p33, %p34
    %p36 = scmp.ne.s32.totalorder %s28, %s31
    %p37 = scmp.eq.s32.totalorder %s18, 0
    %p38 = por %p36, %p37
    %p39 = scmp.ne.s32.totalorder %s28, %s31
    %p40 = scmp.eq.s32.totalorder %s23, 1
    %p41 = por %p39, %p40
    %p42 = scmp.ne.s32.totalorder %s31, %s32
    %p43 = scmp.eq.s32.totalorder %s23, 0
    %p44 = por %p42, %p43
    %p45 = scmp.ne.s32.totalorder %s31, %s32
    %p46 = scmp.eq.s32.totalorder %s24, 1
    %p47 = por %p45, %p46
    %p49 = scmp.ne.s32.totalorder %s32, %s48
    %p50 = scmp.eq.s32.totalorder %s24, 0
    %p51 = por %p49, %p50
    %s53 = sadd.s32 %s52, 1
    %p56 = scmp.eq.s32.totalorder %s18, 1
    %p57 = scmp.ne.s32.totalorder %s52, %s54
    %p58 = scmp.eq.s32.totalorder %s18, 0
    %p59 = por %p57, %p58
    %p60 = scmp.ne.s32.totalorder %s52, %s54
    %p61 = scmp.eq.s32.totalorder %s23, 1
    %p62 = por %p60, %p61
    %p63 = scmp.ne.s32.totalorder %s54, %s55
    %p64 = scmp.eq.s32.totalorder %s23, 0
    %p65 = por %p63, %p64
    %p66 = scmp.ne.s32.totalorder %s54, %s55
    %p67 = scmp.eq.s32.totalorder %s24, 1
    %p68 = por %p66, %p67
    %p70 = scmp.ne.s32.totalorder %s55, %s69
    %p71 = scmp.eq.s32.totalorder %s24, 0
    %p72 = por %p70, %p71
    %s74 = sadd.s32 %s73, 1
    %p77 = scmp.eq.s32.totalorder %s18, 1
    %p78 = scmp.ne.s32.totalorder %s73, %s75
    %p79 = scmp.eq.s32.totalorder %s18, 0
    %p80 = por %p78, %p79
    %p81 = scmp.ne.s32.totalorder %s73, %s75
    %p82 = scmp.eq.s32.totalorder %s23, 1
    %p83 = por %p81, %p82
    %p84 = scmp.ne.s32.totalorder %s75, %s76
    %p85 = scmp.eq.s32.totalorder %s23, 0
    %p86 = por %p84, %p85
    %p87 = scmp.ne.s32.totalorder %s75, %s76
    %p88 = scmp.eq.s32.totalorder %s24, 1
    %p89 = por %p87, %p88
    %p91 = scmp.ne.s32.totalorder %s76, %s90
    %p92 = scmp.eq.s32.totalorder %s24, 0
    %p93 = por %p91, %p92
    %s95 = sadd.s32 %s94, 1
    %p98 = scmp.eq.s32.totalorder %s18, 1
    %p99 = scmp.ne.s32.totalorder %s94, %s96
    %p100 = scmp.eq.s32.totalorder %s18, 0
    %p101 = por %p99, %p100
    %p102 = scmp.ne.s32.totalorder %s94, %s96
    %p103 = scmp.eq.s32.totalorder %s23, 1
    %p104 = por %p102, %p103
    %p105 = scmp.ne.s32.totalorder %s96, %s97
    %p106 = scmp.eq.s32.totalorder %s23, 0
    %p107 = por %p105, %p106
    %p108 = scmp.ne.s32.totalorder %s96, %s97
    %p109 = scmp.eq.s32.totalorder %s24, 1
    %p110 = por %p108, %p109
    %p112 = scmp.ne.s32.totalorder %s97, %s111
    %p113 = scmp.eq.s32.totalorder %s24, 0
    %p114 = por %p112, %p113
    %s116 = sadd.s32 %s115, 1
    %p119 = scmp.eq.s32.totalorder %s18, 1
    %p120 = scmp.ne.s32.totalorder %s115, %s117
    %p121 = scmp.eq.s32.totalorder %s18, 0
    %p122 = por %p120, %p121
    %p123 = scmp.ne.s32.totalorder %s115, %s117
    %p124 = scmp.eq.s32.totalorder %s23, 1
    %p125 = por %p123, %p124
    %p126 = scmp.ne.s32.totalorder %s117, %s118
    %p127 = scmp.eq.s32.totalorder %s23, 0
    %p128 = por %p126, %p127
    %p129 = scmp.ne.s32.totalorder %s117, %s118
    %p130 = scmp.eq.s32.totalorder %s24, 1
    %p131 = por %p129, %p130
    %p133 = scmp.ne.s32.totalorder %s118, %s132
    %p134 = scmp.eq.s32.totalorder %s24, 0
    %p135 = por %p133, %p134
    %s137 = sadd.s32 %s136, 1
    %p140 = scmp.eq.s32.totalorder %s18, 1
    %p141 = scmp.ne.s32.totalorder %s136, %s138
    %p142 = scmp.eq.s32.totalorder %s18, 0
    %p143 = por %p141, %p142
    %p144 = scmp.ne.s32.totalorder %s136, %s138
    %p145 = scmp.eq.s32.totalorder %s23, 1
    %p146 = por %p144, %p145
    %p147 = scmp.ne.s32.totalorder %s138, %s139
    %p148 = scmp.eq.s32.totalorder %s23, 0
    %p149 = por %p147, %p148
    %p150 = scmp.ne.s32.totalorder %s138, %s139
    %p151 = scmp.eq.s32.totalorder %s24, 1
    %p152 = por %p150, %p151
    %p154 = scmp.ne.s32.totalorder %s139, %s153
    %p155 = scmp.eq.s32.totalorder %s24, 0
    %p156 = por %p154, %p155
    %s158 = sadd.s32 %s157, 1
    %p161 = scmp.eq.s32.totalorder %s18, 1
    %p162 = scmp.ne.s32.totalorder %s157, %s159
    %p163 = scmp.eq.s32.totalorder %s18, 0
    %p164 = por %p162, %p163
    %p165 = scmp.ne.s32.totalorder %s157, %s159
    %p166 = scmp.eq.s32.totalorder %s23, 1
    %p167 = por %p165, %p166
    %p168 = scmp.ne.s32.totalorder %s159, %s160
    %p169 = scmp.eq.s32.totalorder %s23, 0
    %p170 = por %p168, %p169
    %p171 = scmp.ne.s32.totalorder %s159, %s160
    %p172 = scmp.eq.s32.totalorder %s24, 1
    %p173 = por %p171, %p172
    %p175 = scmp.ne.s32.totalorder %s160, %s174
    %p176 = scmp.eq.s32.totalorder %s24, 0
    %p177 = por %p175, %p176
    %s179 = sadd.s32 %s178, 1
    %p182 = scmp.eq.s32.totalorder %s18, 1
    %p183 = scmp.ne.s32.totalorder %s178, %s180
    %p184 = scmp.eq.s32.totalorder %s18, 0
    %p185 = por %p183, %p184
    %p186 = scmp.ne.s32.totalorder %s178, %s180
    %p187 = scmp.eq.s32.totalorder %s23, 1
    %p188 = por %p186, %p187
    %p189 = scmp.ne.s32.totalorder %s180, %s181
    %p190 = scmp.eq.s32.totalorder %s23, 0
    %p191 = por %p189, %p190
    %p192 = scmp.ne.s32.totalorder %s180, %s181
    %p193 = scmp.eq.s32.totalorder %s24, 1
    %p194 = por %p192, %p193
    %p196 = scmp.ne.s32.totalorder %s181, %s195
    %p197 = scmp.eq.s32.totalorder %s24, 0
    %p198 = por %p196, %p197
    %s200 = sadd.s32 %s199, 1
    %p203 = scmp.eq.s32.totalorder %s18, 1
    %p204 = scmp.ne.s32.totalorder %s199, %s201
    %p205 = scmp.eq.s32.totalorder %s18, 0
    %p206 = por %p204, %p205
    %p207 = scmp.ne.s32.totalorder %s199, %s201
    %p208 = scmp.eq.s32.totalorder %s23, 1
    %p209 = por %p207, %p208
    %p210 = scmp.ne.s32.totalorder %s201, %s202
    %p211 = scmp.eq.s32.totalorder %s23, 0
    %p212 = por %p210, %p211
    %p213 = scmp.ne.s32.totalorder %s201, %s202
    %p214 = scmp.eq.s32.totalorder %s24, 1
    %p215 = por %p213, %p214
    %p217 = scmp.ne.s32.totalorder %s202, %s216
    %p218 = scmp.eq.s32.totalorder %s24, 0
    %p219 = por %p217, %p218
    %s221 = sadd.s32 %s220, 1
    %p224 = scmp.eq.s32.totalorder %s18, 1
    %p225 = scmp.ne.s32.totalorder %s220, %s222
    %p226 = scmp.eq.s32.totalorder %s18, 0
    %p227 = por %p225, %p226
    %p228 = scmp.ne.s32.totalorder %s220, %s222
    %p229 = scmp.eq.s32.totalorder %s23, 1
    %p230 = por %p228, %p229
    %p231 = scmp.ne.s32.totalorder %s222, %s223
    %p232 = scmp.eq.s32.totalorder %s23, 0
    %p233 = por %p231, %p232
    %p234 = scmp.ne.s32.totalorder %s222, %s223
    %p235 = scmp.eq.s32.totalorder %s24, 1
    %p236 = por %p234, %p235
    %p238 = scmp.ne.s32.totalorder %s223, %s237
    %p239 = scmp.eq.s32.totalorder %s24, 0
    %p240 = por %p238, %p239
    %s242 = sadd.s32 %s241, 1
    %p245 = scmp.eq.s32.totalorder %s18, 1
    %p246 = scmp.ne.s32.totalorder %s241, %s243
    %p247 = scmp.eq.s32.totalorder %s18, 0
    %p248 = por %p246, %p247
    %p249 = scmp.ne.s32.totalorder %s241, %s243
    %p250 = scmp.eq.s32.totalorder %s23, 1
    %p251 = por %p249, %p250
    %p252 = scmp.ne.s32.totalorder %s243, %s244
    %p253 = scmp.eq.s32.totalorder %s23, 0
    %p254 = por %p252, %p253
    %p255 = scmp.ne.s32.totalorder %s243, %s244
    %p256 = scmp.eq.s32.totalorder %s24, 1
    %p257 = por %p255, %p256
    %p259 = scmp.ne.s32.totalorder %s244, %s258
    %p260 = scmp.eq.s32.totalorder %s24, 0
    %p261 = por %p259, %p260
    %s263 = sadd.s32 %s262, 1
    %p266 = scmp.eq.s32.totalorder %s18, 1
    %p267 = scmp.ne.s32.totalorder %s262, %s264
    %p268 = scmp.eq.s32.totalorder %s18, 0
    %p269 = por %p267, %p268
    %p270 = scmp.ne.s32.totalorder %s262, %s264
    %p271 = scmp.eq.s32.totalorder %s23, 1
    %p272 = por %p270, %p271
    %p273 = scmp.ne.s32.totalorder %s264, %s265
    %p274 = scmp.eq.s32.totalorder %s23, 0
    %p275 = por %p273, %p274
    %p276 = scmp.ne.s32.totalorder %s264, %s265
    %p277 = scmp.eq.s32.totalorder %s24, 1
    %p278 = por %p276, %p277
    %p280 = scmp.ne.s32.totalorder %s265, %s279
    %p281 = scmp.eq.s32.totalorder %s24, 0
    %p282 = por %p280, %p281
    %s283 = ssub.s32 %s18, %s25
    %p284 = scmp.eq.s32.totalorder %s283, 0
    %s286 = sadd.s32 %s285, 1
    %s287 = scalar_select %p284, %s285, %s286
    %p290 = pneg %p284
    %p291 = scmp.eq.s32.totalorder %s18, 1
    %p292 = por %p290, %p291
    %p293 = scmp.ne.s32.totalorder %s285, %s288
    %p294 = scmp.eq.s32.totalorder %s18, 0
    %p295 = por %p293, %p294
    %p296 = scmp.ne.s32.totalorder %s285, %s288
    %p297 = scmp.eq.s32.totalorder %s23, 1
    %p298 = por %p296, %p297
    %p299 = scmp.ne.s32.totalorder %s288, %s289
    %p300 = scmp.eq.s32.totalorder %s23, 0
    %p301 = por %p299, %p300
    %p302 = scmp.ne.s32.totalorder %s288, %s289
    %p303 = scmp.eq.s32.totalorder %s24, 1
    %p304 = por %p302, %p303
    %p306 = scmp.ne.s32.totalorder %s289, %s305
    %p307 = scmp.eq.s32.totalorder %s24, 0
    %p308 = por %p306, %p307
    %p309 = scmp.le.s32.totalorder 1, %s18
    %p310 = scmp.lt.s32.totalorder %s18, 3
    %p311 = pnand %p309, %p310
    %p312 = pneg %p311
    // Predicated region
    $region9: #{bigram_lm_forward.8} parent=5 // pred_check
      _
    $region10: #{bigram_lm_forward.8} parent=5 // pred_check_branch
      %314 = sbr.rel (%p311) target = $region12
    $region11: #{bigram_lm_forward.8} parent=5 // pred_region
      %s315 = ssub.s32 %s18, 1
      // Predicated region
      $region13: #{bigram_lm_forward.8} parent=11 // pred_check
        %p316 = pneg %p65
      $region14: #{bigram_lm_forward.8} parent=11 // pred_check_branch
        %318 = sbr.rel (%p316) target = $region16
      $region15: #{bigram_lm_forward.8} parent=11 // pred_region
        _
      $region16: #{bigram_lm_forward.8} parent=11 // pred_fallthru
        _
      // Predicated region
      $region17: #{bigram_lm_forward.8} parent=11 // pred_check
        %p319 = pneg %p86
      $region18: #{bigram_lm_forward.8} parent=11 // pred_check_branch
        %321 = sbr.rel (%p319) target = $region20
      $region19: #{bigram_lm_forward.8} parent=11 // pred_region
        _
      $region20: #{bigram_lm_forward.8} parent=11 // pred_fallthru
        _
      // Predicated region
      $region21: #{bigram_lm_forward.8} parent=11 // pred_check
        %p322 = pneg %p107
      $region22: #{bigram_lm_forward.8} parent=11 // pred_check_branch
        %324 = sbr.rel (%p322) target = $region24
      $region23: #{bigram_lm_forward.8} parent=11 // pred_region
        _
      $region24: #{bigram_lm_forward.8} parent=11 // pred_fallthru
        _
      // Predicated region
      $region25: #{bigram_lm_forward.8} parent=11 // pred_check
        %p325 = pneg %p128
      $region26: #{bigram_lm_forward.8} parent=11 // pred_check_branch
        %327 = sbr.rel (%p325) target = $region28
      $region27: #{bigram_lm_forward.8} parent=11 // pred_region
        _
      $region28: #{bigram_lm_forward.8} parent=11 // pred_fallthru
        _
      // Predicated region
      $region29: #{bigram_lm_forward.8} parent=11 // pred_check
        %p328 = pneg %p149
      $region30: #{bigram_lm_forward.8} parent=11 // pred_check_branch
        %330 = sbr.rel (%p328) target = $region32
      $region31: #{bigram_lm_forward.8} parent=11 // pred_region
        _
      $region32: #{bigram_lm_forward.8} parent=11 // pred_fallthru
        _
      // Predicated region
      $region33: #{bigram_lm_forward.8} parent=11 // pred_check
        %p331 = pneg %p170
      $region34: #{bigram_lm_forward.8} parent=11 // pred_check_branch
        %333 = sbr.rel (%p331) target = $region36
      $region35: #{bigram_lm_forward.8} parent=11 // pred_region
        _
      $region36: #{bigram_lm_forward.8} parent=11 // pred_fallthru
        _
      // Predicated region
      $region37: #{bigram_lm_forward.8} parent=11 // pred_check
        %p334 = pneg %p191
      $region38: #{bigram_lm_forward.8} parent=11 // pred_check_branch
        %336 = sbr.rel (%p334) target = $region40
      $region39: #{bigram_lm_forward.8} parent=11 // pred_region
        _
      $region40: #{bigram_lm_forward.8} parent=11 // pred_fallthru
        _
      // Predicated region
      $region41: #{bigram_lm_forward.8} parent=11 // pred_check
        %p337 = pneg %p212
      $region42: #{bigram_lm_forward.8} parent=11 // pred_check_branch
        %339 = sbr.rel (%p337) target = $region44
      $region43: #{bigram_lm_forward.8} parent=11 // pred_region
        _
      $region44: #{bigram_lm_forward.8} parent=11 // pred_fallthru
        _
      // Predicated region
      $region45: #{bigram_lm_forward.8} parent=11 // pred_check
        %p340 = pneg %p233
      $region46: #{bigram_lm_forward.8} parent=11 // pred_check_branch
        %342 = sbr.rel (%p340) target = $region48
      $region47: #{bigram_lm_forward.8} parent=11 // pred_region
        _
      $region48: #{bigram_lm_forward.8} parent=11 // pred_fallthru
        _
      // Predicated region
      $region49: #{bigram_lm_forward.8} parent=11 // pred_check
        %p343 = pneg %p254
      $region50: #{bigram_lm_forward.8} parent=11 // pred_check_branch
        %345 = sbr.rel (%p343) target = $region52
      $region51: #{bigram_lm_forward.8} parent=11 // pred_region
        _
      $region52: #{bigram_lm_forward.8} parent=11 // pred_fallthru
        _
      // Predicated region
      $region53: #{bigram_lm_forward.8} parent=11 // pred_check
        %p346 = pneg %p275
      $region54: #{bigram_lm_forward.8} parent=11 // pred_check_branch
        %348 = sbr.rel (%p346) target = $region56
      $region55: #{bigram_lm_forward.8} parent=11 // pred_region
        _
      $region56: #{bigram_lm_forward.8} parent=11 // pred_fallthru
        _
    $region12: #{bigram_lm_forward.8} parent=5 // pred_fallthru
      _
    %p349 = scmp.lt.s32.totalorder %s18, 2
    // Predicated region
    $region57: #{bigram_lm_forward.8} parent=5 // pred_check
      %p350 = pneg %p349
    $region58: #{bigram_lm_forward.8} parent=5 // pred_check_branch
      %352 = sbr.rel (%p350) target = $region60
    $region59: #{bigram_lm_forward.8} parent=5 // pred_region
      // Predicated region
      $region61: #{bigram_lm_forward.8} parent=59 // pred_check
        %p353 = pneg %p38
      $region62: #{bigram_lm_forward.8} parent=59 // pred_check_branch
        %355 = sbr.rel (%p353) target = $region64
      $region63: #{bigram_lm_forward.8} parent=59 // pred_region
        %p356 = scmp.lt.s32.totalorder %s18, 1
        %s357 = scalar_select %p356, %s18, 1
        %s358 = smul.addr %s357, 2
        %s359 = smul.addr %s358, 8
        %s360 = scalar_lea.vmem %s0, %s359
      $region64: #{bigram_lm_forward.8} parent=59 // pred_fallthru
        _
    $region60: #{bigram_lm_forward.8} parent=5 // pred_fallthru
      _
    %p361 = scmp.le.s32.totalorder 1, %s18
    %p362 = scmp.lt.s32.totalorder %s18, 3
    %p363 = pnand %p361, %p362
    %p364 = pneg %p363
    // Predicated region
    $region65: #{bigram_lm_forward.8} parent=5 // pred_check
      _
    $region66: #{bigram_lm_forward.8} parent=5 // pred_check_branch
      %366 = sbr.rel (%p363) target = $region68
    $region67: #{bigram_lm_forward.8} parent=5 // pred_region
      %s367 = ssub.s32 %s18, 1
      %p368 = scmp.lt.s32.totalorder %s23, 1
      %s369 = scalar_select %p368, %s23, 1
      %s370 = smul.addr %s369, 2
      %s371 = smul.addr %s370, 8
      %s372 = scalar_lea.vmem %s0, %s371
      %p373 = pneg %p44
      %p374 = pneg %p41
      %p375 = pneg %p65
      %p376 = pneg %p62
      %p377 = pneg %p86
      %p378 = pneg %p83
      %p379 = pneg %p107
      %p380 = pneg %p104
      %p381 = pneg %p128
      %p382 = pneg %p125
      %p383 = pneg %p149
      %p384 = pneg %p146
      %p385 = pneg %p170
      %p386 = pneg %p167
      %p387 = pneg %p191
      %p388 = pneg %p188
      %p389 = pneg %p212
      %p390 = pneg %p209
      %p391 = pneg %p233
      %p392 = pneg %p230
      %p393 = pneg %p254
      %p394 = pneg %p251
      %p395 = pneg %p275
      %p396 = pneg %p272
      %p397 = pneg %p301
      %p398 = pneg %p298
      %p399 = scmp.lt.s32.totalorder %s23, 1
      %s400 = scalar_select %p399, %s23, 1
      %s401 = smul.addr %s400, 2
      %s402 = smul.addr %s401, 8
      %s403 = scalar_lea.vmem %s12, %s402
      %p404 = scmp.lt.s32.totalorder %s23, 1
      %s405 = scalar_select %p404, %s23, 1
      %s406 = smul.addr %s405, 2
      %s407 = smul.addr %s406, 8
      %s408 = scalar_lea.vmem %s0, %s407
      %p409 = scmp.lt.s32.totalorder %s23, 1
      %s410 = scalar_select %p409, %s23, 1
      %s411 = smul.addr %s410, 2
      %s412 = smul.addr %s411, 8
      %s413 = scalar_lea.vmem %s12, %s412
      %v414 = vld [vmem:[%s408] sm:$0xff]
      %v415 = vld [vmem:[%s408 + $0x8] sm:$0xff]
      %v416 = vld [vmem:[%s1] sm:$0x1]
      %v417 = vld [vmem:[%s2] sm:$0x1]
      %418 = vadd.xlane.f32.xlu0 %v414
      %v419 = vpop.xlane.xlu0 %418
      %420 = vadd.xlane.f32.xlu0 %v415
      %v421 = vpop.xlane.xlu0 %420
      %v422 = vrcp.pop 128.0
      %v423 = vmul.f32 %v419, %v422
      %v424 = vmul.f32 %v421, %v422
      %v425 = vsub.f32 %v414, %v423
      %v426 = vsub.f32 %v415, %v424
      %v427 = vmul.f32 %v425, %v425
      %v428 = vmul.f32 %v426, %v426
      %429 = vadd.xlane.f32.xlu0 %v427
      %v430 = vpop.xlane.xlu0 %429
      %431 = vadd.xlane.f32.xlu0 %v428
      %v432 = vpop.xlane.xlu0 %431
      %v433 = vmul.f32 %v430, %v422
      %v434 = vmul.f32 %v432, %v422
      %v435 = vadd.f32 %v433, 1e-05
      %v436 = vadd.f32 %v434, 1e-05
      %v437 = vrsqrt.pop %v435
      %v438 = vrsqrt.pop %v436
      %v439 = vmul.f32 %v425, %v437
      %v440 = vmul.f32 %v426, %v438
      %v442 = vlaneseq
      %v443 = vshrl.u32 %v442, 7
      %v444 = vsub.s32 0, %v443
      %v445 = vrot.slane %v416, %v444
      %v447 = vmul.f32 %v439, %v445
      %v448 = vmul.f32 %v440, %v445
      %v450 = vlaneseq
      %v451 = vshrl.u32 %v450, 7
      %v452 = vsub.s32 0, %v451
      %v453 = vrot.slane %v417, %v452
      %v455 = vadd.f32 %v447, %v453
      %v456 = vadd.f32 %v448, %v453
      %v457 = vld [vmem:[%s3] sm:$0xff]
      %v458 = vld [vmem:[%s3 + $0x8] sm:$0xff]
      %v459 = vld [vmem:[%s3 + $0x10] sm:$0xff]
      %v460 = vld [vmem:[%s3 + $0x18] sm:$0xff]
      %v461 = vld [vmem:[%s3 + $0x20] sm:$0xff]
      %v462 = vld [vmem:[%s3 + $0x28] sm:$0xff]
      %v463 = vld [vmem:[%s3 + $0x30] sm:$0xff]
      %v464 = vld [vmem:[%s3 + $0x38] sm:$0xff]
      %v465 = vld [vmem:[%s3 + $0x40] sm:$0xff]
      %v466 = vld [vmem:[%s3 + $0x48] sm:$0xff]
      %v467 = vld [vmem:[%s3 + $0x50] sm:$0xff]
      %v468 = vld [vmem:[%s3 + $0x58] sm:$0xff]
      %v469 = vld [vmem:[%s3 + $0x60] sm:$0xff]
      %v470 = vld [vmem:[%s3 + $0x68] sm:$0xff]
      %v471 = vld [vmem:[%s3 + $0x70] sm:$0xff]
      %v472 = vld [vmem:[%s3 + $0x78] sm:$0xff]
      %v473 = vld [vmem:[%s3 + $0x80] sm:$0xff]
      %v474 = vld [vmem:[%s3 + $0x88] sm:$0xff]
      %v475 = vld [vmem:[%s3 + $0x90] sm:$0xff]
      %v476 = vld [vmem:[%s3 + $0x98] sm:$0xff]
      %v477 = vld [vmem:[%s3 + $0xa0] sm:$0xff]
      %v478 = vld [vmem:[%s3 + $0xa8] sm:$0xff]
      %v479 = vld [vmem:[%s3 + $0xb0] sm:$0xff]
      %v480 = vld [vmem:[%s3 + $0xb8] sm:$0xff]
      %v481 = vld [vmem:[%s3 + $0xc0] sm:$0xff]
      %v482 = vld [vmem:[%s3 + $0xc8] sm:$0xff]
      %v483 = vld [vmem:[%s3 + $0xd0] sm:$0xff]
      %v484 = vld [vmem:[%s3 + $0xd8] sm:$0xff]
      %v485 = vld [vmem:[%s3 + $0xe0] sm:$0xff]
      %v486 = vld [vmem:[%s3 + $0xe8] sm:$0xff]
      %v487 = vld [vmem:[%s3 + $0xf0] sm:$0xff]
      %v488 = vld [vmem:[%s3 + $0xf8] sm:$0xff]
      %v489 = vld [vmem:[%s3 + $0x100] sm:$0xff]
      %v490 = vld [vmem:[%s3 + $0x108] sm:$0xff]
      %v491 = vld [vmem:[%s3 + $0x110] sm:$0xff]
      %v492 = vld [vmem:[%s3 + $0x118] sm:$0xff]
      %v493 = vld [vmem:[%s3 + $0x120] sm:$0xff]
      %v494 = vld [vmem:[%s3 + $0x128] sm:$0xff]
      %v495 = vld [vmem:[%s3 + $0x130] sm:$0xff]
      %v496 = vld [vmem:[%s3 + $0x138] sm:$0xff]
      %v497 = vld [vmem:[%s3 + $0x140] sm:$0xff]
      %v498 = vld [vmem:[%s3 + $0x148] sm:$0xff]
      %v499 = vld [vmem:[%s3 + $0x150] sm:$0xff]
      %v500 = vld [vmem:[%s3 + $0x158] sm:$0xff]
      %v501 = vld [vmem:[%s3 + $0x160] sm:$0xff]
      %v502 = vld [vmem:[%s3 + $0x168] sm:$0xff]
      %v503 = vld [vmem:[%s3 + $0x170] sm:$0xff]
      %v504 = vld [vmem:[%s3 + $0x178] sm:$0xff]
      %505 = vmatprep.subr.mxu0 %v458
      %506 = vmatpush1.msra.mxu0 %v457
      %507 = vmatprep.subr.mxu0 %v461
      %508 = vmatpush1.msra.mxu0 %v460
      %509 = vmatprep.subr.mxu0 %v464
      %510 = vmatpush1.msra.mxu0 %v463
      %511 = vmatprep.subr.mxu0 %v467
      %512 = vmatpush1.msra.mxu0 %v466
      %513 = vmatprep.subr.mxu0 %v470
      %514 = vmatpush1.msra.mxu0 %v469
      %515 = vmatprep.subr.mxu0 %v473
      %516 = vmatpush1.msra.mxu0 %v472
      %517 = vmatprep.subr.mxu0 %v476
      %518 = vmatpush1.msra.mxu0 %v475
      %519 = vmatprep.subr.mxu0 %v479
      %520 = vmatpush1.msra.mxu0 %v478
      %521 = vmatprep.subr.mxu0 %v482
      %522 = vmatpush1.msra.mxu0 %v481
      %523 = vmatprep.subr.mxu0 %v485
      %524 = vmatpush1.msra.mxu0 %v484
      %525 = vmatprep.subr.mxu0 %v488
      %526 = vmatpush1.msra.mxu0 %v487
      %527 = vmatprep.subr.mxu0 %v491
      %528 = vmatpush1.msra.mxu0 %v490
      %529 = vmatprep.subr.mxu0 %v494
      %530 = vmatpush1.msra.mxu0 %v493
      %531 = vmatprep.subr.mxu0 %v497
      %532 = vmatpush1.msra.mxu0 %v496
      %533 = vmatprep.subr.mxu0 %v500
      %534 = vmatpush1.msra.mxu0 %v499
      %535 = vmatprep.subr.mxu0 %v503
      %536 = vmatpush1.msra.mxu0 %v502
      %537 = vmatprep.subr.mxu0 0.0
      %538 = vmatpush1.msra.mxu0 0.0
      %539 = vmatprep.subr.mxu0 0.0
      %540 = vmatpush1.msra.mxu0 0.0
      %541 = vmatprep.subr.mxu0 0.0
      %542 = vmatpush1.msra.mxu0 0.0
      %543 = vmatprep.subr.mxu0 0.0
      %544 = vmatpush1.msra.mxu0 0.0
      %545 = vmatprep.subr.mxu0 0.0
      %546 = vmatpush1.msra.mxu0 0.0
      %547 = vmatprep.subr.mxu0 0.0
      %548 = vmatpush1.msra.mxu0 0.0
      %549 = vmatprep.subr.mxu0 0.0
      %550 = vmatpush1.msra.mxu0 0.0
      %551 = vmatprep.subr.mxu0 0.0
      %552 = vmatpush1.msra.mxu0 0.0
      %553 = vmatprep.subr.mxu0 0.0
      %554 = vmatpush1.msra.mxu0 0.0
      %555 = vmatprep.subr.mxu0 0.0
      %556 = vmatpush1.msra.mxu0 0.0
      %557 = vmatprep.subr.mxu0 0.0
      %558 = vmatpush1.msra.mxu0 0.0
      %559 = vmatprep.subr.mxu0 0.0
      %560 = vmatpush1.msra.mxu0 0.0
      %561 = vmatprep.subr.mxu0 0.0
      %562 = vmatpush1.msra.mxu0 0.0
      %563 = vmatprep.subr.mxu0 0.0
      %564 = vmatpush1.msra.mxu0 0.0
      %565 = vmatprep.subr.mxu0 0.0
      %566 = vmatpush1.msra.mxu0 0.0
      %567 = vmatprep.subr.mxu0 0.0
      %568 = vmatpush1.msra.mxu0 0.0
      %569 = vmatprep.mubr.f32.mxu0 0.0
      %570 = vmatmul.mubr.f32.gmra.mrb[0].mxu0 %v455
      %v571 = vpop.f32.mrb[0].mxu0
      %v572 = vadd.f32 0.0, %v571
      %v573 = vpop.f32.mrb[0].mxu0
      %v574 = vadd.f32 0.0, %v573
      %575 = vmatprep.mubr.f32.mxu0 0.0
      %576 = vmatmul.mubr.f32.gmra.mrb[0].mxu0 %v456
      %v577 = vpop.f32.mrb[0].mxu0
      %v578 = vadd.f32 0.0, %v577
      %v579 = vpop.f32.mrb[0].mxu0
      %v580 = vadd.f32 0.0, %v579
      %581 = vdwg.mxu0
      %582 = vmatprep.subr.mxu0 0.0
      %583 = vmatpush1.msra.mxu0 %v459
      %584 = vmatprep.subr.mxu0 0.0
      %585 = vmatpush1.msra.mxu0 %v462
      %586 = vmatprep.subr.mxu0 0.0
      %587 = vmatpush1.msra.mxu0 %v465
      %588 = vmatprep.subr.mxu0 0.0
      %589 = vmatpush1.msra.mxu0 %v468
      %590 = vmatprep.subr.mxu0 0.0
      %591 = vmatpush1.msra.mxu0 %v471
      %592 = vmatprep.subr.mxu0 0.0
      %593 = vmatpush1.msra.mxu0 %v474
      %594 = vmatprep.subr.mxu0 0.0
      %595 = vmatpush1.msra.mxu0 %v477
      %596 = vmatprep.subr.mxu0 0.0
      %597 = vmatpush1.msra.mxu0 %v480
      %598 = vmatprep.subr.mxu0 0.0
      %599 = vmatpush1.msra.mxu0 %v483
      %600 = vmatprep.subr.mxu0 0.0
      %601 = vmatpush1.msra.mxu0 %v486
      %602 = vmatprep.subr.mxu0 0.0
      %603 = vmatpush1.msra.mxu0 %v489
      %604 = vmatprep.subr.mxu0 0.0
      %605 = vmatpush1.msra.mxu0 %v492
      %606 = vmatprep.subr.mxu0 0.0
      %607 = vmatpush1.msra.mxu0 %v495
      %608 = vmatprep.subr.mxu0 0.0
      %609 = vmatpush1.msra.mxu0 %v498
      %610 = vmatprep.subr.mxu0 0.0
      %611 = vmatpush1.msra.mxu0 %v501
      %612 = vmatprep.subr.mxu0 0.0
      %613 = vmatpush1.msra.mxu0 %v504
      %614 = vmatprep.subr.mxu0 0.0
      %615 = vmatpush1.msra.mxu0 0.0
      %616 = vmatprep.subr.mxu0 0.0
      %617 = vmatpush1.msra.mxu0 0.0
      %618 = vmatprep.subr.mxu0 0.0
      %619 = vmatpush1.msra.mxu0 0.0
      %620 = vmatprep.subr.mxu0 0.0
      %621 = vmatpush1.msra.mxu0 0.0
      %622 = vmatprep.subr.mxu0 0.0
      %623 = vmatpush1.msra.mxu0 0.0
      %624 = vmatprep.subr.mxu0 0.0
      %625 = vmatpush1.msra.mxu0 0.0
      %626 = vmatprep.subr.mxu0 0.0
      %627 = vmatpush1.msra.mxu0 0.0
      %628 = vmatprep.subr.mxu0 0.0
      %629 = vmatpush1.msra.mxu0 0.0
      %630 = vmatprep.subr.mxu0 0.0
      %631 = vmatpush1.msra.mxu0 0.0
      %632 = vmatprep.subr.mxu0 0.0
      %633 = vmatpush1.msra.mxu0 0.0
      %634 = vmatprep.subr.mxu0 0.0
      %635 = vmatpush1.msra.mxu0 0.0
      %636 = vmatprep.subr.mxu0 0.0
      %637 = vmatpush1.msra.mxu0 0.0
      %638 = vmatprep.subr.mxu0 0.0
      %639 = vmatpush1.msra.mxu0 0.0
      %640 = vmatprep.subr.mxu0 0.0
      %641 = vmatpush1.msra.mxu0 0.0
      %642 = vmatprep.subr.mxu0 0.0
      %643 = vmatpush1.msra.mxu0 0.0
      %644 = vmatprep.subr.mxu0 0.0
      %645 = vmatpush1.msra.mxu0 0.0
      %646 = vmatprep.mubr.f32.mxu0 0.0
      %647 = vmatmul.mubr.f32.gmra.mrb[0].mxu0 %v455
      %v648 = vpop.f32.mrb[0].mxu0
      %v649 = vadd.f32 0.0, %v648
      %v650 = vpop.f32.mrb[0].mxu0
      %651 = vmatprep.mubr.f32.mxu0 0.0
      %652 = vmatmul.mubr.f32.gmra.mrb[0].mxu0 %v456
      %v653 = vpop.f32.mrb[0].mxu0
      %v654 = vadd.f32 0.0, %v653
      %v655 = vpop.f32.mrb[0].mxu0
      %656 = vdwg.mxu0
      %v657 = vmul.f32 %v572, 0.088388346
      %v658 = vmul.f32 %v578, 0.088388346
      %v659 = vlaneseq
      %v660 = vshrl.u32 %v659, 7
      %v661 = vadd.s32 %v660, 8
      %v662 = vlaneseq
      %v663 = vand.u32 %v662, 127
      %vm664 = vcmp.le.s32.totalorder %v663, %v660
      %vm665 = vcmp.le.s32.totalorder %v663, %v661
      %vm666 = vcmask 261120
      %v668 = vsel %vm666, %v657, 0
      %v671 = vsel %vm666, %v658, 0
      %v674 = vsel %vm666, %v574, 0
      %v677 = vsel %vm666, %v580, 0
      %679 = vmatprep.subr.mxu0 0.0
      %680 = vmatpush1.xpose.msra.mxu0 %v674
      %681 = vmatprep.subr.mxu0 0.0
      %682 = vmatpush1.xpose.msra.mxu0 %v677
      %683 = vmatprep.subr.mxu0 0.0
      %684 = vmatpush1.xpose.msra.mxu0 0.0
      %685 = vmatprep.subr.mxu0 0.0
      %686 = vmatpush1.xpose.msra.mxu0 0.0
      %687 = vmatprep.subr.mxu0 0.0
      %688 = vmatpush1.xpose.msra.mxu0 0.0
      %689 = vmatprep.subr.mxu0 0.0
      %690 = vmatpush1.xpose.msra.mxu0 0.0
      %691 = vmatprep.subr.mxu0 0.0
      %692 = vmatpush1.xpose.msra.mxu0 0.0
      %693 = vmatprep.subr.mxu0 0.0
      %694 = vmatpush1.xpose.msra.mxu0 0.0
      %695 = vmatprep.subr.mxu0 0.0
      %696 = vmatpush1.xpose.msra.mxu0 0.0
      %697 = vmatprep.subr.mxu0 0.0
      %698 = vmatpush1.xpose.msra.mxu0 0.0
      %699 = vmatprep.subr.mxu0 0.0
      %700 = vmatpush1.xpose.msra.mxu0 0.0
      %701 = vmatprep.subr.mxu0 0.0
      %702 = vmatpush1.xpose.msra.mxu0 0.0
      %703 = vmatprep.subr.mxu0 0.0
      %704 = vmatpush1.xpose.msra.mxu0 0.0
      %705 = vmatprep.subr.mxu0 0.0
      %706 = vmatpush1.xpose.msra.mxu0 0.0
      %707 = vmatprep.subr.mxu0 0.0
      %708 = vmatpush1.xpose.msra.mxu0 0.0
      %709 = vmatprep.subr.mxu0 0.0
      %710 = vmatpush1.xpose.msra.mxu0 0.0
      %711 = vmatprep.subr.mxu0 0.0
      %712 = vmatpush1.xpose.msra.mxu0 0.0
      %713 = vmatprep.subr.mxu0 0.0
      %714 = vmatpush1.xpose.msra.mxu0 0.0
      %715 = vmatprep.subr.mxu0 0.0
      %716 = vmatpush1.xpose.msra.mxu0 0.0
      %717 = vmatprep.subr.mxu0 0.0
      %718 = vmatpush1.xpose.msra.mxu0 0.0
      %719 = vmatprep.subr.mxu0 0.0
      %720 = vmatpush1.xpose.msra.mxu0 0.0
      %721 = vmatprep.subr.mxu0 0.0
      %722 = vmatpush1.xpose.msra.mxu0 0.0
      %723 = vmatprep.subr.mxu0 0.0
      %724 = vmatpush1.xpose.msra.mxu0 0.0
      %725 = vmatprep.subr.mxu0 0.0
      %726 = vmatpush1.xpose.msra.mxu0 0.0
      %727 = vmatprep.subr.mxu0 0.0
      %728 = vmatpush1.xpose.msra.mxu0 0.0
      %729 = vmatprep.subr.mxu0 0.0
      %730 = vmatpush1.xpose.msra.mxu0 0.0
      %731 = vmatprep.subr.mxu0 0.0
      %732 = vmatpush1.xpose.msra.mxu0 0.0
      %733 = vmatprep.subr.mxu0 0.0
      %734 = vmatpush1.xpose.msra.mxu0 0.0
      %735 = vmatprep.subr.mxu0 0.0
      %736 = vmatpush1.xpose.msra.mxu0 0.0
      %737 = vmatprep.subr.mxu0 0.0
      %738 = vmatpush1.xpose.msra.mxu0 0.0
      %739 = vmatprep.subr.mxu0 0.0
      %740 = vmatpush1.xpose.msra.mxu0 0.0
      %741 = vmatprep.subr.mxu0 0.0
      %742 = vmatpush1.xpose.msra.mxu0 0.0
      %743 = vmatprep.mubr.f32.mxu0 0.0
      %744 = vmatmul.mubr.f32.gmra.mrb[0].mxu0 %v668
      %v745 = vpop.f32.mrb[0].mxu0
      %v746 = vadd.f32 0.0, %v745
      %v747 = vpop.f32.mrb[0].mxu0
      %748 = vmatprep.mubr.f32.mxu0 0.0
      %749 = vmatmul.mubr.f32.gmra.mrb[0].mxu0 %v671
      %v750 = vpop.f32.mrb[0].mxu0
      %v751 = vadd.f32 0.0, %v750
      %v752 = vpop.f32.mrb[0].mxu0
      %753 = vdwg.mxu0
      %v754 = vsel %vm664, %v746, -inf
      %v755 = vsel %vm665, %v751, -inf
      %vm756 = vcmask 130048
      %v757 = vsel %vm756, %v754, -inf
      %758 = vmax.xlane.f32.xlu0 %v757
      %v759 = vpop.xlane.xlu0 %758
      %v760 = vsel %vm756, %v755, -inf
      %761 = vmax.xlane.f32.xlu0 %v760
      %v762 = vpop.xlane.xlu0 %761
      %v763 = vsub.f32 %v754, %v759
      %v764 = vsub.f32 %v755, %v762
      %v765 = vmul.f32 %v763, 1.442695
      %v766 = vpow.pop %v765
      %v767 = vmul.f32 %v764, 1.442695
      %v768 = vpow.pop %v767
      %v769 = vsel %vm756, %v766, 0.0
      %770 = vadd.xlane.f32.xlu0 %v769
      %v771 = vpop.xlane.xlu0 %770
      %v772 = vsel %vm756, %v768, 0.0
      %773 = vadd.xlane.f32.xlu0 %v772
      %v774 = vpop.xlane.xlu0 %773
      %v775 = vrcp.pop %v771
      %v776 = vrcp.pop %v774
      %v777 = vmul.f32 %v766, %v775
      %v778 = vmul.f32 %v768, %v776
      %v780 = vsel %vm756, %v777, 0
      %v783 = vsel %vm756, %v778, 0
      %785 = vmatprep.subr.mxu0 0.0
      %786 = vmatpush1.msra.mxu0 %v649
      %787 = vmatprep.subr.mxu0 0.0
      %788 = vmatpush1.msra.mxu0 %v654
      %789 = vmatprep.subr.mxu0 0.0
      %790 = vmatpush1.msra.mxu0 0.0
      %791 = vmatprep.subr.mxu0 0.0
      %792 = vmatpush1.msra.mxu0 0.0
      %793 = vmatprep.subr.mxu0 0.0
      %794 = vmatpush1.msra.mxu0 0.0
      %795 = vmatprep.subr.mxu0 0.0
      %796 = vmatpush1.msra.mxu0 0.0
      %797 = vmatprep.subr.mxu0 0.0
      %798 = vmatpush1.msra.mxu0 0.0
      %799 = vmatprep.subr.mxu0 0.0
      %800 = vmatpush1.msra.mxu0 0.0
      %801 = vmatprep.subr.mxu0 0.0
      %802 = vmatpush1.msra.mxu0 0.0
      %803 = vmatprep.subr.mxu0 0.0
      %804 = vmatpush1.msra.mxu0 0.0
      %805 = vmatprep.subr.mxu0 0.0
      %806 = vmatpush1.msra.mxu0 0.0
      %807 = vmatprep.subr.mxu0 0.0
      %808 = vmatpush1.msra.mxu0 0.0
      %809 = vmatprep.subr.mxu0 0.0
      %810 = vmatpush1.msra.mxu0 0.0
      %811 = vmatprep.subr.mxu0 0.0
      %812 = vmatpush1.msra.mxu0 0.0
      %813 = vmatprep.subr.mxu0 0.0
      %814 = vmatpush1.msra.mxu0 0.0
      %815 = vmatprep.subr.mxu0 0.0
      %816 = vmatpush1.msra.mxu0 0.0
      %817 = vmatprep.subr.mxu0 0.0
      %818 = vmatpush1.msra.mxu0 0.0
      %819 = vmatprep.subr.mxu0 0.0
      %820 = vmatpush1.msra.mxu0 0.0
      %821 = vmatprep.subr.mxu0 0.0
      %822 = vmatpush1.msra.mxu0 0.0
      %823 = vmatprep.subr.mxu0 0.0
      %824 = vmatpush1.msra.mxu0 0.0
      %825 = vmatprep.subr.mxu0 0.0
      %826 = vmatpush1.msra.mxu0 0.0
      %827 = vmatprep.subr.mxu0 0.0
      %828 = vmatpush1.msra.mxu0 0.0
      %829 = vmatprep.subr.mxu0 0.0
      %830 = vmatpush1.msra.mxu0 0.0
      %831 = vmatprep.subr.mxu0 0.0
      %832 = vmatpush1.msra.mxu0 0.0
      %833 = vmatprep.subr.mxu0 0.0
      %834 = vmatpush1.msra.mxu0 0.0
      %835 = vmatprep.subr.mxu0 0.0
      %836 = vmatpush1.msra.mxu0 0.0
      %837 = vmatprep.subr.mxu0 0.0
      %838 = vmatpush1.msra.mxu0 0.0
      %839 = vmatprep.subr.mxu0 0.0
      %840 = vmatpush1.msra.mxu0 0.0
      %841 = vmatprep.subr.mxu0 0.0
      %842 = vmatpush1.msra.mxu0 0.0
      %843 = vmatprep.subr.mxu0 0.0
      %844 = vmatpush1.msra.mxu0 0.0
      %845 = vmatprep.subr.mxu0 0.0
      %846 = vmatpush1.msra.mxu0 0.0
      %847 = vmatprep.subr.mxu0 0.0
      %848 = vmatpush1.msra.mxu0 0.0
      %849 = vmatprep.mubr.f32.mxu0 0.0
      %850 = vmatmul.mubr.f32.gmra.mrb[0].mxu0 %v780
      %v851 = vpop.f32.mrb[0].mxu0
      %v852 = vadd.f32 0.0, %v851
      %v853 = vpop.f32.mrb[0].mxu0
      %854 = vmatprep.mubr.f32.mxu0 0.0
      %855 = vmatmul.mubr.f32.gmra.mrb[0].mxu0 %v783
      %v856 = vpop.f32.mrb[0].mxu0
      %v857 = vadd.f32 0.0, %v856
      %v858 = vpop.f32.mrb[0].mxu0
      %859 = vdwg.mxu0
      %v860 = vld [vmem:[%s4] sm:$0xff]
      %v861 = vld [vmem:[%s4 + $0x8] sm:$0xff]
      %v862 = vld [vmem:[%s4 + $0x10] sm:$0xff]
      %v863 = vld [vmem:[%s4 + $0x18] sm:$0xff]
      %864 = vrot.lane.b32.xlu0 %v657, 96
      %v865 = vpop.permute.xlu0 %864
      %866 = vrot.lane.b32.xlu0 %v658, 96
      %v867 = vpop.permute.xlu0 %866
      %868 = vrot.lane.b32.xlu0 %v574, 96
      %v869 = vpop.permute.xlu0 %868
      %870 = vrot.lane.b32.xlu0 %v580, 96
      %v871 = vpop.permute.xlu0 %870
      %v872 = vsel %vm666, %v865, 0
      %v874 = vsel %vm666, %v867, 0
      %v876 = vsel %vm666, %v869, 0
      %v878 = vsel %vm666, %v871, 0
      %880 = vmatprep.subr.mxu0 0.0
      %881 = vmatpush1.xpose.msra.mxu0 %v876
      %882 = vmatprep.subr.mxu0 0.0
      %883 = vmatpush1.xpose.msra.mxu0 %v878
      %884 = vmatprep.subr.mxu0 0.0
      %885 = vmatpush1.xpose.msra.mxu0 0.0
      %886 = vmatprep.subr.mxu0 0.0
      %887 = vmatpush1.xpose.msra.mxu0 0.0
      %888 = vmatprep.subr.mxu0 0.0
      %889 = vmatpush1.xpose.msra.mxu0 0.0
      %890 = vmatprep.subr.mxu0 0.0
      %891 = vmatpush1.xpose.msra.mxu0 0.0
      %892 = vmatprep.subr.mxu0 0.0
      %893 = vmatpush1.xpose.msra.mxu0 0.0
      %894 = vmatprep.subr.mxu0 0.0
      %895 = vmatpush1.xpose.msra.mxu0 0.0
      %896 = vmatprep.subr.mxu0 0.0
      %897 = vmatpush1.xpose.msra.mxu0 0.0
      %898 = vmatprep.subr.mxu0 0.0
      %899 = vmatpush1.xpose.msra.mxu0 0.0
      %900 = vmatprep.subr.mxu0 0.0
      %901 = vmatpush1.xpose.msra.mxu0 0.0
      %902 = vmatprep.subr.mxu0 0.0
      %903 = vmatpush1.xpose.msra.mxu0 0.0
      %904 = vmatprep.subr.mxu0 0.0
      %905 = vmatpush1.xpose.msra.mxu0 0.0
      %906 = vmatprep.subr.mxu0 0.0
      %907 = vmatpush1.xpose.msra.mxu0 0.0
      %908 = vmatprep.subr.mxu0 0.0
      %909 = vmatpush1.xpose.msra.mxu0 0.0
      %910 = vmatprep.subr.mxu0 0.0
      %911 = vmatpush1.xpose.msra.mxu0 0.0
      %912 = vmatprep.subr.mxu0 0.0
      %913 = vmatpush1.xpose.msra.mxu0 0.0
      %914 = vmatprep.subr.mxu0 0.0
      %915 = vmatpush1.xpose.msra.mxu0 0.0
      %916 = vmatprep.subr.mxu0 0.0
      %917 = vmatpush1.xpose.msra.mxu0 0.0
      %918 = vmatprep.subr.mxu0 0.0
      %919 = vmatpush1.xpose.msra.mxu0 0.0
      %920 = vmatprep.subr.mxu0 0.0
      %921 = vmatpush1.xpose.msra.mxu0 0.0
      %922 = vmatprep.subr.mxu0 0.0
      %923 = vmatpush1.xpose.msra.mxu0 0.0
      %924 = vmatprep.subr.mxu0 0.0
      %925 = vmatpush1.xpose.msra.mxu0 0.0
      %926 = vmatprep.subr.mxu0 0.0
      %927 = vmatpush1.xpose.msra.mxu0 0.0
      %928 = vmatprep.subr.mxu0 0.0
      %929 = vmatpush1.xpose.msra.mxu0 0.0
      %930 = vmatprep.subr.mxu0 0.0
      %931 = vmatpush1.xpose.msra.mxu0 0.0
      %932 = vmatprep.subr.mxu0 0.0
      %933 = vmatpush1.xpose.msra.mxu0 0.0
      %934 = vmatprep.subr.mxu0 0.0
      %935 = vmatpush1.xpose.msra.mxu0 0.0
      %936 = vmatprep.subr.mxu0 0.0
      %937 = vmatpush1.xpose.msra.mxu0 0.0
      %938 = vmatprep.subr.mxu0 0.0
      %939 = vmatpush1.xpose.msra.mxu0 0.0
      %940 = vmatprep.subr.mxu0 0.0
      %941 = vmatpush1.xpose.msra.mxu0 0.0
      %942 = vmatprep.subr.mxu0 0.0
      %943 = vmatpush1.xpose.msra.mxu0 0.0
      %944 = vmatprep.mubr.f32.mxu0 0.0
      %945 = vmatmul.mubr.f32.gmra.mrb[0].mxu0 %v872
      %v946 = vpop.f32.mrb[0].mxu0
      %v947 = vadd.f32 0.0, %v946
      %v948 = vpop.f32.mrb[0].mxu0
      %949 = vmatprep.mubr.f32.mxu0 0.0
      %950 = vmatmul.mubr.f32.gmra.mrb[0].mxu0 %v874
      %v951 = vpop.f32.mrb[0].mxu0
      %v952 = vadd.f32 0.0, %v951
      %v953 = vpop.f32.mrb[0].mxu0
      %954 = vdwg.mxu0
      %v955 = vsel %vm664, %v947, -inf
      %v956 = vsel %vm665, %v952, -inf
      %v957 = vsel %vm756, %v955, -inf
      %958 = vmax.xlane.f32.xlu0 %v957
      %v959 = vpop.xlane.xlu0 %958
      %v960 = vsel %vm756, %v956, -inf
      %961 = vmax.xlane.f32.xlu0 %v960
      %v962 = vpop.xlane.xlu0 %961
      %v963 = vsub.f32 %v955, %v959
      %v964 = vsub.f32 %v956, %v962
      %v965 = vmul.f32 %v963, 1.442695
      %v966 = vpow.pop %v965
      %v967 = vmul.f32 %v964, 1.442695
      %v968 = vpow.pop %v967
      %v969 = vsel %vm756, %v966, 0.0
      %970 = vadd.xlane.f32.xlu0 %v969
      %v971 = vpop.xlane.xlu0 %970
      %v972 = vsel %vm756, %v968, 0.0
      %973 = vadd.xlane.f32.xlu0 %v972
      %v974 = vpop.xlane.xlu0 %973
      %v975 = vrcp.pop %v971
      %v976 = vrcp.pop %v974
      %v977 = vmul.f32 %v966, %v975
      %v978 = vmul.f32 %v968, %v976
      %981 = vrot.lane.b32.xlu0 %v649, 96
      %v982 = vpop.permute.xlu0 %981
      %983 = vrot.lane.b32.xlu0 %v654, 96
      %v984 = vpop.permute.xlu0 %983
      %v988 = vsel %vm756, %v977, 0
      %v991 = vsel %vm756, %v978, 0
      %993 = vmatprep.subr.mxu0 0.0
      %994 = vmatpush1.msra.mxu0 %v982
      %995 = vmatprep.subr.mxu0 0.0
      %996 = vmatpush1.msra.mxu0 %v984
      %997 = vmatprep.subr.mxu0 0.0
      %998 = vmatpush1.msra.mxu0 0.0
      %999 = vmatprep.subr.mxu0 0.0
      %1000 = vmatpush1.msra.mxu0 0.0
      %1001 = vmatprep.subr.mxu0 0.0
      %1002 = vmatpush1.msra.mxu0 0.0
      %1003 = vmatprep.subr.mxu0 0.0
      %1004 = vmatpush1.msra.mxu0 0.0
      %1005 = vmatprep.subr.mxu0 0.0
      %1006 = vmatpush1.msra.mxu0 0.0
      %1007 = vmatprep.subr.mxu0 0.0
      %1008 = vmatpush1.msra.mxu0 0.0
      %1009 = vmatprep.subr.mxu0 0.0
      %1010 = vmatpush1.msra.mxu0 0.0
      %1011 = vmatprep.subr.mxu0 0.0
      %1012 = vmatpush1.msra.mxu0 0.0
      %1013 = vmatprep.subr.mxu0 0.0
      %1014 = vmatpush1.msra.mxu0 0.0
      %1015 = vmatprep.subr.mxu0 0.0
      %1016 = vmatpush1.msra.mxu0 0.0
      %1017 = vmatprep.subr.mxu0 0.0
      %1018 = vmatpush1.msra.mxu0 0.0
      %1019 = vmatprep.subr.mxu0 0.0
      %1020 = vmatpush1.msra.mxu0 0.0
      %1021 = vmatprep.subr.mxu0 0.0
      %1022 = vmatpush1.msra.mxu0 0.0
      %1023 = vmatprep.subr.mxu0 0.0
      %1024 = vmatpush1.msra.mxu0 0.0
      %1025 = vmatprep.subr.mxu0 0.0
      %1026 = vmatpush1.msra.mxu0 0.0
      %1027 = vmatprep.subr.mxu0 0.0
      %1028 = vmatpush1.msra.mxu0 0.0
      %1029 = vmatprep.subr.mxu0 0.0
      %1030 = vmatpush1.msra.mxu0 0.0
      %1031 = vmatprep.subr.mxu0 0.0
      %1032 = vmatpush1.msra.mxu0 0.0
      %1033 = vmatprep.subr.mxu0 0.0
      %1034 = vmatpush1.msra.mxu0 0.0
      %1035 = vmatprep.subr.mxu0 0.0
      %1036 = vmatpush1.msra.mxu0 0.0
      %1037 = vmatprep.subr.mxu0 0.0
      %1038 = vmatpush1.msra.mxu0 0.0
      %1039 = vmatprep.subr.mxu0 0.0
      %1040 = vmatpush1.msra.mxu0 0.0
      %1041 = vmatprep.subr.mxu0 0.0
      %1042 = vmatpush1.msra.mxu0 0.0
      %1043 = vmatprep.subr.mxu0 0.0
      %1044 = vmatpush1.msra.mxu0 0.0
      %1045 = vmatprep.subr.mxu0 0.0
      %1046 = vmatpush1.msra.mxu0 0.0
      %1047 = vmatprep.subr.mxu0 0.0
      %1048 = vmatpush1.msra.mxu0 0.0
      %1049 = vmatprep.subr.mxu0 0.0
      %1050 = vmatpush1.msra.mxu0 0.0
      %1051 = vmatprep.subr.mxu0 0.0
      %1052 = vmatpush1.msra.mxu0 0.0
      %1053 = vmatprep.subr.mxu0 0.0
      %1054 = vmatpush1.msra.mxu0 0.0
      %1055 = vmatprep.subr.mxu0 0.0
      %1056 = vmatpush1.msra.mxu0 0.0
      %1057 = vmatprep.mubr.f32.mxu0 0.0
      %1058 = vmatmul.mubr.f32.gmra.mrb[0].mxu0 %v988
      %v1059 = vpop.f32.mrb[0].mxu0
      %v1060 = vadd.f32 0.0, %v1059
      %v1061 = vpop.f32.mrb[0].mxu0
      %1062 = vmatprep.mubr.f32.mxu0 0.0
      %1063 = vmatmul.mubr.f32.gmra.mrb[0].mxu0 %v991
      %v1064 = vpop.f32.mrb[0].mxu0
      %v1065 = vadd.f32 0.0, %v1064
      %v1066 = vpop.f32.mrb[0].mxu0
      %1067 = vdwg.mxu0
      %v1068 = vld [vmem:[%s4 + $0x20] sm:$0xff]
      %v1069 = vld [vmem:[%s4 + $0x28] sm:$0xff]
      %v1070 = vld [vmem:[%s4 + $0x30] sm:$0xff]
      %v1071 = vld [vmem:[%s4 + $0x38] sm:$0xff]
      %v1073 = vsel %vm666, %v1060, 0
      %v1076 = vsel %vm666, %v1065, 0
      %1078 = vmatprep.subr.mxu0 0.0
      %1079 = vmatpush1.msra.mxu0 %v1068
      %1080 = vmatprep.subr.mxu0 0.0
      %1081 = vmatpush1.msra.mxu0 %v1069
      %1082 = vmatprep.subr.mxu0 0.0
      %1083 = vmatpush1.msra.mxu0 %v1070
      %1084 = vmatprep.subr.mxu0 0.0
      %1085 = vmatpush1.msra.mxu0 %v1071
      %1086 = vmatprep.subr.mxu0 0.0
      %1087 = vmatpush1.msra.mxu0 0.0
      %1088 = vmatprep.subr.mxu0 0.0
      %1089 = vmatpush1.msra.mxu0 0.0
      %1090 = vmatprep.subr.mxu0 0.0
      %1091 = vmatpush1.msra.mxu0 0.0
      %1092 = vmatprep.subr.mxu0 0.0
      %1093 = vmatpush1.msra.mxu0 0.0
      %1094 = vmatprep.subr.mxu0 0.0
      %1095 = vmatpush1.msra.mxu0 0.0
      %1096 = vmatprep.subr.mxu0 0.0
      %1097 = vmatpush1.msra.mxu0 0.0
      %1098 = vmatprep.subr.mxu0 0.0
      %1099 = vmatpush1.msra.mxu0 0.0
      %1100 = vmatprep.subr.mxu0 0.0
      %1101 = vmatpush1.msra.mxu0 0.0
      %1102 = vmatprep.subr.mxu0 0.0
      %1103 = vmatpush1.msra.mxu0 0.0
      %1104 = vmatprep.subr.mxu0 0.0
      %1105 = vmatpush1.msra.mxu0 0.0
      %1106 = vmatprep.subr.mxu0 0.0
      %1107 = vmatpush1.msra.mxu0 0.0
      %1108 = vmatprep.subr.mxu0 0.0
      %1109 = vmatpush1.msra.mxu0 0.0
      %1110 = vmatprep.subr.mxu0 0.0
      %1111 = vmatpush1.msra.mxu0 0.0
      %1112 = vmatprep.subr.mxu0 0.0
      %1113 = vmatpush1.msra.mxu0 0.0
      %1114 = vmatprep.subr.mxu0 0.0
      %1115 = vmatpush1.msra.mxu0 0.0
      %1116 = vmatprep.subr.mxu0 0.0
      %1117 = vmatpush1.msra.mxu0 0.0
      %1118 = vmatprep.subr.mxu0 0.0
      %1119 = vmatpush1.msra.mxu0 0.0
      %1120 = vmatprep.subr.mxu0 0.0
      %1121 = vmatpush1.msra.mxu0 0.0
      %1122 = vmatprep.subr.mxu0 0.0
      %1123 = vmatpush1.msra.mxu0 0.0
      %1124 = vmatprep.subr.mxu0 0.0
      %1125 = vmatpush1.msra.mxu0 0.0
      %1126 = vmatprep.subr.mxu0 0.0
      %1127 = vmatpush1.msra.mxu0 0.0
      %1128 = vmatprep.subr.mxu0 0.0
      %1129 = vmatpush1.msra.mxu0 0.0
      %1130 = vmatprep.subr.mxu0 0.0
      %1131 = vmatpush1.msra.mxu0 0.0
      %1132 = vmatprep.subr.mxu0 0.0
      %1133 = vmatpush1.msra.mxu0 0.0
      %1134 = vmatprep.subr.mxu0 0.0
      %1135 = vmatpush1.msra.mxu0 0.0
      %1136 = vmatprep.subr.mxu0 0.0
      %1137 = vmatpush1.msra.mxu0 0.0
      %1138 = vmatprep.subr.mxu0 0.0
      %1139 = vmatpush1.msra.mxu0 0.0
      %1140 = vmatprep.subr.mxu0 0.0
      %1141 = vmatpush1.msra.mxu0 0.0
      %1142 = vmatprep.mubr.f32.mxu0 0.0
      %1143 = vmatmul.mubr.f32.gmra.mrb[0].mxu0 %v1073
      %v1144 = vpop.f32.mrb[0].mxu0
      %v1145 = vadd.f32 0.0, %v1144
      %v1146 = vpop.f32.mrb[0].mxu0
      %1147 = vmatprep.mubr.f32.mxu0 0.0
      %1148 = vmatmul.mubr.f32.gmra.mrb[0].mxu0 %v1076
      %v1149 = vpop.f32.mrb[0].mxu0
      %v1150 = vadd.f32 0.0, %v1149
      %v1151 = vpop.f32.mrb[0].mxu0
      %1152 = vdwg.mxu0
      %v1154 = vsel %vm666, %v852, 0
      %v1157 = vsel %vm666, %v857, 0
      %1159 = vmatprep.subr.mxu0 0.0
      %1160 = vmatpush1.msra.mxu0 %v860
      %1161 = vmatprep.subr.mxu0 0.0
      %1162 = vmatpush1.msra.mxu0 %v861
      %1163 = vmatprep.subr.mxu0 0.0
      %1164 = vmatpush1.msra.mxu0 %v862
      %1165 = vmatprep.subr.mxu0 0.0
      %1166 = vmatpush1.msra.mxu0 %v863
      %1167 = vmatprep.subr.mxu0 0.0
      %1168 = vmatpush1.msra.mxu0 0.0
      %1169 = vmatprep.subr.mxu0 0.0
      %1170 = vmatpush1.msra.mxu0 0.0
      %1171 = vmatprep.subr.mxu0 0.0
      %1172 = vmatpush1.msra.mxu0 0.0
      %1173 = vmatprep.subr.mxu0 0.0
      %1174 = vmatpush1.msra.mxu0 0.0
      %1175 = vmatprep.subr.mxu0 0.0
      %1176 = vmatpush1.msra.mxu0 0.0
      %1177 = vmatprep.subr.mxu0 0.0
      %1178 = vmatpush1.msra.mxu0 0.0
      %1179 = vmatprep.subr.mxu0 0.0
      %1180 = vmatpush1.msra.mxu0 0.0
      %1181 = vmatprep.subr.mxu0 0.0
      %1182 = vmatpush1.msra.mxu0 0.0
      %1183 = vmatprep.subr.mxu0 0.0
      %1184 = vmatpush1.msra.mxu0 0.0
      %1185 = vmatprep.subr.mxu0 0.0
      %1186 = vmatpush1.msra.mxu0 0.0
      %1187 = vmatprep.subr.mxu0 0.0
      %1188 = vmatpush1.msra.mxu0 0.0
      %1189 = vmatprep.subr.mxu0 0.0
      %1190 = vmatpush1.msra.mxu0 0.0
      %1191 = vmatprep.subr.mxu0 0.0
      %1192 = vmatpush1.msra.mxu0 0.0
      %1193 = vmatprep.subr.mxu0 0.0
      %1194 = vmatpush1.msra.mxu0 0.0
      %1195 = vmatprep.subr.mxu0 0.0
      %1196 = vmatpush1.msra.mxu0 0.0
      %1197 = vmatprep.subr.mxu0 0.0
      %1198 = vmatpush1.msra.mxu0 0.0
      %1199 = vmatprep.subr.mxu0 0.0
      %1200 = vmatpush1.msra.mxu0 0.0
      %1201 = vmatprep.subr.mxu0 0.0
      %1202 = vmatpush1.msra.mxu0 0.0
      %1203 = vmatprep.subr.mxu0 0.0
      %1204 = vmatpush1.msra.mxu0 0.0
      %1205 = vmatprep.subr.mxu0 0.0
      %1206 = vmatpush1.msra.mxu0 0.0
      %1207 = vmatprep.subr.mxu0 0.0
      %1208 = vmatpush1.msra.mxu0 0.0
      %1209 = vmatprep.subr.mxu0 0.0
      %1210 = vmatpush1.msra.mxu0 0.0
      %1211 = vmatprep.subr.mxu0 0.0
      %1212 = vmatpush1.msra.mxu0 0.0
      %1213 = vmatprep.subr.mxu0 0.0
      %1214 = vmatpush1.msra.mxu0 0.0
      %1215 = vmatprep.subr.mxu0 0.0
      %1216 = vmatpush1.msra.mxu0 0.0
      %1217 = vmatprep.subr.mxu0 0.0
      %1218 = vmatpush1.msra.mxu0 0.0
      %1219 = vmatprep.subr.mxu0 0.0
      %1220 = vmatpush1.msra.mxu0 0.0
      %1221 = vmatprep.subr.mxu0 0.0
      %1222 = vmatpush1.msra.mxu0 0.0
      %1223 = vmatprep.mubr.f32.mxu0 0.0
      %1224 = vmatmul.mubr.f32.gmra.mrb[0].mxu0 %v1154
      %v1225 = vpop.f32.mrb[0].mxu0
      %v1226 = vadd.f32 %v1145, %v1225
      %v1227 = vpop.f32.mrb[0].mxu0
      %1228 = vmatprep.mubr.f32.mxu0 0.0
      %1229 = vmatmul.mubr.f32.gmra.mrb[0].mxu0 %v1157
      %v1230 = vpop.f32.mrb[0].mxu0
      %v1231 = vadd.f32 %v1150, %v1230
      %v1232 = vpop.f32.mrb[0].mxu0
      %1233 = vdwg.mxu0
      %1234 = vrot.lane.b32.xlu0 %v657, 64
      %v1235 = vpop.permute.xlu0 %1234
      %1236 = vrot.lane.b32.xlu0 %v658, 64
      %v1237 = vpop.permute.xlu0 %1236
      %1238 = vrot.lane.b32.xlu0 %v574, 64
      %v1239 = vpop.permute.xlu0 %1238
      %1240 = vrot.lane.b32.xlu0 %v580, 64
      %v1241 = vpop.permute.xlu0 %1240
      %v1242 = vsel %vm666, %v1235, 0
      %v1244 = vsel %vm666, %v1237, 0
      %v1246 = vsel %vm666, %v1239, 0
      %v1248 = vsel %vm666, %v1241, 0
      %1250 = vmatprep.subr.mxu0 0.0
      %1251 = vmatpush1.xpose.msra.mxu0 %v1246
      %1252 = vmatprep.subr.mxu0 0.0
      %1253 = vmatpush1.xpose.msra.mxu0 %v1248
      %1254 = vmatprep.subr.mxu0 0.0
      %1255 = vmatpush1.xpose.msra.mxu0 0.0
      %1256 = vmatprep.subr.mxu0 0.0
      %1257 = vmatpush1.xpose.msra.mxu0 0.0
      %1258 = vmatprep.subr.mxu0 0.0
      %1259 = vmatpush1.xpose.msra.mxu0 0.0
      %1260 = vmatprep.subr.mxu0 0.0
      %1261 = vmatpush1.xpose.msra.mxu0 0.0
      %1262 = vmatprep.subr.mxu0 0.0
      %1263 = vmatpush1.xpose.msra.mxu0 0.0
      %1264 = vmatprep.subr.mxu0 0.0
      %1265 = vmatpush1.xpose.msra.mxu0 0.0
      %1266 = vmatprep.subr.mxu0 0.0
      %1267 = vmatpush1.xpose.msra.mxu0 0.0
      %1268 = vmatprep.subr.mxu0 0.0
      %1269 = vmatpush1.xpose.msra.mxu0 0.0
      %1270 = vmatprep.subr.mxu0 0.0
      %1271 = vmatpush1.xpose.msra.mxu0 0.0
      %1272 = vmatprep.subr.mxu0 0.0
      %1273 = vmatpush1.xpose.msra.mxu0 0.0
      %1274 = vmatprep.subr.mxu0 0.0
      %1275 = vmatpush1.xpose.msra.mxu0 0.0
      %1276 = vmatprep.subr.mxu0 0.0
      %1277 = vmatpush1.xpose.msra.mxu0 0.0
      %1278 = vmatprep.subr.mxu0 0.0
      %1279 = vmatpush1.xpose.msra.mxu0 0.0
      %1280 = vmatprep.subr.mxu0 0.0
      %1281 = vmatpush1.xpose.msra.mxu0 0.0
      %1282 = vmatprep.subr.mxu0 0.0
      %1283 = vmatpush1.xpose.msra.mxu0 0.0
      %1284 = vmatprep.subr.mxu0 0.0
      %1285 = vmatpush1.xpose.msra.mxu0 0.0
      %1286 = vmatprep.subr.mxu0 0.0
      %1287 = vmatpush1.xpose.msra.mxu0 0.0
      %1288 = vmatprep.subr.mxu0 0.0
      %1289 = vmatpush1.xpose.msra.mxu0 0.0
      %1290 = vmatprep.subr.mxu0 0.0
      %1291 = vmatpush1.xpose.msra.mxu0 0.0
      %1292 = vmatprep.subr.mxu0 0.0
      %1293 = vmatpush1.xpose.msra.mxu0 0.0
      %1294 = vmatprep.subr.mxu0 0.0
      %1295 = vmatpush1.xpose.msra.mxu0 0.0
      %1296 = vmatprep.subr.mxu0 0.0
      %1297 = vmatpush1.xpose.msra.mxu0 0.0
      %1298 = vmatprep.subr.mxu0 0.0
      %1299 = vmatpush1.xpose.msra.mxu0 0.0
      %1300 = vmatprep.subr.mxu0 0.0
      %1301 = vmatpush1.xpose.msra.mxu0 0.0
      %1302 = vmatprep.subr.mxu0 0.0
      %1303 = vmatpush1.xpose.msra.mxu0 0.0
      %1304 = vmatprep.subr.mxu0 0.0
      %1305 = vmatpush1.xpose.msra.mxu0 0.0
      %1306 = vmatprep.subr.mxu0 0.0
      %1307 = vmatpush1.xpose.msra.mxu0 0.0
      %1308 = vmatprep.subr.mxu0 0.0
      %1309 = vmatpush1.xpose.msra.mxu0 0.0
      %1310 = vmatprep.subr.mxu0 0.0
      %1311 = vmatpush1.xpose.msra.mxu0 0.0
      %1312 = vmatprep.subr.mxu0 0.0
      %1313 = vmatpush1.xpose.msra.mxu0 0.0
      %1314 = vmatprep.mubr.f32.mxu0 0.0
      %1315 = vmatmul.mubr.f32.gmra.mrb[0].mxu0 %v1242
      %v1316 = vpop.f32.mrb[0].mxu0
      %v1317 = vadd.f32 0.0, %v1316
      %v1318 = vpop.f32.mrb[0].mxu0
      %1319 = vmatprep.mubr.f32.mxu0 0.0
      %1320 = vmatmul.mubr.f32.gmra.mrb[0].mxu0 %v1244
      %v1321 = vpop.f32.mrb[0].mxu0
      %v1322 = vadd.f32 0.0, %v1321
      %v1323 = vpop.f32.mrb[0].mxu0
      %1324 = vdwg.mxu0
      %v1325 = vsel %vm664, %v1317, -inf
      %v1326 = vsel %vm665, %v1322, -inf
      %v1327 = vsel %vm756, %v1325, -inf
      %1328 = vmax.xlane.f32.xlu0 %v1327
      %v1329 = vpop.xlane.xlu0 %1328
      %v1330 = vsel %vm756, %v1326, -inf
      %1331 = vmax.xlane.f32.xlu0 %v1330
      %v1332 = vpop.xlane.xlu0 %1331
      %v1333 = vsub.f32 %v1325, %v1329
      %v1334 = vsub.f32 %v1326, %v1332
      %v1335 = vmul.f32 %v1333, 1.442695
      %v1336 = vpow.pop %v1335
      %v1337 = vmul.f32 %v1334, 1.442695
      %v1338 = vpow.pop %v1337
      %v1339 = vsel %vm756, %v1336, 0.0
      %1340 = vadd.xlane.f32.xlu0 %v1339
      %v1341 = vpop.xlane.xlu0 %1340
      %v1342 = vsel %vm756, %v1338, 0.0
      %1343 = vadd.xlane.f32.xlu0 %v1342
      %v1344 = vpop.xlane.xlu0 %1343
      %v1345 = vrcp.pop %v1341
      %v1346 = vrcp.pop %v1344
      %v1347 = vmul.f32 %v1336, %v1345
      %v1348 = vmul.f32 %v1338, %v1346
      %1349 = vrot.lane.b32.xlu0 %v649, 64
      %v1350 = vpop.permute.xlu0 %1349
      %1351 = vrot.lane.b32.xlu0 %v654, 64
      %v1352 = vpop.permute.xlu0 %1351
      %v1356 = vsel %vm756, %v1347, 0
      %v1359 = vsel %vm756, %v1348, 0
      %1361 = vmatprep.subr.mxu0 0.0
      %1362 = vmatpush1.msra.mxu0 %v1350
      %1363 = vmatprep.subr.mxu0 0.0
      %1364 = vmatpush1.msra.mxu0 %v1352
      %1365 = vmatprep.subr.mxu0 0.0
      %1366 = vmatpush1.msra.mxu0 0.0
      %1367 = vmatprep.subr.mxu0 0.0
      %1368 = vmatpush1.msra.mxu0 0.0
      %1369 = vmatprep.subr.mxu0 0.0
      %1370 = vmatpush1.msra.mxu0 0.0
      %1371 = vmatprep.subr.mxu0 0.0
      %1372 = vmatpush1.msra.mxu0 0.0
      %1373 = vmatprep.subr.mxu0 0.0
      %1374 = vmatpush1.msra.mxu0 0.0
      %1375 = vmatprep.subr.mxu0 0.0
      %1376 = vmatpush1.msra.mxu0 0.0
      %1377 = vmatprep.subr.mxu0 0.0
      %1378 = vmatpush1.msra.mxu0 0.0
      %1379 = vmatprep.subr.mxu0 0.0
      %1380 = vmatpush1.msra.mxu0 0.0
      %1381 = vmatprep.subr.mxu0 0.0
      %1382 = vmatpush1.msra.mxu0 0.0
      %1383 = vmatprep.subr.mxu0 0.0
      %1384 = vmatpush1.msra.mxu0 0.0
      %1385 = vmatprep.subr.mxu0 0.0
      %1386 = vmatpush1.msra.mxu0 0.0
      %1387 = vmatprep.subr.mxu0 0.0
      %1388 = vmatpush1.msra.mxu0 0.0
      %1389 = vmatprep.subr.mxu0 0.0
      %1390 = vmatpush1.msra.mxu0 0.0
      %1391 = vmatprep.subr.mxu0 0.0
      %1392 = vmatpush1.msra.mxu0 0.0
      %1393 = vmatprep.subr.mxu0 0.0
      %1394 = vmatpush1.msra.mxu0 0.0
      %1395 = vmatprep.subr.mxu0 0.0
      %1396 = vmatpush1.msra.mxu0 0.0
      %1397 = vmatprep.subr.mxu0 0.0
      %1398 = vmatpush1.msra.mxu0 0.0
      %1399 = vmatprep.subr.mxu0 0.0
      %1400 = vmatpush1.msra.mxu0 0.0
      %1401 = vmatprep.subr.mxu0 0.0
      %1402 = vmatpush1.msra.mxu0 0.0
      %1403 = vmatprep.subr.mxu0 0.0
      %1404 = vmatpush1.msra.mxu0 0.0
      %1405 = vmatprep.subr.mxu0 0.0
      %1406 = vmatpush1.msra.mxu0 0.0
      %1407 = vmatprep.subr.mxu0 0.0
      %1408 = vmatpush1.msra.mxu0 0.0
      %1409 = vmatprep.subr.mxu0 0.0
      %1410 = vmatpush1.msra.mxu0 0.0
      %1411 = vmatprep.subr.mxu0 0.0
      %1412 = vmatpush1.msra.mxu0 0.0
      %1413 = vmatprep.subr.mxu0 0.0
      %1414 = vmatpush1.msra.mxu0 0.0
      %1415 = vmatprep.subr.mxu0 0.0
      %1416 = vmatpush1.msra.mxu0 0.0
      %1417 = vmatprep.subr.mxu0 0.0
      %1418 = vmatpush1.msra.mxu0 0.0
      %1419 = vmatprep.subr.mxu0 0.0
      %1420 = vmatpush1.msra.mxu0 0.0
      %1421 = vmatprep.subr.mxu0 0.0
      %1422 = vmatpush1.msra.mxu0 0.0
      %1423 = vmatprep.subr.mxu0 0.0
      %1424 = vmatpush1.msra.mxu0 0.0
      %1425 = vmatprep.mubr.f32.mxu0 0.0
      %1426 = vmatmul.mubr.f32.gmra.mrb[0].mxu0 %v1356
      %v1427 = vpop.f32.mrb[0].mxu0
      %v1428 = vadd.f32 0.0, %v1427
      %v1429 = vpop.f32.mrb[0].mxu0
      %1430 = vmatprep.mubr.f32.mxu0 0.0
      %1431 = vmatmul.mubr.f32.gmra.mrb[0].mxu0 %v1359
      %v1432 = vpop.f32.mrb[0].mxu0
      %v1433 = vadd.f32 0.0, %v1432
      %v1434 = vpop.f32.mrb[0].mxu0
      %1435 = vdwg.mxu0
      %v1436 = vld [vmem:[%s4 + $0x40] sm:$0xff]
      %v1437 = vld [vmem:[%s4 + $0x48] sm:$0xff]
      %v1438 = vld [vmem:[%s4 + $0x50] sm:$0xff]
      %v1439 = vld [vmem:[%s4 + $0x58] sm:$0xff]
      %v1441 = vsel %vm666, %v1428, 0
      %v1444 = vsel %vm666, %v1433, 0
      %1446 = vmatprep.subr.mxu0 0.0
      %1447 = vmatpush1.msra.mxu0 %v1436
      %1448 = vmatprep.subr.mxu0 0.0
      %1449 = vmatpush1.msra.mxu0 %v1437
      %1450 = vmatprep.subr.mxu0 0.0
      %1451 = vmatpush1.msra.mxu0 %v1438
      %1452 = vmatprep.subr.mxu0 0.0
      %1453 = vmatpush1.msra.mxu0 %v1439
      %1454 = vmatprep.subr.mxu0 0.0
      %1455 = vmatpush1.msra.mxu0 0.0
      %1456 = vmatprep.subr.mxu0 0.0
      %1457 = vmatpush1.msra.mxu0 0.0
      %1458 = vmatprep.subr.mxu0 0.0
      %1459 = vmatpush1.msra.mxu0 0.0
      %1460 = vmatprep.subr.mxu0 0.0
      %1461 = vmatpush1.msra.mxu0 0.0
      %1462 = vmatprep.subr.mxu0 0.0
      %1463 = vmatpush1.msra.mxu0 0.0
      %1464 = vmatprep.subr.mxu0 0.0
      %1465 = vmatpush1.msra.mxu0 0.0
      %1466 = vmatprep.subr.mxu0 0.0
      %1467 = vmatpush1.msra.mxu0 0.0
      %1468 = vmatprep.subr.mxu0 0.0
      %1469 = vmatpush1.msra.mxu0 0.0
      %1470 = vmatprep.subr.mxu0 0.0
      %1471 = vmatpush1.msra.mxu0 0.0
      %1472 = vmatprep.subr.mxu0 0.0
      %1473 = vmatpush1.msra.mxu0 0.0
      %1474 = vmatprep.subr.mxu0 0.0
      %1475 = vmatpush1.msra.mxu0 0.0
      %1476 = vmatprep.subr.mxu0 0.0
      %1477 = vmatpush1.msra.mxu0 0.0
      %1478 = vmatprep.subr.mxu0 0.0
      %1479 = vmatpush1.msra.mxu0 0.0
      %1480 = vmatprep.subr.mxu0 0.0
      %1481 = vmatpush1.msra.mxu0 0.0
      %1482 = vmatprep.subr.mxu0 0.0
      %1483 = vmatpush1.msra.mxu0 0.0
      %1484 = vmatprep.subr.mxu0 0.0
      %1485 = vmatpush1.msra.mxu0 0.0
      %1486 = vmatprep.subr.mxu0 0.0
      %1487 = vmatpush1.msra.mxu0 0.0
      %1488 = vmatprep.subr.mxu0 0.0
      %1489 = vmatpush1.msra.mxu0 0.0
      %1490 = vmatprep.subr.mxu0 0.0
      %1491 = vmatpush1.msra.mxu0 0.0
      %1492 = vmatprep.subr.mxu0 0.0
      %1493 = vmatpush1.msra.mxu0 0.0
      %1494 = vmatprep.subr.mxu0 0.0
      %1495 = vmatpush1.msra.mxu0 0.0
      %1496 = vmatprep.subr.mxu0 0.0
      %1497 = vmatpush1.msra.mxu0 0.0
      %1498 = vmatprep.subr.mxu0 0.0
      %1499 = vmatpush1.msra.mxu0 0.0
      %1500 = vmatprep.subr.mxu0 0.0
      %1501 = vmatpush1.msra.mxu0 0.0
      %1502 = vmatprep.subr.mxu0 0.0
      %1503 = vmatpush1.msra.mxu0 0.0
      %1504 = vmatprep.subr.mxu0 0.0
      %1505 = vmatpush1.msra.mxu0 0.0
      %1506 = vmatprep.subr.mxu0 0.0
      %1507 = vmatpush1.msra.mxu0 0.0
      %1508 = vmatprep.subr.mxu0 0.0
      %1509 = vmatpush1.msra.mxu0 0.0
      %1510 = vmatprep.mubr.f32.mxu0 0.0
      %1511 = vmatmul.mubr.f32.gmra.mrb[0].mxu0 %v1441
      %v1512 = vpop.f32.mrb[0].mxu0
      %v1513 = vadd.f32 0.0, %v1512
      %v1514 = vpop.f32.mrb[0].mxu0
      %1515 = vmatprep.mubr.f32.mxu0 0.0
      %1516 = vmatmul.mubr.f32.gmra.mrb[0].mxu0 %v1444
      %v1517 = vpop.f32.mrb[0].mxu0
      %v1518 = vadd.f32 0.0, %v1517
      %v1519 = vpop.f32.mrb[0].mxu0
      %1520 = vdwg.mxu0
      %v1521 = vadd.f32 %v1226, %v1513
      %v1522 = vadd.f32 %v1231, %v1518
      %1523 = vrot.lane.b32.xlu0 %v657, 32
      %v1524 = vpop.permute.xlu0 %1523
      %1525 = vrot.lane.b32.xlu0 %v658, 32
      %v1526 = vpop.permute.xlu0 %1525
      %1527 = vrot.lane.b32.xlu0 %v574, 32
      %v1528 = vpop.permute.xlu0 %1527
      %1529 = vrot.lane.b32.xlu0 %v580, 32
      %v1530 = vpop.permute.xlu0 %1529
      %v1531 = vsel %vm666, %v1524, 0
      %v1533 = vsel %vm666, %v1526, 0
      %v1535 = vsel %vm666, %v1528, 0
      %v1537 = vsel %vm666, %v1530, 0
      %1539 = vmatprep.subr.mxu0 0.0
      %1540 = vmatpush1.xpose.msra.mxu0 %v1535
      %1541 = vmatprep.subr.mxu0 0.0
      %1542 = vmatpush1.xpose.msra.mxu0 %v1537
      %1543 = vmatprep.subr.mxu0 0.0
      %1544 = vmatpush1.xpose.msra.mxu0 0.0
      %1545 = vmatprep.subr.mxu0 0.0
      %1546 = vmatpush1.xpose.msra.mxu0 0.0
      %1547 = vmatprep.subr.mxu0 0.0
      %1548 = vmatpush1.xpose.msra.mxu0 0.0
      %1549 = vmatprep.subr.mxu0 0.0
      %1550 = vmatpush1.xpose.msra.mxu0 0.0
      %1551 = vmatprep.subr.mxu0 0.0
      %1552 = vmatpush1.xpose.msra.mxu0 0.0
      %1553 = vmatprep.subr.mxu0 0.0
      %1554 = vmatpush1.xpose.msra.mxu0 0.0
      %1555 = vmatprep.subr.mxu0 0.0
      %1556 = vmatpush1.xpose.msra.mxu0 0.0
      %1557 = vmatprep.subr.mxu0 0.0
      %1558 = vmatpush1.xpose.msra.mxu0 0.0
      %1559 = vmatprep.subr.mxu0 0.0
      %1560 = vmatpush1.xpose.msra.mxu0 0.0
      %1561 = vmatprep.subr.mxu0 0.0
      %1562 = vmatpush1.xpose.msra.mxu0 0.0
      %1563 = vmatprep.subr.mxu0 0.0
      %1564 = vmatpush1.xpose.msra.mxu0 0.0
      %1565 = vmatprep.subr.mxu0 0.0
      %1566 = vmatpush1.xpose.msra.mxu0 0.0
      %1567 = vmatprep.subr.mxu0 0.0
      %1568 = vmatpush1.xpose.msra.mxu0 0.0
      %1569 = vmatprep.subr.mxu0 0.0
      %1570 = vmatpush1.xpose.msra.mxu0 0.0
      %1571 = vmatprep.subr.mxu0 0.0
      %1572 = vmatpush1.xpose.msra.mxu0 0.0
      %1573 = vmatprep.subr.mxu0 0.0
      %1574 = vmatpush1.xpose.msra.mxu0 0.0
      %1575 = vmatprep.subr.mxu0 0.0
      %1576 = vmatpush1.xpose.msra.mxu0 0.0
      %1577 = vmatprep.subr.mxu0 0.0
      %1578 = vmatpush1.xpose.msra.mxu0 0.0
      %1579 = vmatprep.subr.mxu0 0.0
      %1580 = vmatpush1.xpose.msra.mxu0 0.0
      %1581 = vmatprep.subr.mxu0 0.0
      %1582 = vmatpush1.xpose.msra.mxu0 0.0
      %1583 = vmatprep.subr.mxu0 0.0
      %1584 = vmatpush1.xpose.msra.mxu0 0.0
      %1585 = vmatprep.subr.mxu0 0.0
      %1586 = vmatpush1.xpose.msra.mxu0 0.0
      %1587 = vmatprep.subr.mxu0 0.0
      %1588 = vmatpush1.xpose.msra.mxu0 0.0
      %1589 = vmatprep.subr.mxu0 0.0
      %1590 = vmatpush1.xpose.msra.mxu0 0.0
      %1591 = vmatprep.subr.mxu0 0.0
      %1592 = vmatpush1.xpose.msra.mxu0 0.0
      %1593 = vmatprep.subr.mxu0 0.0
      %1594 = vmatpush1.xpose.msra.mxu0 0.0
      %1595 = vmatprep.subr.mxu0 0.0
      %1596 = vmatpush1.xpose.msra.mxu0 0.0
      %1597 = vmatprep.subr.mxu0 0.0
      %1598 = vmatpush1.xpose.msra.mxu0 0.0
      %1599 = vmatprep.subr.mxu0 0.0
      %1600 = vmatpush1.xpose.msra.mxu0 0.0
      %1601 = vmatprep.subr.mxu0 0.0
      %1602 = vmatpush1.xpose.msra.mxu0 0.0
      %1603 = vmatprep.mubr.f32.mxu0 0.0
      %1604 = vmatmul.mubr.f32.gmra.mrb[0].mxu0 %v1531
      %v1605 = vpop.f32.mrb[0].mxu0
      %v1606 = vadd.f32 0.0, %v1605
      %v1607 = vpop.f32.mrb[0].mxu0
      %1608 = vmatprep.mubr.f32.mxu0 0.0
      %1609 = vmatmul.mubr.f32.gmra.mrb[0].mxu0 %v1533
      %v1610 = vpop.f32.mrb[0].mxu0
      %v1611 = vadd.f32 0.0, %v1610
      %v1612 = vpop.f32.mrb[0].mxu0
      %1613 = vdwg.mxu0
      %v1614 = vsel %vm664, %v1606, -inf
      %v1615 = vsel %vm665, %v1611, -inf
      %v1616 = vsel %vm756, %v1614, -inf
      %1617 = vmax.xlane.f32.xlu0 %v1616
      %v1618 = vpop.xlane.xlu0 %1617
      %v1619 = vsel %vm756, %v1615, -inf
      %1620 = vmax.xlane.f32.xlu0 %v1619
      %v1621 = vpop.xlane.xlu0 %1620
      %v1622 = vsub.f32 %v1614, %v1618
      %v1623 = vsub.f32 %v1615, %v1621
      %v1624 = vmul.f32 %v1622, 1.442695
      %v1625 = vpow.pop %v1624
      %v1626 = vmul.f32 %v1623, 1.442695
      %v1627 = vpow.pop %v1626
      %v1628 = vsel %vm756, %v1625, 0.0
      %1629 = vadd.xlane.f32.xlu0 %v1628
      %v1630 = vpop.xlane.xlu0 %1629
      %v1631 = vsel %vm756, %v1627, 0.0
      %1632 = vadd.xlane.f32.xlu0 %v1631
      %v1633 = vpop.xlane.xlu0 %1632
      %v1634 = vrcp.pop %v1630
      %v1635 = vrcp.pop %v1633
      %v1636 = vmul.f32 %v1625, %v1634
      %v1637 = vmul.f32 %v1627, %v1635
      %1638 = vrot.lane.b32.xlu0 %v649, 32
      %v1639 = vpop.permute.xlu0 %1638
      %1640 = vrot.lane.b32.xlu0 %v654, 32
      %v1641 = vpop.permute.xlu0 %1640
      %v1645 = vsel %vm756, %v1636, 0
      %v1648 = vsel %vm756, %v1637, 0
      %1650 = vmatprep.subr.mxu0 0.0
      %1651 = vmatpush1.msra.mxu0 %v1639
      %1652 = vmatprep.subr.mxu0 0.0
      %1653 = vmatpush1.msra.mxu0 %v1641
      %1654 = vmatprep.subr.mxu0 0.0
      %1655 = vmatpush1.msra.mxu0 0.0
      %1656 = vmatprep.subr.mxu0 0.0
      %1657 = vmatpush1.msra.mxu0 0.0
      %1658 = vmatprep.subr.mxu0 0.0
      %1659 = vmatpush1.msra.mxu0 0.0
      %1660 = vmatprep.subr.mxu0 0.0
      %1661 = vmatpush1.msra.mxu0 0.0
      %1662 = vmatprep.subr.mxu0 0.0
      %1663 = vmatpush1.msra.mxu0 0.0
      %1664 = vmatprep.subr.mxu0 0.0
      %1665 = vmatpush1.msra.mxu0 0.0
      %1666 = vmatprep.subr.mxu0 0.0
      %1667 = vmatpush1.msra.mxu0 0.0
      %1668 = vmatprep.subr.mxu0 0.0
      %1669 = vmatpush1.msra.mxu0 0.0
      %1670 = vmatprep.subr.mxu0 0.0
      %1671 = vmatpush1.msra.mxu0 0.0
      %1672 = vmatprep.subr.mxu0 0.0
      %1673 = vmatpush1.msra.mxu0 0.0
      %1674 = vmatprep.subr.mxu0 0.0
      %1675 = vmatpush1.msra.mxu0 0.0
      %1676 = vmatprep.subr.mxu0 0.0
      %1677 = vmatpush1.msra.mxu0 0.0
      %1678 = vmatprep.subr.mxu0 0.0
      %1679 = vmatpush1.msra.mxu0 0.0
      %1680 = vmatprep.subr.mxu0 0.0
      %1681 = vmatpush1.msra.mxu0 0.0
      %1682 = vmatprep.subr.mxu0 0.0
      %1683 = vmatpush1.msra.mxu0 0.0
      %1684 = vmatprep.subr.mxu0 0.0
      %1685 = vmatpush1.msra.mxu0 0.0
      %1686 = vmatprep.subr.mxu0 0.0
      %1687 = vmatpush1.msra.mxu0 0.0
      %1688 = vmatprep.subr.mxu0 0.0
      %1689 = vmatpush1.msra.mxu0 0.0
      %1690 = vmatprep.subr.mxu0 0.0
      %1691 = vmatpush1.msra.mxu0 0.0
      %1692 = vmatprep.subr.mxu0 0.0
      %1693 = vmatpush1.msra.mxu0 0.0
      %1694 = vmatprep.subr.mxu0 0.0
      %1695 = vmatpush1.msra.mxu0 0.0
      %1696 = vmatprep.subr.mxu0 0.0
      %1697 = vmatpush1.msra.mxu0 0.0
      %1698 = vmatprep.subr.mxu0 0.0
      %1699 = vmatpush1.msra.mxu0 0.0
      %1700 = vmatprep.subr.mxu0 0.0
      %1701 = vmatpush1.msra.mxu0 0.0
      %1702 = vmatprep.subr.mxu0 0.0
      %1703 = vmatpush1.msra.mxu0 0.0
      %1704 = vmatprep.subr.mxu0 0.0
      %1705 = vmatpush1.msra.mxu0 0.0
      %1706 = vmatprep.subr.mxu0 0.0
      %1707 = vmatpush1.msra.mxu0 0.0
      %1708 = vmatprep.subr.mxu0 0.0
      %1709 = vmatpush1.msra.mxu0 0.0
      %1710 = vmatprep.subr.mxu0 0.0
      %1711 = vmatpush1.msra.mxu0 0.0
      %1712 = vmatprep.subr.mxu0 0.0
      %1713 = vmatpush1.msra.mxu0 0.0
      %1714 = vmatprep.mubr.f32.mxu0 0.0
      %1715 = vmatmul.mubr.f32.gmra.mrb[0].mxu0 %v1645
      %v1716 = vpop.f32.mrb[0].mxu0
      %v1717 = vadd.f32 0.0, %v1716
      %v1718 = vpop.f32.mrb[0].mxu0
      %1719 = vmatprep.mubr.f32.mxu0 0.0
      %1720 = vmatmul.mubr.f32.gmra.mrb[0].mxu0 %v1648
      %v1721 = vpop.f32.mrb[0].mxu0
      %v1722 = vadd.f32 0.0, %v1721
      %v1723 = vpop.f32.mrb[0].mxu0
      %1724 = vdwg.mxu0
      %v1725 = vld [vmem:[%s4 + $0x60] sm:$0xff]
      %v1726 = vld [vmem:[%s4 + $0x68] sm:$0xff]
      %v1727 = vld [vmem:[%s4 + $0x70] sm:$0xff]
      %v1728 = vld [vmem:[%s4 + $0x78] sm:$0xff]
      %v1730 = vsel %vm666, %v1717, 0
      %v1733 = vsel %vm666, %v1722, 0
      %1735 = vmatprep.subr.mxu0 0.0
      %1736 = vmatpush1.msra.mxu0 %v1725
      %1737 = vmatprep.subr.mxu0 0.0
      %1738 = vmatpush1.msra.mxu0 %v1726
      %1739 = vmatprep.subr.mxu0 0.0
      %1740 = vmatpush1.msra.mxu0 %v1727
      %1741 = vmatprep.subr.mxu0 0.0
      %1742 = vmatpush1.msra.mxu0 %v1728
      %1743 = vmatprep.subr.mxu0 0.0
      %1744 = vmatpush1.msra.mxu0 0.0
      %1745 = vmatprep.subr.mxu0 0.0
      %1746 = vmatpush1.msra.mxu0 0.0
      %1747 = vmatprep.subr.mxu0 0.0
      %1748 = vmatpush1.msra.mxu0 0.0
      %1749 = vmatprep.subr.mxu0 0.0
      %1750 = vmatpush1.msra.mxu0 0.0
      %1751 = vmatprep.subr.mxu0 0.0
      %1752 = vmatpush1.msra.mxu0 0.0
      %1753 = vmatprep.subr.mxu0 0.0
      %1754 = vmatpush1.msra.mxu0 0.0
      %1755 = vmatprep.subr.mxu0 0.0
      %1756 = vmatpush1.msra.mxu0 0.0
      %1757 = vmatprep.subr.mxu0 0.0
      %1758 = vmatpush1.msra.mxu0 0.0
      %1759 = vmatprep.subr.mxu0 0.0
      %1760 = vmatpush1.msra.mxu0 0.0
      %1761 = vmatprep.subr.mxu0 0.0
      %1762 = vmatpush1.msra.mxu0 0.0
      %1763 = vmatprep.subr.mxu0 0.0
      %1764 = vmatpush1.msra.mxu0 0.0
      %1765 = vmatprep.subr.mxu0 0.0
      %1766 = vmatpush1.msra.mxu0 0.0
      %1767 = vmatprep.subr.mxu0 0.0
      %1768 = vmatpush1.msra.mxu0 0.0
      %1769 = vmatprep.subr.mxu0 0.0
      %1770 = vmatpush1.msra.mxu0 0.0
      %1771 = vmatprep.subr.mxu0 0.0
      %1772 = vmatpush1.msra.mxu0 0.0
      %1773 = vmatprep.subr.mxu0 0.0
      %1774 = vmatpush1.msra.mxu0 0.0
      %1775 = vmatprep.subr.mxu0 0.0
      %1776 = vmatpush1.msra.mxu0 0.0
      %1777 = vmatprep.subr.mxu0 0.0
      %1778 = vmatpush1.msra.mxu0 0.0
      %1779 = vmatprep.subr.mxu0 0.0
      %1780 = vmatpush1.msra.mxu0 0.0
      %1781 = vmatprep.subr.mxu0 0.0
      %1782 = vmatpush1.msra.mxu0 0.0
      %1783 = vmatprep.subr.mxu0 0.0
      %1784 = vmatpush1.msra.mxu0 0.0
      %1785 = vmatprep.subr.mxu0 0.0
      %1786 = vmatpush1.msra.mxu0 0.0
      %1787 = vmatprep.subr.mxu0 0.0
      %1788 = vmatpush1.msra.mxu0 0.0
      %1789 = vmatprep.subr.mxu0 0.0
      %1790 = vmatpush1.msra.mxu0 0.0
      %1791 = vmatprep.subr.mxu0 0.0
      %1792 = vmatpush1.msra.mxu0 0.0
      %1793 = vmatprep.subr.mxu0 0.0
      %1794 = vmatpush1.msra.mxu0 0.0
      %1795 = vmatprep.subr.mxu0 0.0
      %1796 = vmatpush1.msra.mxu0 0.0
      %1797 = vmatprep.subr.mxu0 0.0
      %1798 = vmatpush1.msra.mxu0 0.0
      %1799 = vmatprep.mubr.f32.mxu0 0.0
      %1800 = vmatmul.mubr.f32.gmra.mrb[0].mxu0 %v1730
      %v1801 = vpop.f32.mrb[0].mxu0
      %v1802 = vadd.f32 0.0, %v1801
      %v1803 = vpop.f32.mrb[0].mxu0
      %1804 = vmatprep.mubr.f32.mxu0 0.0
      %1805 = vmatmul.mubr.f32.gmra.mrb[0].mxu0 %v1733
      %v1806 = vpop.f32.mrb[0].mxu0
      %v1807 = vadd.f32 0.0, %v1806
      %v1808 = vpop.f32.mrb[0].mxu0
      %1809 = vdwg.mxu0
      %v1810 = vadd.f32 %v1521, %v1802
      %v1811 = vadd.f32 %v1522, %v1807
      %v1812 = vadd.f32 %v414, %v1810
      %v1813 = vadd.f32 %v415, %v1811
      %v1814 = vld [vmem:[%s5] sm:$0x1]
      %v1816 = vlaneseq
      %v1817 = vshrl.u32 %v1816, 7
      %v1818 = vsub.s32 0, %v1817
      %v1819 = vrot.slane %v1814, %v1818
      %v1821 = vadd.f32 %v1812, %v1819
      %v1822 = vadd.f32 %v1813, %v1819
      %v1823 = vld [vmem:[%s6] sm:$0x1]
      %v1824 = vld [vmem:[%s7] sm:$0x1]
      %1825 = vadd.xlane.f32.xlu0 %v1821
      %v1826 = vpop.xlane.xlu0 %1825
      %1827 = vadd.xlane.f32.xlu0 %v1822
      %v1828 = vpop.xlane.xlu0 %1827
      %v1829 = vmul.f32 %v1826, %v422
      %v1830 = vmul.f32 %v1828, %v422
      %v1831 = vsub.f32 %v1821, %v1829
      %v1832 = vsub.f32 %v1822, %v1830
      %v1833 = vmul.f32 %v1831, %v1831
      %v1834 = vmul.f32 %v1832, %v1832
      %1835 = vadd.xlane.f32.xlu0 %v1833
      %v1836 = vpop.xlane.xlu0 %1835
      %1837 = vadd.xlane.f32.xlu0 %v1834
      %v1838 = vpop.xlane.xlu0 %1837
      %v1839 = vmul.f32 %v1836, %v422
      %v1840 = vmul.f32 %v1838, %v422
      %v1841 = vadd.f32 %v1839, 1e-05
      %v1842 = vadd.f32 %v1840, 1e-05
      %v1843 = vrsqrt.pop %v1841
      %v1844 = vrsqrt.pop %v1842
      %v1845 = vmul.f32 %v1831, %v1843
      %v1846 = vmul.f32 %v1832, %v1844
      %v1848 = vlaneseq
      %v1849 = vshrl.u32 %v1848, 7
      %v1850 = vsub.s32 0, %v1849
      %v1851 = vrot.slane %v1823, %v1850
      %v1853 = vmul.f32 %v1845, %v1851
      %v1854 = vmul.f32 %v1846, %v1851
      %v1856 = vlaneseq
      %v1857 = vshrl.u32 %v1856, 7
      %v1858 = vsub.s32 0, %v1857
      %v1859 = vrot.slane %v1824, %v1858
      %v1861 = vadd.f32 %v1853, %v1859
      %v1862 = vadd.f32 %v1854, %v1859
      %v1863 = vld [vmem:[%s8] sm:$0xff]
      %v1864 = vld [vmem:[%s8 + $0x8] sm:$0xff]
      %v1865 = vld [vmem:[%s8 + $0x10] sm:$0xff]
      %v1866 = vld [vmem:[%s8 + $0x18] sm:$0xff]
      %v1867 = vld [vmem:[%s8 + $0x20] sm:$0xff]
      %v1868 = vld [vmem:[%s8 + $0x28] sm:$0xff]
      %v1869 = vld [vmem:[%s8 + $0x30] sm:$0xff]
      %v1870 = vld [vmem:[%s8 + $0x38] sm:$0xff]
      %v1871 = vld [vmem:[%s8 + $0x40] sm:$0xff]
      %v1872 = vld [vmem:[%s8 + $0x48] sm:$0xff]
      %v1873 = vld [vmem:[%s8 + $0x50] sm:$0xff]
      %v1874 = vld [vmem:[%s8 + $0x58] sm:$0xff]
      %v1875 = vld [vmem:[%s8 + $0x60] sm:$0xff]
      %v1876 = vld [vmem:[%s8 + $0x68] sm:$0xff]
      %v1877 = vld [vmem:[%s8 + $0x70] sm:$0xff]
      %v1878 = vld [vmem:[%s8 + $0x78] sm:$0xff]
      %v1879 = vld [vmem:[%s8 + $0x80] sm:$0xff]
      %v1880 = vld [vmem:[%s8 + $0x88] sm:$0xff]
      %v1881 = vld [vmem:[%s8 + $0x90] sm:$0xff]
      %v1882 = vld [vmem:[%s8 + $0x98] sm:$0xff]
      %v1883 = vld [vmem:[%s8 + $0xa0] sm:$0xff]
      %v1884 = vld [vmem:[%s8 + $0xa8] sm:$0xff]
      %v1885 = vld [vmem:[%s8 + $0xb0] sm:$0xff]
      %v1886 = vld [vmem:[%s8 + $0xb8] sm:$0xff]
      %v1887 = vld [vmem:[%s8 + $0xc0] sm:$0xff]
      %v1888 = vld [vmem:[%s8 + $0xc8] sm:$0xff]
      %v1889 = vld [vmem:[%s8 + $0xd0] sm:$0xff]
      %v1890 = vld [vmem:[%s8 + $0xd8] sm:$0xff]
      %v1891 = vld [vmem:[%s8 + $0xe0] sm:$0xff]
      %v1892 = vld [vmem:[%s8 + $0xe8] sm:$0xff]
      %v1893 = vld [vmem:[%s8 + $0xf0] sm:$0xff]
      %v1894 = vld [vmem:[%s8 + $0xf8] sm:$0xff]
      %v1895 = vld [vmem:[%s8 + $0x100] sm:$0xff]
      %v1896 = vld [vmem:[%s8 + $0x108] sm:$0xff]
      %v1897 = vld [vmem:[%s8 + $0x110] sm:$0xff]
      %v1898 = vld [vmem:[%s8 + $0x118] sm:$0xff]
      %v1899 = vld [vmem:[%s8 + $0x120] sm:$0xff]
      %v1900 = vld [vmem:[%s8 + $0x128] sm:$0xff]
      %v1901 = vld [vmem:[%s8 + $0x130] sm:$0xff]
      %v1902 = vld [vmem:[%s8 + $0x138] sm:$0xff]
      %v1903 = vld [vmem:[%s8 + $0x140] sm:$0xff]
      %v1904 = vld [vmem:[%s8 + $0x148] sm:$0xff]
      %v1905 = vld [vmem:[%s8 + $0x150] sm:$0xff]
      %v1906 = vld [vmem:[%s8 + $0x158] sm:$0xff]
      %v1907 = vld [vmem:[%s8 + $0x160] sm:$0xff]
      %v1908 = vld [vmem:[%s8 + $0x168] sm:$0xff]
      %v1909 = vld [vmem:[%s8 + $0x170] sm:$0xff]
      %v1910 = vld [vmem:[%s8 + $0x178] sm:$0xff]
      %v1911 = vld [vmem:[%s8 + $0x180] sm:$0xff]
      %v1912 = vld [vmem:[%s8 + $0x188] sm:$0xff]
      %v1913 = vld [vmem:[%s8 + $0x190] sm:$0xff]
      %v1914 = vld [vmem:[%s8 + $0x198] sm:$0xff]
      %v1915 = vld [vmem:[%s8 + $0x1a0] sm:$0xff]
      %v1916 = vld [vmem:[%s8 + $0x1a8] sm:$0xff]
      %v1917 = vld [vmem:[%s8 + $0x1b0] sm:$0xff]
      %v1918 = vld [vmem:[%s8 + $0x1b8] sm:$0xff]
      %v1919 = vld [vmem:[%s8 + $0x1c0] sm:$0xff]
      %v1920 = vld [vmem:[%s8 + $0x1c8] sm:$0xff]
      %v1921 = vld [vmem:[%s8 + $0x1d0] sm:$0xff]
      %v1922 = vld [vmem:[%s8 + $0x1d8] sm:$0xff]
      %v1923 = vld [vmem:[%s8 + $0x1e0] sm:$0xff]
      %v1924 = vld [vmem:[%s8 + $0x1e8] sm:$0xff]
      %v1925 = vld [vmem:[%s8 + $0x1f0] sm:$0xff]
      %v1926 = vld [vmem:[%s8 + $0x1f8] sm:$0xff]
      %v1927 = vld [vmem:[%s9] sm:$0xf]
      %v1929 = vlaneseq
      %v1930 = vshrl.u32 %v1929, 7
      %v1931 = vsub.s32 0, %v1930
      %v1932 = vrot.slane %v1927, %v1931
      %v1933 = vlaneseq
      %v1934 = vshrl.u32 %v1933, 7
      %v1935 = vsub.s32 1, %v1934
      %v1936 = vrot.slane %v1927, %v1935
      %v1937 = vlaneseq
      %v1938 = vshrl.u32 %v1937, 7
      %v1939 = vsub.s32 2, %v1938
      %v1940 = vrot.slane %v1927, %v1939
      %v1941 = vlaneseq
      %v1942 = vshrl.u32 %v1941, 7
      %v1943 = vsub.s32 3, %v1942
      %v1944 = vrot.slane %v1927, %v1943
      %1949 = vmatprep.subr.mxu0 %v1864
      %1950 = vmatpush1.msra.mxu0 %v1863
      %1951 = vmatprep.subr.mxu0 %v1868
      %1952 = vmatpush1.msra.mxu0 %v1867
      %1953 = vmatprep.subr.mxu0 %v1872
      %1954 = vmatpush1.msra.mxu0 %v1871
      %1955 = vmatprep.subr.mxu0 %v1876
      %1956 = vmatpush1.msra.mxu0 %v1875
      %1957 = vmatprep.subr.mxu0 %v1880
      %1958 = vmatpush1.msra.mxu0 %v1879
      %1959 = vmatprep.subr.mxu0 %v1884
      %1960 = vmatpush1.msra.mxu0 %v1883
      %1961 = vmatprep.subr.mxu0 %v1888
      %1962 = vmatpush1.msra.mxu0 %v1887
      %1963 = vmatprep.subr.mxu0 %v1892
      %1964 = vmatpush1.msra.mxu0 %v1891
      %1965 = vmatprep.subr.mxu0 %v1896
      %1966 = vmatpush1.msra.mxu0 %v1895
      %1967 = vmatprep.subr.mxu0 %v1900
      %1968 = vmatpush1.msra.mxu0 %v1899
      %1969 = vmatprep.subr.mxu0 %v1904
      %1970 = vmatpush1.msra.mxu0 %v1903
      %1971 = vmatprep.subr.mxu0 %v1908
      %1972 = vmatpush1.msra.mxu0 %v1907
      %1973 = vmatprep.subr.mxu0 %v1912
      %1974 = vmatpush1.msra.mxu0 %v1911
      %1975 = vmatprep.subr.mxu0 %v1916
      %1976 = vmatpush1.msra.mxu0 %v1915
      %1977 = vmatprep.subr.mxu0 %v1920
      %1978 = vmatpush1.msra.mxu0 %v1919
      %1979 = vmatprep.subr.mxu0 %v1924
      %1980 = vmatpush1.msra.mxu0 %v1923
      %1981 = vmatprep.subr.mxu0 0.0
      %1982 = vmatpush1.msra.mxu0 0.0
      %1983 = vmatprep.subr.mxu0 0.0
      %1984 = vmatpush1.msra.mxu0 0.0
      %1985 = vmatprep.subr.mxu0 0.0
      %1986 = vmatpush1.msra.mxu0 0.0
      %1987 = vmatprep.subr.mxu0 0.0
      %1988 = vmatpush1.msra.mxu0 0.0
      %1989 = vmatprep.subr.mxu0 0.0
      %1990 = vmatpush1.msra.mxu0 0.0
      %1991 = vmatprep.subr.mxu0 0.0
      %1992 = vmatpush1.msra.mxu0 0.0
      %1993 = vmatprep.subr.mxu0 0.0
      %1994 = vmatpush1.msra.mxu0 0.0
      %1995 = vmatprep.subr.mxu0 0.0
      %1996 = vmatpush1.msra.mxu0 0.0
      %1997 = vmatprep.subr.mxu0 0.0
      %1998 = vmatpush1.msra.mxu0 0.0
      %1999 = vmatprep.subr.mxu0 0.0
      %2000 = vmatpush1.msra.mxu0 0.0
      %2001 = vmatprep.subr.mxu0 0.0
      %2002 = vmatpush1.msra.mxu0 0.0
      %2003 = vmatprep.subr.mxu0 0.0
      %2004 = vmatpush1.msra.mxu0 0.0
      %2005 = vmatprep.subr.mxu0 0.0
      %2006 = vmatpush1.msra.mxu0 0.0
      %2007 = vmatprep.subr.mxu0 0.0
      %2008 = vmatpush1.msra.mxu0 0.0
      %2009 = vmatprep.subr.mxu0 0.0
      %2010 = vmatpush1.msra.mxu0 0.0
      %2011 = vmatprep.subr.mxu0 0.0
      %2012 = vmatpush1.msra.mxu0 0.0
      %2013 = vmatprep.mubr.f32.mxu0 0.0
      %2014 = vmatmul.mubr.f32.gmra.mrb[0].mxu0 %v1861
      %v2015 = vpop.f32.mrb[0].mxu0
      %v2016 = vadd.f32 %v1932, %v2015
      %v2017 = vpop.f32.mrb[0].mxu0
      %v2018 = vadd.f32 %v1936, %v2017
      %2019 = vmatprep.mubr.f32.mxu0 0.0
      %2020 = vmatmul.mubr.f32.gmra.mrb[0].mxu0 %v1862
      %v2021 = vpop.f32.mrb[0].mxu0
      %v2022 = vadd.f32 %v1932, %v2021
      %v2023 = vpop.f32.mrb[0].mxu0
      %v2024 = vadd.f32 %v1936, %v2023
      %2025 = vdwg.mxu0
      %2026 = vmatprep.subr.mxu0 %v1866
      %2027 = vmatpush1.msra.mxu0 %v1865
      %2028 = vmatprep.subr.mxu0 %v1870
      %2029 = vmatpush1.msra.mxu0 %v1869
      %2030 = vmatprep.subr.mxu0 %v1874
      %2031 = vmatpush1.msra.mxu0 %v1873
      %2032 = vmatprep.subr.mxu0 %v1878
      %2033 = vmatpush1.msra.mxu0 %v1877
      %2034 = vmatprep.subr.mxu0 %v1882
      %2035 = vmatpush1.msra.mxu0 %v1881
      %2036 = vmatprep.subr.mxu0 %v1886
      %2037 = vmatpush1.msra.mxu0 %v1885
      %2038 = vmatprep.subr.mxu0 %v1890
      %2039 = vmatpush1.msra.mxu0 %v1889
      %2040 = vmatprep.subr.mxu0 %v1894
      %2041 = vmatpush1.msra.mxu0 %v1893
      %2042 = vmatprep.subr.mxu0 %v1898
      %2043 = vmatpush1.msra.mxu0 %v1897
      %2044 = vmatprep.subr.mxu0 %v1902
      %2045 = vmatpush1.msra.mxu0 %v1901
      %2046 = vmatprep.subr.mxu0 %v1906
      %2047 = vmatpush1.msra.mxu0 %v1905
      %2048 = vmatprep.subr.mxu0 %v1910
      %2049 = vmatpush1.msra.mxu0 %v1909
      %2050 = vmatprep.subr.mxu0 %v1914
      %2051 = vmatpush1.msra.mxu0 %v1913
      %2052 = vmatprep.subr.mxu0 %v1918
      %2053 = vmatpush1.msra.mxu0 %v1917
      %2054 = vmatprep.subr.mxu0 %v1922
      %2055 = vmatpush1.msra.mxu0 %v1921
      %2056 = vmatprep.subr.mxu0 %v1926
      %2057 = vmatpush1.msra.mxu0 %v1925
      %2058 = vmatprep.subr.mxu0 0.0
      %2059 = vmatpush1.msra.mxu0 0.0
      %2060 = vmatprep.subr.mxu0 0.0
      %2061 = vmatpush1.msra.mxu0 0.0
      %2062 = vmatprep.subr.mxu0 0.0
      %2063 = vmatpush1.msra.mxu0 0.0
      %2064 = vmatprep.subr.mxu0 0.0
      %2065 = vmatpush1.msra.mxu0 0.0
      %2066 = vmatprep.subr.mxu0 0.0
      %2067 = vmatpush1.msra.mxu0 0.0
      %2068 = vmatprep.subr.mxu0 0.0
      %2069 = vmatpush1.msra.mxu0 0.0
      %2070 = vmatprep.subr.mxu0 0.0
      %2071 = vmatpush1.msra.mxu0 0.0
      %2072 = vmatprep.subr.mxu0 0.0
      %2073 = vmatpush1.msra.mxu0 0.0
      %2074 = vmatprep.subr.mxu0 0.0
      %2075 = vmatpush1.msra.mxu0 0.0
      %2076 = vmatprep.subr.mxu0 0.0
      %2077 = vmatpush1.msra.mxu0 0.0
      %2078 = vmatprep.subr.mxu0 0.0
      %2079 = vmatpush1.msra.mxu0 0.0
      %2080 = vmatprep.subr.mxu0 0.0
      %2081 = vmatpush1.msra.mxu0 0.0
      %2082 = vmatprep.subr.mxu0 0.0
      %2083 = vmatpush1.msra.mxu0 0.0
      %2084 = vmatprep.subr.mxu0 0.0
      %2085 = vmatpush1.msra.mxu0 0.0
      %2086 = vmatprep.subr.mxu0 0.0
      %2087 = vmatpush1.msra.mxu0 0.0
      %2088 = vmatprep.subr.mxu0 0.0
      %2089 = vmatpush1.msra.mxu0 0.0
      %2090 = vmatprep.mubr.f32.mxu0 0.0
      %2091 = vmatmul.mubr.f32.gmra.mrb[0].mxu0 %v1861
      %v2092 = vpop.f32.mrb[0].mxu0
      %v2093 = vadd.f32 %v1940, %v2092
      %v2094 = vpop.f32.mrb[0].mxu0
      %v2095 = vadd.f32 %v1944, %v2094
      %2096 = vmatprep.mubr.f32.mxu0 0.0
      %2097 = vmatmul.mubr.f32.gmra.mrb[0].mxu0 %v1862
      %v2098 = vpop.f32.mrb[0].mxu0
      %v2099 = vadd.f32 %v1940, %v2098
      %v2100 = vpop.f32.mrb[0].mxu0
      %v2101 = vadd.f32 %v1944, %v2100
      %2102 = vdwg.mxu0
      %v2103 = vmax.f32 %v2016, 0.0
      %v2104 = vmax.f32 %v2018, 0.0
      %v2105 = vmax.f32 %v2093, 0.0
      %v2106 = vmax.f32 %v2095, 0.0
      %v2107 = vmax.f32 %v2022, 0.0
      %v2108 = vmax.f32 %v2024, 0.0
      %v2109 = vmax.f32 %v2099, 0.0
      %v2110 = vmax.f32 %v2101, 0.0
      %v2111 = vld [vmem:[%s10] sm:$0xff]
      %v2112 = vld [vmem:[%s10 + $0x8] sm:$0xff]
      %v2113 = vld [vmem:[%s10 + $0x10] sm:$0xff]
      %v2114 = vld [vmem:[%s10 + $0x18] sm:$0xff]
      %v2115 = vld [vmem:[%s10 + $0x20] sm:$0xff]
      %v2116 = vld [vmem:[%s10 + $0x28] sm:$0xff]
      %v2117 = vld [vmem:[%s10 + $0x30] sm:$0xff]
      %v2118 = vld [vmem:[%s10 + $0x38] sm:$0xff]
      %v2119 = vld [vmem:[%s10 + $0x40] sm:$0xff]
      %v2120 = vld [vmem:[%s10 + $0x48] sm:$0xff]
      %v2121 = vld [vmem:[%s10 + $0x50] sm:$0xff]
      %v2122 = vld [vmem:[%s10 + $0x58] sm:$0xff]
      %v2123 = vld [vmem:[%s10 + $0x60] sm:$0xff]
      %v2124 = vld [vmem:[%s10 + $0x68] sm:$0xff]
      %v2125 = vld [vmem:[%s10 + $0x70] sm:$0xff]
      %v2126 = vld [vmem:[%s10 + $0x78] sm:$0xff]
      %v2127 = vld [vmem:[%s10 + $0x80] sm:$0xff]
      %v2128 = vld [vmem:[%s10 + $0x88] sm:$0xff]
      %v2129 = vld [vmem:[%s10 + $0x90] sm:$0xff]
      %v2130 = vld [vmem:[%s10 + $0x98] sm:$0xff]
      %v2131 = vld [vmem:[%s10 + $0xa0] sm:$0xff]
      %v2132 = vld [vmem:[%s10 + $0xa8] sm:$0xff]
      %v2133 = vld [vmem:[%s10 + $0xb0] sm:$0xff]
      %v2134 = vld [vmem:[%s10 + $0xb8] sm:$0xff]
      %v2135 = vld [vmem:[%s10 + $0xc0] sm:$0xff]
      %v2136 = vld [vmem:[%s10 + $0xc8] sm:$0xff]
      %v2137 = vld [vmem:[%s10 + $0xd0] sm:$0xff]
      %v2138 = vld [vmem:[%s10 + $0xd8] sm:$0xff]
      %v2139 = vld [vmem:[%s10 + $0xe0] sm:$0xff]
      %v2140 = vld [vmem:[%s10 + $0xe8] sm:$0xff]
      %v2141 = vld [vmem:[%s10 + $0xf0] sm:$0xff]
      %v2142 = vld [vmem:[%s10 + $0xf8] sm:$0xff]
      %v2143 = vld [vmem:[%s10 + $0x100] sm:$0xff]
      %v2144 = vld [vmem:[%s10 + $0x108] sm:$0xff]
      %v2145 = vld [vmem:[%s10 + $0x110] sm:$0xff]
      %v2146 = vld [vmem:[%s10 + $0x118] sm:$0xff]
      %v2147 = vld [vmem:[%s10 + $0x120] sm:$0xff]
      %v2148 = vld [vmem:[%s10 + $0x128] sm:$0xff]
      %v2149 = vld [vmem:[%s10 + $0x130] sm:$0xff]
      %v2150 = vld [vmem:[%s10 + $0x138] sm:$0xff]
      %v2151 = vld [vmem:[%s10 + $0x140] sm:$0xff]
      %v2152 = vld [vmem:[%s10 + $0x148] sm:$0xff]
      %v2153 = vld [vmem:[%s10 + $0x150] sm:$0xff]
      %v2154 = vld [vmem:[%s10 + $0x158] sm:$0xff]
      %v2155 = vld [vmem:[%s10 + $0x160] sm:$0xff]
      %v2156 = vld [vmem:[%s10 + $0x168] sm:$0xff]
      %v2157 = vld [vmem:[%s10 + $0x170] sm:$0xff]
      %v2158 = vld [vmem:[%s10 + $0x178] sm:$0xff]
      %v2159 = vld [vmem:[%s10 + $0x180] sm:$0xff]
      %v2160 = vld [vmem:[%s10 + $0x188] sm:$0xff]
      %v2161 = vld [vmem:[%s10 + $0x190] sm:$0xff]
      %v2162 = vld [vmem:[%s10 + $0x198] sm:$0xff]
      %v2163 = vld [vmem:[%s10 + $0x1a0] sm:$0xff]
      %v2164 = vld [vmem:[%s10 + $0x1a8] sm:$0xff]
      %v2165 = vld [vmem:[%s10 + $0x1b0] sm:$0xff]
      %v2166 = vld [vmem:[%s10 + $0x1b8] sm:$0xff]
      %v2167 = vld [vmem:[%s10 + $0x1c0] sm:$0xff]
      %v2168 = vld [vmem:[%s10 + $0x1c8] sm:$0xff]
      %v2169 = vld [vmem:[%s10 + $0x1d0] sm:$0xff]
      %v2170 = vld [vmem:[%s10 + $0x1d8] sm:$0xff]
      %v2171 = vld [vmem:[%s10 + $0x1e0] sm:$0xff]
      %v2172 = vld [vmem:[%s10 + $0x1e8] sm:$0xff]
      %v2173 = vld [vmem:[%s10 + $0x1f0] sm:$0xff]
      %v2174 = vld [vmem:[%s10 + $0x1f8] sm:$0xff]
      %v2175 = vld [vmem:[%s11] sm:$0x1]
      %v2177 = vlaneseq
      %v2178 = vshrl.u32 %v2177, 7
      %v2179 = vsub.s32 0, %v2178
      %v2180 = vrot.slane %v2175, %v2179
      %2182 = vmatprep.subr.mxu0 0.0
      %2183 = vmatpush1.msra.mxu0 %v2111
      %2184 = vmatprep.subr.mxu0 0.0
      %2185 = vmatpush1.msra.mxu0 %v2112
      %2186 = vmatprep.subr.mxu0 0.0
      %2187 = vmatpush1.msra.mxu0 %v2113
      %2188 = vmatprep.subr.mxu0 0.0
      %2189 = vmatpush1.msra.mxu0 %v2114
      %2190 = vmatprep.subr.mxu0 0.0
      %2191 = vmatpush1.msra.mxu0 %v2115
      %2192 = vmatprep.subr.mxu0 0.0
      %2193 = vmatpush1.msra.mxu0 %v2116
      %2194 = vmatprep.subr.mxu0 0.0
      %2195 = vmatpush1.msra.mxu0 %v2117
      %2196 = vmatprep.subr.mxu0 0.0
      %2197 = vmatpush1.msra.mxu0 %v2118
      %2198 = vmatprep.subr.mxu0 0.0
      %2199 = vmatpush1.msra.mxu0 %v2119
      %2200 = vmatprep.subr.mxu0 0.0
      %2201 = vmatpush1.msra.mxu0 %v2120
      %2202 = vmatprep.subr.mxu0 0.0
      %2203 = vmatpush1.msra.mxu0 %v2121
      %2204 = vmatprep.subr.mxu0 0.0
      %2205 = vmatpush1.msra.mxu0 %v2122
      %2206 = vmatprep.subr.mxu0 0.0
      %2207 = vmatpush1.msra.mxu0 %v2123
      %2208 = vmatprep.subr.mxu0 0.0
      %2209 = vmatpush1.msra.mxu0 %v2124
      %2210 = vmatprep.subr.mxu0 0.0
      %2211 = vmatpush1.msra.mxu0 %v2125
      %2212 = vmatprep.subr.mxu0 0.0
      %2213 = vmatpush1.msra.mxu0 %v2126
      %2214 = vmatprep.subr.mxu0 0.0
      %2215 = vmatpush1.msra.mxu0 %v2127
      %2216 = vmatprep.subr.mxu0 0.0
      %2217 = vmatpush1.msra.mxu0 %v2128
      %2218 = vmatprep.subr.mxu0 0.0
      %2219 = vmatpush1.msra.mxu0 %v2129
      %2220 = vmatprep.subr.mxu0 0.0
      %2221 = vmatpush1.msra.mxu0 %v2130
      %2222 = vmatprep.subr.mxu0 0.0
      %2223 = vmatpush1.msra.mxu0 %v2131
      %2224 = vmatprep.subr.mxu0 0.0
      %2225 = vmatpush1.msra.mxu0 %v2132
      %2226 = vmatprep.subr.mxu0 0.0
      %2227 = vmatpush1.msra.mxu0 %v2133
      %2228 = vmatprep.subr.mxu0 0.0
      %2229 = vmatpush1.msra.mxu0 %v2134
      %2230 = vmatprep.subr.mxu0 0.0
      %2231 = vmatpush1.msra.mxu0 %v2135
      %2232 = vmatprep.subr.mxu0 0.0
      %2233 = vmatpush1.msra.mxu0 %v2136
      %2234 = vmatprep.subr.mxu0 0.0
      %2235 = vmatpush1.msra.mxu0 %v2137
      %2236 = vmatprep.subr.mxu0 0.0
      %2237 = vmatpush1.msra.mxu0 %v2138
      %2238 = vmatprep.subr.mxu0 0.0
      %2239 = vmatpush1.msra.mxu0 %v2139
      %2240 = vmatprep.subr.mxu0 0.0
      %2241 = vmatpush1.msra.mxu0 %v2140
      %2242 = vmatprep.subr.mxu0 0.0
      %2243 = vmatpush1.msra.mxu0 %v2141
      %2244 = vmatprep.subr.mxu0 0.0
      %2245 = vmatpush1.msra.mxu0 %v2142
      %2246 = vmatprep.mubr.f32.mxu0 %v2104
      %2247 = vmatmul.mubr.f32.gmra.mrb[0].mxu0 %v2103
      %v2248 = vpop.f32.mrb[0].mxu0
      %v2249 = vadd.f32 %v2180, %v2248
      %v2250 = vpop.f32.mrb[0].mxu0
      %2251 = vmatprep.mubr.f32.mxu0 %v2108
      %2252 = vmatmul.mubr.f32.gmra.mrb[0].mxu0 %v2107
      %v2253 = vpop.f32.mrb[0].mxu0
      %v2254 = vadd.f32 %v2180, %v2253
      %v2255 = vpop.f32.mrb[0].mxu0
      %2256 = vdwg.mxu0
      %2257 = vmatprep.subr.mxu0 0.0
      %2258 = vmatpush1.msra.mxu0 %v2143
      %2259 = vmatprep.subr.mxu0 0.0
      %2260 = vmatpush1.msra.mxu0 %v2144
      %2261 = vmatprep.subr.mxu0 0.0
      %2262 = vmatpush1.msra.mxu0 %v2145
      %2263 = vmatprep.subr.mxu0 0.0
      %2264 = vmatpush1.msra.mxu0 %v2146
      %2265 = vmatprep.subr.mxu0 0.0
      %2266 = vmatpush1.msra.mxu0 %v2147
      %2267 = vmatprep.subr.mxu0 0.0
      %2268 = vmatpush1.msra.mxu0 %v2148
      %2269 = vmatprep.subr.mxu0 0.0
      %2270 = vmatpush1.msra.mxu0 %v2149
      %2271 = vmatprep.subr.mxu0 0.0
      %2272 = vmatpush1.msra.mxu0 %v2150
      %2273 = vmatprep.subr.mxu0 0.0
      %2274 = vmatpush1.msra.mxu0 %v2151
      %2275 = vmatprep.subr.mxu0 0.0
      %2276 = vmatpush1.msra.mxu0 %v2152
      %2277 = vmatprep.subr.mxu0 0.0
      %2278 = vmatpush1.msra.mxu0 %v2153
      %2279 = vmatprep.subr.mxu0 0.0
      %2280 = vmatpush1.msra.mxu0 %v2154
      %2281 = vmatprep.subr.mxu0 0.0
      %2282 = vmatpush1.msra.mxu0 %v2155
      %2283 = vmatprep.subr.mxu0 0.0
      %2284 = vmatpush1.msra.mxu0 %v2156
      %2285 = vmatprep.subr.mxu0 0.0
      %2286 = vmatpush1.msra.mxu0 %v2157
      %2287 = vmatprep.subr.mxu0 0.0
      %2288 = vmatpush1.msra.mxu0 %v2158
      %2289 = vmatprep.subr.mxu0 0.0
      %2290 = vmatpush1.msra.mxu0 %v2159
      %2291 = vmatprep.subr.mxu0 0.0
      %2292 = vmatpush1.msra.mxu0 %v2160
      %2293 = vmatprep.subr.mxu0 0.0
      %2294 = vmatpush1.msra.mxu0 %v2161
      %2295 = vmatprep.subr.mxu0 0.0
      %2296 = vmatpush1.msra.mxu0 %v2162
      %2297 = vmatprep.subr.mxu0 0.0
      %2298 = vmatpush1.msra.mxu0 %v2163
      %2299 = vmatprep.subr.mxu0 0.0
      %2300 = vmatpush1.msra.mxu0 %v2164
      %2301 = vmatprep.subr.mxu0 0.0
      %2302 = vmatpush1.msra.mxu0 %v2165
      %2303 = vmatprep.subr.mxu0 0.0
      %2304 = vmatpush1.msra.mxu0 %v2166
      %2305 = vmatprep.subr.mxu0 0.0
      %2306 = vmatpush1.msra.mxu0 %v2167
      %2307 = vmatprep.subr.mxu0 0.0
      %2308 = vmatpush1.msra.mxu0 %v2168
      %2309 = vmatprep.subr.mxu0 0.0
      %2310 = vmatpush1.msra.mxu0 %v2169
      %2311 = vmatprep.subr.mxu0 0.0
      %2312 = vmatpush1.msra.mxu0 %v2170
      %2313 = vmatprep.subr.mxu0 0.0
      %2314 = vmatpush1.msra.mxu0 %v2171
      %2315 = vmatprep.subr.mxu0 0.0
      %2316 = vmatpush1.msra.mxu0 %v2172
      %2317 = vmatprep.subr.mxu0 0.0
      %2318 = vmatpush1.msra.mxu0 %v2173
      %2319 = vmatprep.subr.mxu0 0.0
      %2320 = vmatpush1.msra.mxu0 %v2174
      %2321 = vmatprep.mubr.f32.mxu0 %v2106
      %2322 = vmatmul.mubr.f32.gmra.mrb[0].mxu0 %v2105
      %v2323 = vpop.f32.mrb[0].mxu0
      %v2324 = vadd.f32 %v2249, %v2323
      %v2325 = vpop.f32.mrb[0].mxu0
      %2326 = vmatprep.mubr.f32.mxu0 %v2110
      %2327 = vmatmul.mubr.f32.gmra.mrb[0].mxu0 %v2109
      %v2328 = vpop.f32.mrb[0].mxu0
      %v2329 = vadd.f32 %v2254, %v2328
      %v2330 = vpop.f32.mrb[0].mxu0
      %2331 = vdwg.mxu0
      %v2332 = vadd.f32 %v1821, %v2324
      %v2333 = vadd.f32 %v1822, %v2329
      %2334 = vst [vmem:[%s413] sm:$0xff] %v2332
      %2335 = vst [vmem:[%s413 + $0x8] sm:$0xff] %v2333
      %p2336 = scmp.lt.s32.totalorder %s23, 1
      %s2337 = scalar_select %p2336, %s23, 1
      %s2338 = smul.addr %s2337, 2
      %s2339 = smul.addr %s2338, 8
      %s2340 = scalar_lea.vmem %s12, %s2339
      // Predicated region
      $region69: #{bigram_lm_forward.8} parent=67 // pred_check
        %p2341 = pneg %p298
      $region70: #{bigram_lm_forward.8} parent=67 // pred_check_branch
        %2343 = sbr.rel (%p2341) target = $region72
      $region71: #{bigram_lm_forward.8} parent=67 // pred_region
        _
      $region72: #{bigram_lm_forward.8} parent=67 // pred_fallthru
        _
    $region68: #{bigram_lm_forward.8} parent=5 // pred_fallthru
      _
    %p2344 = scmp.le.s32.totalorder 2, %s18
    // Predicated region
    $region73: #{bigram_lm_forward.8} parent=5 // pred_check
      %p2345 = pneg %p2344
    $region74: #{bigram_lm_forward.8} parent=5 // pred_check_branch
      %2347 = sbr.rel (%p2345) target = $region76
    $region75: #{bigram_lm_forward.8} parent=5 // pred_region
      %s2348 = ssub.s32 %s18, 2
      // Predicated region
      $region77: #{bigram_lm_forward.8} parent=75 // pred_check
        %p2349 = pneg %p304
      $region78: #{bigram_lm_forward.8} parent=75 // pred_check_branch
        %2351 = sbr.rel (%p2349) target = $region80
      $region79: #{bigram_lm_forward.8} parent=75 // pred_region
        %p2352 = scmp.lt.s32.totalorder %s24, 1
        %s2353 = scalar_select %p2352, %s24, 1
        %s2354 = smul.addr %s2353, 2
        %s2355 = smul.addr %s2354, 8
        %s2356 = scalar_lea.vmem %s12, %s2355
      $region80: #{bigram_lm_forward.8} parent=75 // pred_fallthru
        _
    $region76: #{bigram_lm_forward.8} parent=5 // pred_fallthru
      _
  $region6: #{bigram_lm_forward.8} parent=0 // loop_footer
    %s22 = sadd.s32 1, %s18
  $region7: #{bigram_lm_forward.8} parent=0 // loop_footer_branch
    %17 = sbr.rel target = $region3
  $region8: #{bigram_lm_forward.8} parent=0 // loop_exit
    _

</llo_original>
